<compile_context>
chip_gen: v7x
topology: tpu7x:2x2x1
jax: 0.10.0
libtpu: 0.0.40
codegen_flags: <defaults>
</compile_context>

<pallas_src>
import numpy as np
import jax
import jax.numpy as jnp
from jax.experimental import pallas as pl
from jax.experimental.pallas import tpu as pltpu

_PREC = jax.lax.Precision.HIGHEST  # used only in the pure-JAX reference
_MIB = 1024 * 1024


# ----------------------------------------------------------------------------
# Small helpers: tile picking, VMEM budgeting, single-buffered invariant specs
# ----------------------------------------------------------------------------
def _pick_row_tile(m, target=512):
    """Row tile for (T*B)-row elementwise / GEMM kernels (m is a multiple of 8)."""
    if m <= target:
        return m
    t = target - target % 8
    while t > 8 and m % t:
        t -= 8
    return t if (t >= 8 and m % t == 0) else min(m, target)


def _pick_lane_tile(g, target=1024):
    """Gate-axis (N) tile for Kernel A: multiple of 128 dividing g, capped at `target`."""
    if g <= target:
        return g
    t = target - target % 128
    while t > 128 and g % t:
        t -= 128
    return t if (t >= 128 and g % t == 0) else g


def _pick_time_tile(T, target=16):
    """Largest divisor of T that is <= target (time-blocking factor TT)."""
    tt = min(T, target)
    while T % tt:
        tt -= 1
    return tt


def _cparams(semantics, approx_bytes):
    """CompilerParams with an explicit VMEM limit derived from block footprints."""
    vmem = int(min(max(2 * int(approx_bytes) + 2 * _MIB, 32 * _MIB), 128 * _MIB))
    return pltpu.CompilerParams(dimension_semantics=semantics, vmem_limit_bytes=vmem)


_BUFFERED1_OK = None


def _buffered1_supported():
    """True iff this Pallas build supports pipeline_mode=pl.Buffered(1) (single buffering)."""
    global _BUFFERED1_OK
    if _BUFFERED1_OK is None:
        try:
            def k(x_ref, w_ref, o_ref):
                o_ref[...] = x_ref[...] + w_ref[...]

            f = pl.pallas_call(
                k,
                out_shape=jax.ShapeDtypeStruct((16, 128), jnp.float32),
                grid=(2,),
                in_specs=[pl.BlockSpec((8, 128), lambda i: (i, 0)),
                          pl.BlockSpec((8, 128), lambda i: (0, 0),
                                       pipeline_mode=pl.Buffered(1))],
                out_specs=pl.BlockSpec((8, 128), lambda i: (i, 0)),
            )
            jax.jit(f).lower(jax.ShapeDtypeStruct((16, 128), jnp.float32),
                             jax.ShapeDtypeStruct((8, 128), jnp.float32)).compile()
            _BUFFERED1_OK = True
        except Exception:
            _BUFFERED1_OK = False
    return _BUFFERED1_OK


def _invariant_spec(block_shape, index_map):
    """BlockSpec for a grid-invariant operand: single VMEM buffer when supported."""
    if _buffered1_supported():
        return pl.BlockSpec(block_shape, index_map, pipeline_mode=pl.Buffered(1))
    return pl.BlockSpec(block_shape, index_map)


# ----------------------------------------------------------------------------
# Kernel A: hoisted input projection, both directions fused into ONE GEMM
#   gx = x @ [W_ih_f^T | W_ih_b^T] + [b_f | b_b]          (M, 8H)
# ----------------------------------------------------------------------------
def _gates_kernel(x_ref, w_ref, b_ref, o_ref):
    o_ref[...] = (jnp.dot(x_ref[...], w_ref[...],
                          preferred_element_type=jnp.float32) + b_ref[...])


def lstm_input_gates(x2, w, b):
    """x2: (M, D), w: (D, 8H) fused [fwd|bwd], b: (1, 8H).  Returns gx (M, 8H)."""
    M, D = x2.shape
    G = w.shape[1]
    tm = _pick_row_tile(M)
    tn = _pick_lane_tile(G)
    nm, nn = pl.cdiv(M, tm), pl.cdiv(G, tn)
    if nn == 1:  # weight/bias are grid-invariant -> single buffer
        w_spec = _invariant_spec((D, tn), lambda i, j: (0, j))
        b_spec = _invariant_spec((1, tn), lambda i, j: (0, j))
        wbuf = 1
    else:
        w_spec = pl.BlockSpec((D, tn), lambda i, j: (0, j))
        b_spec = pl.BlockSpec((1, tn), lambda i, j: (0, j))
        wbuf = 2
    fp = 4 * (2 * tm * D + wbuf * (D * tn + tn) + 2 * tm * tn)
    return pl.pallas_call(
        _gates_kernel,
        out_shape=jax.ShapeDtypeStruct((M, G), jnp.float32),
        grid=(nm, nn),
        in_specs=[pl.BlockSpec((tm, D), lambda i, j: (i, 0)), w_spec, b_spec],
        out_specs=pl.BlockSpec((tm, tn), lambda i, j: (i, j)),
        compiler_params=_cparams(("parallel", "parallel"), fp),
    )(x2, w, b)


# ----------------------------------------------------------------------------
# Kernel B: fused bidirectional recurrence, time-blocked.  Grid = (T//TT,).
#   Per inner step only h @ W_hh^T per direction; backward direction addressed
#   via reversed block index (and reversed in-block index), so no reversals.
# ----------------------------------------------------------------------------
def _bidir_lstm_kernel(gxf_ref, gxb_ref, whf_ref, whb_ref,
                       hf_ref, hb_ref, hfin_ref, cfin_ref,
                       h_sc, c_sc):
    tb = pl.program_id(0)
    nb = pl.num_programs(0)
    TT = gxf_ref.shape[0]
    H = whf_ref.shape[0]

    @pl.when(tb == 0)
    def _():
        h_sc[...] = jnp.zeros_like(h_sc)
        c_sc[...] = jnp.zeros_like(c_sc)

    whf = whf_ref[...]
    whb = whb_ref[...]

    def cell(gates, c_prev):
        i_g = jax.nn.sigmoid(gates[:, 0 * H:1 * H])
        f_g = jax.nn.sigmoid(gates[:, 1 * H:2 * H])
        g_g = jnp.tanh(gates[:, 2 * H:3 * H])
        o_g = jax.nn.sigmoid(gates[:, 3 * H:4 * H])
        c_new = f_g * c_prev + i_g * g_g
        h_new = o_g * jnp.tanh(c_new)
        return h_new, c_new

    # Time-blocked recurrence: TT fully unrolled steps per grid iteration
    # (static slice indices; equivalent to lax.fori_loop(..., unroll=True)).
    for s in range(TT):
        sb = TT - 1 - s  # local index of the backward direction inside the reversed block
        gates_f = gxf_ref[s] + jnp.dot(h_sc[0], whf, preferred_element_type=jnp.float32)
        gates_b = gxb_ref[sb] + jnp.dot(h_sc[1], whb, preferred_element_type=jnp.float32)
        h_f, c_f = cell(gates_f, c_sc[0])
        h_b, c_b = cell(gates_b, c_sc[1])
        h_sc[0] = h_f
        c_sc[0] = c_f
        h_sc[1] = h_b
        c_sc[1] = c_b
        hf_ref[s] = h_f
        hb_ref[sb] = h_b

    @pl.when(tb == nb - 1)
    def _():
        hfin_ref[...] = h_sc[...]
        cfin_ref[...] = c_sc[...]


def bidir_lstm_layer(gx3, whh_f, whh_b, time_tile=16):
    """gx3: (T, B, 8H) fused input gates (fwd = [..., :4H], bwd = [..., 4H:]).
    Returns hf_seq (T,B,H), hb_seq (T,B,H) in forward time order, h_fin (2,B,H), c_fin (2,B,H)."""
    T, B, G2 = gx3.shape
    H = whh_f.shape[0]
    G = 4 * H
    TT = _pick_time_tile(T, time_tile)
    nb = T // TT

    if G % 128 == 0 and G2 == 2 * G:
        # Consume the fused gate array directly via lane-block addressing (no split copy).
        gxf, gxb = gx3, gx3
        f_spec = pl.BlockSpec((TT, B, G), lambda t: (t, 0, 0))
        b_spec = pl.BlockSpec((TT, B, G), lambda t: (nb - 1 - t, 0, 1))
    else:
        # Fallback for gate widths not 128-aligned: split once outside the kernel.
        gxf, gxb = gx3[:, :, :G], gx3[:, :, G:]
        f_spec = pl.BlockSpec((TT, B, G), lambda t: (t, 0, 0))
        b_spec = pl.BlockSpec((TT, B, G), lambda t: (nb - 1 - t, 0, 0))

    fp = 4 * (2 * 2 * TT * B * G      # gate blocks, both dirs, double-buffered
              + 2 * H * G             # W_hh, both dirs, single-buffered
              + 2 * 2 * TT * B * H    # h outputs, both dirs, double-buffered
              + 4 * 2 * B * H         # final-state outputs
              + 2 * 2 * B * H)        # scratch carries
    out_shapes = (
        jax.ShapeDtypeStruct((T, B, H), jnp.float32),
        jax.ShapeDtypeStruct((T, B, H), jnp.float32),
        jax.ShapeDtypeStruct((2, B, H), jnp.float32),
        jax.ShapeDtypeStruct((2, B, H), jnp.float32),
    )
    return pl.pallas_call(
        _bidir_lstm_kernel,
        out_shape=out_shapes,
        grid=(nb,),
        in_specs=[f_spec, b_spec,
                  _invariant_spec((H, G), lambda t: (0, 0)),
                  _invariant_spec((H, G), lambda t: (0, 0))],
        out_specs=(
            pl.BlockSpec((TT, B, H), lambda t: (t, 0, 0)),
            pl.BlockSpec((TT, B, H), lambda t: (nb - 1 - t, 0, 0)),
            pl.BlockSpec((2, B, H), lambda t: (0, 0, 0)),
            pl.BlockSpec((2, B, H), lambda t: (0, 0, 0)),
        ),
        scratch_shapes=[pltpu.VMEM((2, B, H), jnp.float32),
                        pltpu.VMEM((2, B, H), jnp.float32)],
        compiler_params=_cparams(("arbitrary",), fp),
    )(gxf, gxb, whh_f, whh_b)


# ----------------------------------------------------------------------------
# Kernel C: row-tiled concat(h_fwd, h_bwd) [+ residual / residual projection]
#   (no duplicate "plain" output: the next layer re-uses this layer's halves)
# ----------------------------------------------------------------------------
def _cat_kernel(hf_ref, hb_ref, o_ref):
    o_ref[...] = jnp.concatenate([hf_ref[...], hb_ref[...]], axis=-1)


def _cat_res_prev_kernel(hf_ref, hb_ref, prev_ref, o_ref):
    o_ref[...] = jnp.concatenate([hf_ref[...], hb_ref[...]], axis=-1) + prev_ref[...]


def _cat_res_prev_proj_kernel(hf_ref, hb_ref, prev_ref, w_ref, o_ref):
    o_ref[...] = (jnp.concatenate([hf_ref[...], hb_ref[...]], axis=-1)
                  + jnp.dot(prev_ref[...], w_ref[...], preferred_element_type=jnp.float32))


def _cat_res_halves_kernel(hf_ref, hb_ref, pf_ref, pb_ref, o_ref):
    # Identity residual: concat(hf, hb) + concat(pf, pb) == concat(hf+pf, hb+pb)
    o_ref[...] = jnp.concatenate([hf_ref[...] + pf_ref[...],
                                  hb_ref[...] + pb_ref[...]], axis=-1)


def _cat_res_halves_proj_kernel(hf_ref, hb_ref, pf_ref, pb_ref, wa_ref, wb_ref, o_ref):
    res = (jnp.dot(pf_ref[...], wa_ref[...], preferred_element_type=jnp.float32)
           + jnp.dot(pb_ref[...], wb_ref[...], preferred_element_type=jnp.float32))
    o_ref[...] = jnp.concatenate([hf_ref[...], hb_ref[...]], axis=-1) + res


def concat_bidir(hf2, hb2):
    M, H = hf2.shape
    tm = _pick_row_tile(M)
    fp = 4 * (2 * 2 * tm * H + 2 * tm * 2 * H)
    return pl.pallas_call(
        _cat_kernel,
        out_shape=jax.ShapeDtypeStruct((M, 2 * H), jnp.float32),
        grid=(pl.cdiv(M, tm),),
        in_specs=[pl.BlockSpec((tm, H), lambda i: (i, 0)),
                  pl.BlockSpec((tm, H), lambda i: (i, 0))],
        out_specs=pl.BlockSpec((tm, 2 * H), lambda i: (i, 0)),
        compiler_params=_cparams(("parallel",), fp),
    )(hf2, hb2)


def concat_residual_prev(hf2, hb2, prev2, proj_wt):
    """Layer-0 residual: residual source is a single (M, D) array (the stack input)."""
    M, H = hf2.shape
    D = prev2.shape[1]
    tm = _pick_row_tile(M)
    if proj_wt is None:
        fp = 4 * (2 * (2 * tm * H + tm * D) + 2 * tm * 2 * H)
        return pl.pallas_call(
            _cat_res_prev_kernel,
            out_shape=jax.ShapeDtypeStruct((M, 2 * H), jnp.float32),
            grid=(pl.cdiv(M, tm),),
            in_specs=[pl.BlockSpec((tm, H), lambda i: (i, 0)),
                      pl.BlockSpec((tm, H), lambda i: (i, 0)),
                      pl.BlockSpec((tm, D), lambda i: (i, 0))],
            out_specs=pl.BlockSpec((tm, 2 * H), lambda i: (i, 0)),
            compiler_params=_cparams(("parallel",), fp),
        )(hf2, hb2, prev2)
    fp = 4 * (2 * (2 * tm * H + tm * D) + D * 2 * H + 2 * tm * 2 * H)
    return pl.pallas_call(
        _cat_res_prev_proj_kernel,
        out_shape=jax.ShapeDtypeStruct((M, 2 * H), jnp.float32),
        grid=(pl.cdiv(M, tm),),
        in_specs=[pl.BlockSpec((tm, H), lambda i: (i, 0)),
                  pl.BlockSpec((tm, H), lambda i: (i, 0)),
                  pl.BlockSpec((tm, D), lambda i: (i, 0)),
                  _invariant_spec((D, 2 * H), lambda i: (0, 0))],
        out_specs=pl.BlockSpec((tm, 2 * H), lambda i: (i, 0)),
        compiler_params=_cparams(("parallel",), fp),
    )(hf2, hb2, prev2, proj_wt)


def concat_residual_halves(hf2, hb2, pf2, pb2, proj_wt):
    """Layer i>=1 residual: residual source is the previous layer's plain (h_fwd, h_bwd)."""
    M, H = hf2.shape
    tm = _pick_row_tile(M)
    if proj_wt is None:
        fp = 4 * (2 * 4 * tm * H + 2 * tm * 2 * H)
        return pl.pallas_call(
            _cat_res_halves_kernel,
            out_shape=jax.ShapeDtypeStruct((M, 2 * H), jnp.float32),
            grid=(pl.cdiv(M, tm),),
            in_specs=[pl.BlockSpec((tm, H), lambda i: (i, 0))] * 4,
            out_specs=pl.BlockSpec((tm, 2 * H), lambda i: (i, 0)),
            compiler_params=_cparams(("parallel",), fp),
        )(hf2, hb2, pf2, pb2)
    wa, wb = proj_wt[:H], proj_wt[H:]            # split (2H, 2H) per residual half
    fp = 4 * (2 * 4 * tm * H + 2 * H * 2 * H + 2 * tm * 2 * H)
    return pl.pallas_call(
        _cat_res_halves_proj_kernel,
        out_shape=jax.ShapeDtypeStruct((M, 2 * H), jnp.float32),
        grid=(pl.cdiv(M, tm),),
        in_specs=[pl.BlockSpec((tm, H), lambda i: (i, 0))] * 4
                 + [_invariant_spec((H, 2 * H), lambda i: (0, 0)),
                    _invariant_spec((H, 2 * H), lambda i: (0, 0))],
        out_specs=pl.BlockSpec((tm, 2 * H), lambda i: (i, 0)),
        compiler_params=_cparams(("parallel",), fp),
    )(hf2, hb2, pf2, pb2, wa, wb)


# ----------------------------------------------------------------------------
# Parameter init (mirrors nn.LSTM / nn.Linear shapes; stored pre-transposed/fused)
# ----------------------------------------------------------------------------
def init_params(key, input_size, hidden_size, num_layers,
                use_residual=True, use_residual_projection=False):
    H = hidden_size
    params = {'layers': [], 'res_proj': []}
    lstm_in = input_size
    for li in range(num_layers):
        k = 1.0 / np.sqrt(H)
        wih_t, bias = [], []
        layer = {}
        for d in ('f', 'b'):
            key, k1, k2, k3, k4 = jax.random.split(key, 5)
            wih = jax.random.uniform(k1, (4 * H, lstm_in), jnp.float32, -k, k)
            whh = jax.random.uniform(k2, (4 * H, H), jnp.float32, -k, k)
            bih = jax.random.uniform(k3, (4 * H,), jnp.float32, -k, k)
            bhh = jax.random.uniform(k4, (4 * H,), jnp.float32, -k, k)
            wih_t.append(wih.T)                              # (D, 4H)
            bias.append((bih + bhh).reshape(1, 4 * H))       # (1, 4H)
            layer['whh_' + d] = whh.T                        # (H, 4H)
        layer['w_ih'] = jnp.concatenate(wih_t, axis=1)       # (D, 8H) fused [fwd | bwd]
        layer['b'] = jnp.concatenate(bias, axis=1)           # (1, 8H)
        params['layers'].append(layer)

        if (use_residual and li < num_layers - 1
                and (use_residual_projection or lstm_in != 2 * H)):
            key, kp = jax.random.split(key)
            bound = 1.0 / np.sqrt(lstm_in)
            pw = jax.random.uniform(kp, (2 * H, lstm_in), jnp.float32, -bound, bound)
            params['res_proj'].append(pw.T)                  # (D, 2H) pre-transposed
        else:
            params['res_proj'].append(None)                  # Identity / unused
        lstm_in = 2 * H
    return params


# ----------------------------------------------------------------------------
# Forward pass (Pallas-backed)
# ----------------------------------------------------------------------------
def residual_bilstm_forward(x, params, use_residual=True):
    """x: (B, T, input_size) batch-first.  Returns (output (B, T, 2H), (h, c))."""
    B, T, D0 = x.shape
    num_layers = len(params['layers'])

    # time-major once, pad batch to the f32 sublane granularity once (review #11)
    Bp = ((B + 7) // 8) * 8
    x_tm = jnp.transpose(x, (1, 0, 2))                       # (T, B, D0)
    if Bp != B:
        x_tm = jnp.pad(x_tm, ((0, 0), (0, Bp - B), (0, 0)))
    M = T * Bp

    x2 = x_tm.reshape(M, D0)          # layer-0 LSTM input == layer-0 residual source
    inp2 = x2
    prev_halves = None                # previous layer's plain (h_fwd, h_bwd) halves
    final_h, final_c = [], []
    out2 = None

    for i in range(num_layers):
        layer = params['layers'][i]
        H = layer['whh_f'].shape[0]

        # 1) one big GEMM: per-timestep input gates for both directions (fused weight)
        gx2 = lstm_input_gates(inp2, layer['w_ih'], layer['b'])        # (M, 8H)
        gx3 = gx2.reshape(T, Bp, 8 * H)

        # 2) fused, time-blocked bidirectional recurrence (only h @ W_hh per step)
        hf_seq, hb_seq, h_fin, c_fin = bidir_lstm_layer(gx3, layer['whh_f'], layer['whh_b'])
        hf2 = hf_seq.reshape(M, H)
        hb2 = hb_seq.reshape(M, H)

        # 3) concat + residual (InputVariationalDropout(p=0.0) in eval == identity)
        if use_residual and i < num_layers - 1:
            if prev_halves is None:
                out2 = concat_residual_prev(hf2, hb2, x2, params['res_proj'][i])
            else:
                out2 = concat_residual_halves(hf2, hb2, prev_halves[0], prev_halves[1],
                                              params['res_proj'][i])
            prev_halves = (hf2, hb2)        # plain (pre-residual) output, kept as halves
        else:
            out2 = concat_bidir(hf2, hb2)

        inp2 = out2
        final_h.append(h_fin)               # (2, Bp, H): [fwd, bwd]
        final_c.append(c_fin)

    out = out2.reshape(T, Bp, -1)[:, :B]
    out = jnp.transpose(out, (1, 0, 2))                      # batch-first once: (B, T, 2H)
    final_h = jnp.concatenate(final_h, axis=0)[:, :B]        # (num_layers*2, B, H)
    final_c = jnp.concatenate(final_c, axis=0)[:, :B]
    return out, (final_h, final_c)


# ----------------------------------------------------------------------------
# Pure-JAX reference (HIGHEST-precision matmuls, for a tight sanity check)
# ----------------------------------------------------------------------------
def _ref_lstm_dir(x_tm, wih_t, whh_t, b):
    B = x_tm.shape[1]
    H = whh_t.shape[0]

    def step(carry, x_t):
        h, c = carry
        gates = (jnp.dot(x_t, wih_t, precision=_PREC)
                 + jnp.dot(h, whh_t, precision=_PREC) + b)
        i = jax.nn.sigmoid(gates[:, :H])
        f = jax.nn.sigmoid(gates[:, H:2 * H])
        g = jnp.tanh(gates[:, 2 * H:3 * H])
        o = jax.nn.sigmoid(gates[:, 3 * H:])
        c = f * c + i * g
        h = o * jnp.tanh(c)
        return (h, c), h

    (hT, cT), hs = jax.lax.scan(step, (jnp.zeros((B, H), jnp.float32),
                                       jnp.zeros((B, H), jnp.float32)), x_tm)
    return hs, hT, cT


def _ref_forward(x, params, use_residual=True):
    num_layers = len(params['layers'])
    prev_sequence = x
    output_sequence = x
    final_h, final_c = [], []
    for i in range(num_layers):
        L = params['layers'][i]
        G = L['whh_f'].shape[1]              # 4H
        wih_f, wih_b = L['w_ih'][:, :G], L['w_ih'][:, G:]
        b_f, b_b = L['b'][:, :G], L['b'][:, G:]
        x_tm = jnp.transpose(output_sequence, (1, 0, 2))
        hf_seq, hf, cf = _ref_lstm_dir(x_tm, wih_f, L['whh_f'], b_f)
        hb_seq, hb, cb = _ref_lstm_dir(x_tm[::-1], wih_b, L['whh_b'], b_b)
        hb_seq = hb_seq[::-1]
        out = jnp.transpose(jnp.concatenate([hf_seq, hb_seq], -1), (1, 0, 2))
        if i < num_layers - 1:
            tmp = out
            if use_residual:
                pw = params['res_proj'][i]
                res = prev_sequence if pw is None else jnp.dot(prev_sequence, pw, precision=_PREC)
                out = out + res
            prev_sequence = tmp
        output_sequence = out
        final_h.append(jnp.stack([hf, hb], 0))
        final_c.append(jnp.stack([cf, cb], 0))
    return output_sequence, (jnp.concatenate(final_h, 0), jnp.concatenate(final_c, 0))


# ----------------------------------------------------------------------------
if __name__ == "__main__":
    def check(B, T, input_size, hidden_size, num_layers, use_residual_projection, seed):
        key = jax.random.PRNGKey(seed)
        key, kx, kp = jax.random.split(key, 3)
        x = jax.random.normal(kx, (B, T, input_size), jnp.float32)
        params = init_params(kp, input_size, hidden_size, num_layers,
                             use_residual=True,
                             use_residual_projection=use_residual_projection)

        fwd = jax.jit(residual_bilstm_forward)
        out, (fh, fc) = jax.block_until_ready(fwd(x, params))

        assert out.shape == (B, T, 2 * hidden_size)
        assert fh.shape == (num_layers * 2, B, hidden_size)
        assert fc.shape == (num_layers * 2, B, hidden_size)

        ref_out, (ref_fh, ref_fc) = _ref_forward(x, params)
        np.testing.assert_allclose(np.asarray(out), np.asarray(ref_out), rtol=2e-3, atol=2e-4)
        np.testing.assert_allclose(np.asarray(fh), np.asarray(ref_fh), rtol=2e-3, atol=2e-4)
        np.testing.assert_allclose(np.asarray(fc), np.asarray(ref_fc), rtol=2e-3, atol=2e-4)

    # Config 1: projection residual on layer 0 (input != 2H), identity residual on layer 1.
    check(B=2, T=8, input_size=16, hidden_size=32, num_layers=3,
          use_residual_projection=False, seed=0)
    # Config 2: explicit residual projections everywhere; odd batch/time exercises padding.
    check(B=3, T=6, input_size=24, hidden_size=32, num_layers=3,
          use_residual_projection=True, seed=1)

    print("KERNEL_OK")
</pallas_src>

<mosaic_0001>
module attributes {stable_mosaic.version = 11 : i64} {
  func.func @_gates_kernel(%arg0: i32, %arg1: i32, %arg2: memref<64x16xf32, #tpu.memory_space<vmem>>, %arg3: memref<16x256xf32, #tpu.memory_space<vmem>>, %arg4: memref<1x256xf32, #tpu.memory_space<vmem>>, %arg5: memref<64x256xf32, #tpu.memory_space<vmem>>) attributes {dimension_semantics = [#tpu.dimension_semantics<parallel>, #tpu.dimension_semantics<parallel>], iteration_bounds = array<i64: 1, 1>, scalar_prefetch = 0 : i64, scratch_operands = 0 : i64, tpu.core_type = #tpu.core_type<tc>, window_params = [{transform_indices = @transform_0, window_bounds = array<i64: 64, 16>}, {transform_indices = @transform_1, window_bounds = array<i64: 16, 256>}, {transform_indices = @transform_2, window_bounds = array<i64: 1, 256>}, {transform_indices = @transform_3, window_bounds = array<i64: 64, 256>}]} {
    %c0 = arith.constant 0 : index
    %c0_0 = arith.constant 0 : index
    %0 = vector.load %arg2[%c0, %c0_0] : memref<64x16xf32, #tpu.memory_space<vmem>>, vector<64x16xf32>
    %c0_1 = arith.constant 0 : index
    %c0_2 = arith.constant 0 : index
    %1 = vector.load %arg3[%c0_1, %c0_2] : memref<16x256xf32, #tpu.memory_space<vmem>>, vector<16x256xf32>
    %cst = arith.constant dense<0.000000e+00> : vector<64x256xf32>
    %2 = tpu.matmul %0, %1, %cst {dimension_numbers = #tpu.dot_dimension_numbers<[1], [0], [0], [1], [0, 0, 1, 1], [], []>} : vector<64x16xf32>, vector<16x256xf32>, vector<64x256xf32> -> vector<64x256xf32>
    %c0_3 = arith.constant 0 : index
    %c0_4 = arith.constant 0 : index
    %3 = vector.load %arg4[%c0_3, %c0_4] : memref<1x256xf32, #tpu.memory_space<vmem>>, vector<1x256xf32>
    %4 = vector.broadcast %3 : vector<1x256xf32> to vector<64x256xf32>
    %5 = arith.addf %2, %4 : vector<64x256xf32>
    %c0_5 = arith.constant 0 : index
    %c0_6 = arith.constant 0 : index
    %6 = vector.load %arg5[%c0_5, %c0_6] : memref<64x256xf32, #tpu.memory_space<vmem>>, vector<64x256xf32>
    tpu.vector_store %arg5[%c0_5, %c0_6], %5 {strides = array<i32>} : memref<64x256xf32, #tpu.memory_space<vmem>>, vector<64x256xf32>,
    return
  }
  func.func @transform_0(%arg0: i32, %arg1: i32) -> (i32, i32) {
    %c0_i32 = arith.constant 0 : i32
    %c0_i32_0 = arith.constant 0 : i32
    return %arg0, %c0_i32 : i32, i32
  }
  func.func @transform_1(%arg0: i32, %arg1: i32) -> (i32, i32) {
    %c0_i32 = arith.constant 0 : i32
    %c0_i32_0 = arith.constant 0 : i32
    return %c0_i32, %arg1 : i32, i32
  }
  func.func @transform_2(%arg0: i32, %arg1: i32) -> (i32, i32) {
    %c0_i32 = arith.constant 0 : i32
    %c0_i32_0 = arith.constant 0 : i32
    return %c0_i32, %arg1 : i32, i32
  }
  func.func @transform_3(%arg0: i32, %arg1: i32) -> (i32, i32) {
    %c0_i32 = arith.constant 0 : i32
    return %arg0, %arg1 : i32, i32
  }
}

module attributes {stable_mosaic.version = 11 : i64} {
  func.func @_bidir_lstm_kernel(%arg0: i32, %arg1: memref<8x8x128xf32, #tpu.memory_space<vmem>>, %arg2: memref<8x8x128xf32, #tpu.memory_space<vmem>>, %arg3: memref<32x128xf32, #tpu.memory_space<vmem>>, %arg4: memref<32x128xf32, #tpu.memory_space<vmem>>, %arg5: memref<8x8x32xf32, #tpu.memory_space<vmem>>, %arg6: memref<8x8x32xf32, #tpu.memory_space<vmem>>, %arg7: memref<2x8x32xf32, #tpu.memory_space<vmem>>, %arg8: memref<2x8x32xf32, #tpu.memory_space<vmem>>, %arg9: memref<2x8x32xf32, #tpu.memory_space<vmem>>, %arg10: memref<2x8x32xf32, #tpu.memory_space<vmem>>) attributes {dimension_semantics = [#tpu.dimension_semantics<arbitrary>], iteration_bounds = array<i64: 1>, scalar_prefetch = 0 : i64, scratch_operands = 2 : i64, tpu.core_type = #tpu.core_type<tc>, window_params = [{transform_indices = @transform_0, window_bounds = array<i64: 8, 8, 128>}, {transform_indices = @transform_1, window_bounds = array<i64: 8, 8, 128>}, {pipeline_mode = #tpu.pipeline_mode<synchronous>, transform_indices = @transform_2, window_bounds = array<i64: 32, 128>}, {pipeline_mode = #tpu.pipeline_mode<synchronous>, transform_indices = @transform_3, window_bounds = array<i64: 32, 128>}, {transform_indices = @transform_4, window_bounds = array<i64: 8, 8, 32>}, {transform_indices = @transform_5, window_bounds = array<i64: 8, 8, 32>}, {pipeline_mode = #tpu.pipeline_mode<synchronous>, transform_indices = @transform_6, window_bounds = array<i64: 2, 8, 32>}, {pipeline_mode = #tpu.pipeline_mode<synchronous>, transform_indices = @transform_7, window_bounds = array<i64: 2, 8, 32>}]} {
    %c0_i32 = arith.constant 0 : i32
    %0 = arith.cmpi eq, %arg0, %c0_i32 : i32
    %1 = arith.extui %0 : i1 to i32
    %c0_i32_0 = arith.constant 0 : i32
    %2 = arith.cmpi ne, %1, %c0_i32_0 : i32
    scf.if %2 {
      %cst_350 = arith.constant 0.000000e+00 : f32
      %680 = vector.broadcast %cst_350 : f32 to vector<2x8x32xf32>
      %c0_351 = arith.constant 0 : index
      %c0_352 = arith.constant 0 : index
      %c0_353 = arith.constant 0 : index
      %681 = vector.load %arg9[%c0_351, %c0_352, %c0_353] : memref<2x8x32xf32, #tpu.memory_space<vmem>>, vector<2x8x32xf32>
      tpu.vector_store %arg9[%c0_351, %c0_352, %c0_353], %680 {strides = array<i32>} : memref<2x8x32xf32, #tpu.memory_space<vmem>>, vector<2x8x32xf32>,
      %cst_354 = arith.constant 0.000000e+00 : f32
      %682 = vector.broadcast %cst_354 : f32 to vector<2x8x32xf32>
      %c0_355 = arith.constant 0 : index
      %c0_356 = arith.constant 0 : index
      %c0_357 = arith.constant 0 : index
      %683 = vector.load %arg10[%c0_355, %c0_356, %c0_357] : memref<2x8x32xf32, #tpu.memory_space<vmem>>, vector<2x8x32xf32>
      tpu.vector_store %arg10[%c0_355, %c0_356, %c0_357], %682 {strides = array<i32>} : memref<2x8x32xf32, #tpu.memory_space<vmem>>, vector<2x8x32xf32>,
    } else {
    }
    %c0 = arith.constant 0 : index
    %c0_1 = arith.constant 0 : index
    %3 = vector.load %arg3[%c0, %c0_1] : memref<32x128xf32, #tpu.memory_space<vmem>>, vector<32x128xf32>
    %c0_2 = arith.constant 0 : index
    %c0_3 = arith.constant 0 : index
    %4 = vector.load %arg4[%c0_2, %c0_3] : memref<32x128xf32, #tpu.memory_space<vmem>>, vector<32x128xf32>
    %c0_4 = arith.constant 0 : index
    %c0_5 = arith.constant 0 : index
    %c0_6 = arith.constant 0 : index
    %5 = vector.load %arg1[%c0_4, %c0_5, %c0_6] : memref<8x8x128xf32, #tpu.memory_space<vmem>>, vector<1x8x128xf32>
    %6 = vector.shape_cast %5 : vector<1x8x128xf32> to vector<8x128xf32>
    %c0_7 = arith.constant 0 : index
    %c0_8 = arith.constant 0 : index
    %c0_9 = arith.constant 0 : index
    %7 = vector.load %arg9[%c0_7, %c0_8, %c0_9] : memref<2x8x32xf32, #tpu.memory_space<vmem>>, vector<1x8x32xf32>
    %8 = vector.shape_cast %7 : vector<1x8x32xf32> to vector<8x32xf32>
    %cst = arith.constant dense<0.000000e+00> : vector<8x128xf32>
    %9 = tpu.matmul %8, %3, %cst {dimension_numbers = #tpu.dot_dimension_numbers<[1], [0], [0], [1], [0, 0, 1, 1], [], []>} : vector<8x32xf32>, vector<32x128xf32>, vector<8x128xf32> -> vector<8x128xf32>
    %10 = arith.addf %6, %9 : vector<8x128xf32>
    %c7 = arith.constant 7 : index
    %c0_10 = arith.constant 0 : index
    %c0_11 = arith.constant 0 : index
    %11 = vector.load %arg2[%c7, %c0_10, %c0_11] : memref<8x8x128xf32, #tpu.memory_space<vmem>>, vector<1x8x128xf32>
    %12 = vector.shape_cast %11 : vector<1x8x128xf32> to vector<8x128xf32>
    %c1 = arith.constant 1 : index
    %c0_12 = arith.constant 0 : index
    %c0_13 = arith.constant 0 : index
    %13 = vector.load %arg9[%c1, %c0_12, %c0_13] : memref<2x8x32xf32, #tpu.memory_space<vmem>>, vector<1x8x32xf32>
    %14 = vector.shape_cast %13 : vector<1x8x32xf32> to vector<8x32xf32>
    %cst_14 = arith.constant dense<0.000000e+00> : vector<8x128xf32>
    %15 = tpu.matmul %14, %4, %cst_14 {dimension_numbers = #tpu.dot_dimension_numbers<[1], [0], [0], [1], [0, 0, 1, 1], [], []>} : vector<8x32xf32>, vector<32x128xf32>, vector<8x128xf32> -> vector<8x128xf32>
    %16 = arith.addf %12, %15 : vector<8x128xf32>
    %c0_15 = arith.constant 0 : index
    %c0_16 = arith.constant 0 : index
    %c0_17 = arith.constant 0 : index
    %17 = vector.load %arg10[%c0_15, %c0_16, %c0_17] : memref<2x8x32xf32, #tpu.memory_space<vmem>>, vector<1x8x32xf32>
    %18 = vector.shape_cast %17 : vector<1x8x32xf32> to vector<8x32xf32>
    %19 = vector.extract_strided_slice %10 {offsets = [0, 0], sizes = [8, 32], strides = [1, 1]} : vector<8x128xf32> to vector<8x32xf32>
    %20 = arith.negf %19 : vector<8x32xf32>
    %21 = math.exp %20 : vector<8x32xf32>
    %cst_18 = arith.constant 1.000000e+00 : f32
    %22 = vector.broadcast %cst_18 : f32 to vector<8x32xf32>
    %23 = arith.addf %22, %21 : vector<8x32xf32>
    %24 = arith.divf %22, %23 : vector<8x32xf32>
    %25 = vector.extract_strided_slice %10 {offsets = [0, 32], sizes = [8, 32], strides = [1, 1]} : vector<8x128xf32> to vector<8x32xf32>
    %26 = arith.negf %25 : vector<8x32xf32>
    %27 = math.exp %26 : vector<8x32xf32>
    %cst_19 = arith.constant 1.000000e+00 : f32
    %28 = vector.broadcast %cst_19 : f32 to vector<8x32xf32>
    %29 = arith.addf %28, %27 : vector<8x32xf32>
    %30 = arith.divf %28, %29 : vector<8x32xf32>
    %31 = vector.extract_strided_slice %10 {offsets = [0, 64], sizes = [8, 32], strides = [1, 1]} : vector<8x128xf32> to vector<8x32xf32>
    %32 = math.tanh %31 : vector<8x32xf32>
    %33 = vector.extract_strided_slice %10 {offsets = [0, 96], sizes = [8, 32], strides = [1, 1]} : vector<8x128xf32> to vector<8x32xf32>
    %34 = arith.negf %33 : vector<8x32xf32>
    %35 = math.exp %34 : vector<8x32xf32>
    %cst_20 = arith.constant 1.000000e+00 : f32
    %36 = vector.broadcast %cst_20 : f32 to vector<8x32xf32>
    %37 = arith.addf %36, %35 : vector<8x32xf32>
    %38 = arith.divf %36, %37 : vector<8x32xf32>
    %39 = arith.mulf %30, %18 : vector<8x32xf32>
    %40 = arith.mulf %24, %32 : vector<8x32xf32>
    %41 = arith.addf %39, %40 : vector<8x32xf32>
    %42 = math.tanh %41 : vector<8x32xf32>
    %43 = arith.mulf %38, %42 : vector<8x32xf32>
    %c1_21 = arith.constant 1 : index
    %c0_22 = arith.constant 0 : index
    %c0_23 = arith.constant 0 : index
    %44 = vector.load %arg10[%c1_21, %c0_22, %c0_23] : memref<2x8x32xf32, #tpu.memory_space<vmem>>, vector<1x8x32xf32>
    %45 = vector.shape_cast %44 : vector<1x8x32xf32> to vector<8x32xf32>
    %46 = vector.extract_strided_slice %16 {offsets = [0, 0], sizes = [8, 32], strides = [1, 1]} : vector<8x128xf32> to vector<8x32xf32>
    %47 = arith.negf %46 : vector<8x32xf32>
    %48 = math.exp %47 : vector<8x32xf32>
    %cst_24 = arith.constant 1.000000e+00 : f32
    %49 = vector.broadcast %cst_24 : f32 to vector<8x32xf32>
    %50 = arith.addf %49, %48 : vector<8x32xf32>
    %51 = arith.divf %49, %50 : vector<8x32xf32>
    %52 = vector.extract_strided_slice %16 {offsets = [0, 32], sizes = [8, 32], strides = [1, 1]} : vector<8x128xf32> to vector<8x32xf32>
    %53 = arith.negf %52 : vector<8x32xf32>
    %54 = math.exp %53 : vector<8x32xf32>
    %cst_25 = arith.constant 1.000000e+00 : f32
    %55 = vector.broadcast %cst_25 : f32 to vector<8x32xf32>
    %56 = arith.addf %55, %54 : vector<8x32xf32>
    %57 = arith.divf %55, %56 : vector<8x32xf32>
    %58 = vector.extract_strided_slice %16 {offsets = [0, 64], sizes = [8, 32], strides = [1, 1]} : vector<8x128xf32> to vector<8x32xf32>
    %59 = math.tanh %58 : vector<8x32xf32>
    %60 = vector.extract_strided_slice %16 {offsets = [0, 96], sizes = [8, 32], strides = [1, 1]} : vector<8x128xf32> to vector<8x32xf32>
    %61 = arith.negf %60 : vector<8x32xf32>
    %62 = math.exp %61 : vector<8x32xf32>
    %cst_26 = arith.constant 1.000000e+00 : f32
    %63 = vector.broadcast %cst_26 : f32 to vector<8x32xf32>
    %64 = arith.addf %63, %62 : vector<8x32xf32>
    %65 = arith.divf %63, %64 : vector<8x32xf32>
    %66 = arith.mulf %57, %45 : vector<8x32xf32>
    %67 = arith.mulf %51, %59 : vector<8x32xf32>
    %68 = arith.addf %66, %67 : vector<8x32xf32>
    %69 = math.tanh %68 : vector<8x32xf32>
    %70 = arith.mulf %65, %69 : vector<8x32xf32>
    %c0_27 = arith.constant 0 : index
    %c0_28 = arith.constant 0 : index
    %c0_29 = arith.constant 0 : index
    %71 = vector.load %arg9[%c0_27, %c0_28, %c0_29] : memref<2x8x32xf32, #tpu.memory_space<vmem>>, vector<1x8x32xf32>
    %72 = vector.shape_cast %71 : vector<1x8x32xf32> to vector<8x32xf32>
    %73 = vector.shape_cast %43 : vector<8x32xf32> to vector<1x8x32xf32>
    tpu.vector_store %arg9[%c0_27, %c0_28, %c0_29], %73 {strides = array<i32>} : memref<2x8x32xf32, #tpu.memory_space<vmem>>, vector<1x8x32xf32>,
    %c0_30 = arith.constant 0 : index
    %c0_31 = arith.constant 0 : index
    %c0_32 = arith.constant 0 : index
    %74 = vector.load %arg10[%c0_30, %c0_31, %c0_32] : memref<2x8x32xf32, #tpu.memory_space<vmem>>, vector<1x8x32xf32>
    %75 = vector.shape_cast %74 : vector<1x8x32xf32> to vector<8x32xf32>
    %76 = vector.shape_cast %41 : vector<8x32xf32> to vector<1x8x32xf32>
    tpu.vector_store %arg10[%c0_30, %c0_31, %c0_32], %76 {strides = array<i32>} : memref<2x8x32xf32, #tpu.memory_space<vmem>>, vector<1x8x32xf32>,
    %c1_33 = arith.constant 1 : index
    %c0_34 = arith.constant 0 : index
    %c0_35 = arith.constant 0 : index
    %77 = vector.load %arg9[%c1_33, %c0_34, %c0_35] : memref<2x8x32xf32, #tpu.memory_space<vmem>>, vector<1x8x32xf32>
    %78 = vector.shape_cast %77 : vector<1x8x32xf32> to vector<8x32xf32>
    %79 = vector.shape_cast %70 : vector<8x32xf32> to vector<1x8x32xf32>
    tpu.vector_store %arg9[%c1_33, %c0_34, %c0_35], %79 {strides = array<i32>} : memref<2x8x32xf32, #tpu.memory_space<vmem>>, vector<1x8x32xf32>,
    %c1_36 = arith.constant 1 : index
    %c0_37 = arith.constant 0 : index
    %c0_38 = arith.constant 0 : index
    %80 = vector.load %arg10[%c1_36, %c0_37, %c0_38] : memref<2x8x32xf32, #tpu.memory_space<vmem>>, vector<1x8x32xf32>
    %81 = vector.shape_cast %80 : vector<1x8x32xf32> to vector<8x32xf32>
    %82 = vector.shape_cast %68 : vector<8x32xf32> to vector<1x8x32xf32>
    tpu.vector_store %arg10[%c1_36, %c0_37, %c0_38], %82 {strides = array<i32>} : memref<2x8x32xf32, #tpu.memory_space<vmem>>, vector<1x8x32xf32>,
    %c0_39 = arith.constant 0 : index
    %c0_40 = arith.constant 0 : index
    %c0_41 = arith.constant 0 : index
    %83 = vector.load %arg5[%c0_39, %c0_40, %c0_41] : memref<8x8x32xf32, #tpu.memory_space<vmem>>, vector<1x8x32xf32>
    %84 = vector.shape_cast %83 : vector<1x8x32xf32> to vector<8x32xf32>
    %85 = vector.shape_cast %43 : vector<8x32xf32> to vector<1x8x32xf32>
    tpu.vector_store %arg5[%c0_39, %c0_40, %c0_41], %85 {strides = array<i32>} : memref<8x8x32xf32, #tpu.memory_space<vmem>>, vector<1x8x32xf32>,
    %c7_42 = arith.constant 7 : index
    %c0_43 = arith.constant 0 : index
    %c0_44 = arith.constant 0 : index
    %86 = vector.load %arg6[%c7_42, %c0_43, %c0_44] : memref<8x8x32xf32, #tpu.memory_space<vmem>>, vector<1x8x32xf32>
    %87 = vector.shape_cast %86 : vector<1x8x32xf32> to vector<8x32xf32>
    %88 = vector.shape_cast %70 : vector<8x32xf32> to vector<1x8x32xf32>
    tpu.vector_store %arg6[%c7_42, %c0_43, %c0_44], %88 {strides = array<i32>} : memref<8x8x32xf32, #tpu.memory_space<vmem>>, vector<1x8x32xf32>,
    %c1_45 = arith.constant 1 : index
    %c0_46 = arith.constant 0 : index
    %c0_47 = arith.constant 0 : index
    %89 = vector.load %arg1[%c1_45, %c0_46, %c0_47] : memref<8x8x128xf32, #tpu.memory_space<vmem>>, vector<1x8x128xf32>
    %90 = vector.shape_cast %89 : vector<1x8x128xf32> to vector<8x128xf32>
    %c0_48 = arith.constant 0 : index
    %c0_49 = arith.constant 0 : index
    %c0_50 = arith.constant 0 : index
    %91 = vector.load %arg9[%c0_48, %c0_49, %c0_50] : memref<2x8x32xf32, #tpu.memory_space<vmem>>, vector<1x8x32xf32>
    %92 = vector.shape_cast %91 : vector<1x8x32xf32> to vector<8x32xf32>
    %cst_51 = arith.constant dense<0.000000e+00> : vector<8x128xf32>
    %93 = tpu.matmul %92, %3, %cst_51 {dimension_numbers = #tpu.dot_dimension_numbers<[1], [0], [0], [1], [0, 0, 1, 1], [], []>} : vector<8x32xf32>, vector<32x128xf32>, vector<8x128xf32> -> vector<8x128xf32>
    %94 = arith.addf %90, %93 : vector<8x128xf32>
    %c6 = arith.constant 6 : index
    %c0_52 = arith.constant 0 : index
    %c0_53 = arith.constant 0 : index
    %95 = vector.load %arg2[%c6, %c0_52, %c0_53] : memref<8x8x128xf32, #tpu.memory_space<vmem>>, vector<1x8x128xf32>
    %96 = vector.shape_cast %95 : vector<1x8x128xf32> to vector<8x128xf32>
    %c1_54 = arith.constant 1 : index
    %c0_55 = arith.constant 0 : index
    %c0_56 = arith.constant 0 : index
    %97 = vector.load %arg9[%c1_54, %c0_55, %c0_56] : memref<2x8x32xf32, #tpu.memory_space<vmem>>, vector<1x8x32xf32>
    %98 = vector.shape_cast %97 : vector<1x8x32xf32> to vector<8x32xf32>
    %cst_57 = arith.constant dense<0.000000e+00> : vector<8x128xf32>
    %99 = tpu.matmul %98, %4, %cst_57 {dimension_numbers = #tpu.dot_dimension_numbers<[1], [0], [0], [1], [0, 0, 1, 1], [], []>} : vector<8x32xf32>, vector<32x128xf32>, vector<8x128xf32> -> vector<8x128xf32>
    %100 = arith.addf %96, %99 : vector<8x128xf32>
    %c0_58 = arith.constant 0 : index
    %c0_59 = arith.constant 0 : index
    %c0_60 = arith.constant 0 : index
    %101 = vector.load %arg10[%c0_58, %c0_59, %c0_60] : memref<2x8x32xf32, #tpu.memory_space<vmem>>, vector<1x8x32xf32>
    %102 = vector.shape_cast %101 : vector<1x8x32xf32> to vector<8x32xf32>
    %103 = vector.extract_strided_slice %94 {offsets = [0, 0], sizes = [8, 32], strides = [1, 1]} : vector<8x128xf32> to vector<8x32xf32>
    %104 = arith.negf %103 : vector<8x32xf32>
    %105 = math.exp %104 : vector<8x32xf32>
    %cst_61 = arith.constant 1.000000e+00 : f32
    %106 = vector.broadcast %cst_61 : f32 to vector<8x32xf32>
    %107 = arith.addf %106, %105 : vector<8x32xf32>
    %108 = arith.divf %106, %107 : vector<8x32xf32>
    %109 = vector.extract_strided_slice %94 {offsets = [0, 32], sizes = [8, 32], strides = [1, 1]} : vector<8x128xf32> to vector<8x32xf32>
    %110 = arith.negf %109 : vector<8x32xf32>
    %111 = math.exp %110 : vector<8x32xf32>
    %cst_62 = arith.constant 1.000000e+00 : f32
    %112 = vector.broadcast %cst_62 : f32 to vector<8x32xf32>
    %113 = arith.addf %112, %111 : vector<8x32xf32>
    %114 = arith.divf %112, %113 : vector<8x32xf32>
    %115 = vector.extract_strided_slice %94 {offsets = [0, 64], sizes = [8, 32], strides = [1, 1]} : vector<8x128xf32> to vector<8x32xf32>
    %116 = math.tanh %115 : vector<8x32xf32>
    %117 = vector.extract_strided_slice %94 {offsets = [0, 96], sizes = [8, 32], strides = [1, 1]} : vector<8x128xf32> to vector<8x32xf32>
    %118 = arith.negf %117 : vector<8x32xf32>
    %119 = math.exp %118 : vector<8x32xf32>
    %cst_63 = arith.constant 1.000000e+00 : f32
    %120 = vector.broadcast %cst_63 : f32 to vector<8x32xf32>
    %121 = arith.addf %120, %119 : vector<8x32xf32>
    %122 = arith.divf %120, %121 : vector<8x32xf32>
    %123 = arith.mulf %114, %102 : vector<8x32xf32>
    %124 = arith.mulf %108, %116 : vector<8x32xf32>
    %125 = arith.addf %123, %124 : vector<8x32xf32>
    %126 = math.tanh %125 : vector<8x32xf32>
    %127 = arith.mulf %122, %126 : vector<8x32xf32>
    %c1_64 = arith.constant 1 : index
    %c0_65 = arith.constant 0 : index
    %c0_66 = arith.constant 0 : index
    %128 = vector.load %arg10[%c1_64, %c0_65, %c0_66] : memref<2x8x32xf32, #tpu.memory_space<vmem>>, vector<1x8x32xf32>
    %129 = vector.shape_cast %128 : vector<1x8x32xf32> to vector<8x32xf32>
    %130 = vector.extract_strided_slice %100 {offsets = [0, 0], sizes = [8, 32], strides = [1, 1]} : vector<8x128xf32> to vector<8x32xf32>
    %131 = arith.negf %130 : vector<8x32xf32>
    %132 = math.exp %131 : vector<8x32xf32>
    %cst_67 = arith.constant 1.000000e+00 : f32
    %133 = vector.broadcast %cst_67 : f32 to vector<8x32xf32>
    %134 = arith.addf %133, %132 : vector<8x32xf32>
    %135 = arith.divf %133, %134 : vector<8x32xf32>
    %136 = vector.extract_strided_slice %100 {offsets = [0, 32], sizes = [8, 32], strides = [1, 1]} : vector<8x128xf32> to vector<8x32xf32>
    %137 = arith.negf %136 : vector<8x32xf32>
    %138 = math.exp %137 : vector<8x32xf32>
    %cst_68 = arith.constant 1.000000e+00 : f32
    %139 = vector.broadcast %cst_68 : f32 to vector<8x32xf32>
    %140 = arith.addf %139, %138 : vector<8x32xf32>
    %141 = arith.divf %139, %140 : vector<8x32xf32>
    %142 = vector.extract_strided_slice %100 {offsets = [0, 64], sizes = [8, 32], strides = [1, 1]} : vector<8x128xf32> to vector<8x32xf32>
    %143 = math.tanh %142 : vector<8x32xf32>
    %144 = vector.extract_strided_slice %100 {offsets = [0, 96], sizes = [8, 32], strides = [1, 1]} : vector<8x128xf32> to vector<8x32xf32>
    %145 = arith.negf %144 : vector<8x32xf32>
    %146 = math.exp %145 : vector<8x32xf32>
    %cst_69 = arith.constant 1.000000e+00 : f32
    %147 = vector.broadcast %cst_69 : f32 to vector<8x32xf32>
    %148 = arith.addf %147, %146 : vector<8x32xf32>
    %149 = arith.divf %147, %148 : vector<8x32xf32>
    %150 = arith.mulf %141, %129 : vector<8x32xf32>
    %151 = arith.mulf %135, %143 : vector<8x32xf32>
    %152 = arith.addf %150, %151 : vector<8x32xf32>
    %153 = math.tanh %152 : vector<8x32xf32>
    %154 = arith.mulf %149, %153 : vector<8x32xf32>
    %c0_70 = arith.constant 0 : index
    %c0_71 = arith.constant 0 : index
    %c0_72 = arith.constant 0 : index
    %155 = vector.load %arg9[%c0_70, %c0_71, %c0_72] : memref<2x8x32xf32, #tpu.memory_space<vmem>>, vector<1x8x32xf32>
    %156 = vector.shape_cast %155 : vector<1x8x32xf32> to vector<8x32xf32>
    %157 = vector.shape_cast %127 : vector<8x32xf32> to vector<1x8x32xf32>
    tpu.vector_store %arg9[%c0_70, %c0_71, %c0_72], %157 {strides = array<i32>} : memref<2x8x32xf32, #tpu.memory_space<vmem>>, vector<1x8x32xf32>,
    %c0_73 = arith.constant 0 : index
    %c0_74 = arith.constant 0 : index
    %c0_75 = arith.constant 0 : index
    %158 = vector.load %arg10[%c0_73, %c0_74, %c0_75] : memref<2x8x32xf32, #tpu.memory_space<vmem>>, vector<1x8x32xf32>
    %159 = vector.shape_cast %158 : vector<1x8x32xf32> to vector<8x32xf32>
    %160 = vector.shape_cast %125 : vector<8x32xf32> to vector<1x8x32xf32>
    tpu.vector_store %arg10[%c0_73, %c0_74, %c0_75], %160 {strides = array<i32>} : memref<2x8x32xf32, #tpu.memory_space<vmem>>, vector<1x8x32xf32>,
    %c1_76 = arith.constant 1 : index
    %c0_77 = arith.constant 0 : index
    %c0_78 = arith.constant 0 : index
    %161 = vector.load %arg9[%c1_76, %c0_77, %c0_78] : memref<2x8x32xf32, #tpu.memory_space<vmem>>, vector<1x8x32xf32>
    %162 = vector.shape_cast %161 : vector<1x8x32xf32> to vector<8x32xf32>
    %163 = vector.shape_cast %154 : vector<8x32xf32> to vector<1x8x32xf32>
    tpu.vector_store %arg9[%c1_76, %c0_77, %c0_78], %163 {strides = array<i32>} : memref<2x8x32xf32, #tpu.memory_space<vmem>>, vector<1x8x32xf32>,
    %c1_79 = arith.constant 1 : index
    %c0_80 = arith.constant 0 : index
    %c0_81 = arith.constant 0 : index
    %164 = vector.load %arg10[%c1_79, %c0_80, %c0_81] : memref<2x8x32xf32, #tpu.memory_space<vmem>>, vector<1x8x32xf32>
    %165 = vector.shape_cast %164 : vector<1x8x32xf32> to vector<8x32xf32>
    %166 = vector.shape_cast %152 : vector<8x32xf32> to vector<1x8x32xf32>
    tpu.vector_store %arg10[%c1_79, %c0_80, %c0_81], %166 {strides = array<i32>} : memref<2x8x32xf32, #tpu.memory_space<vmem>>, vector<1x8x32xf32>,
    %c1_82 = arith.constant 1 : index
    %c0_83 = arith.constant 0 : index
    %c0_84 = arith.constant 0 : index
    %167 = vector.load %arg5[%c1_82, %c0_83, %c0_84] : memref<8x8x32xf32, #tpu.memory_space<vmem>>, vector<1x8x32xf32>
    %168 = vector.shape_cast %167 : vector<1x8x32xf32> to vector<8x32xf32>
    %169 = vector.shape_cast %127 : vector<8x32xf32> to vector<1x8x32xf32>
    tpu.vector_store %arg5[%c1_82, %c0_83, %c0_84], %169 {strides = array<i32>} : memref<8x8x32xf32, #tpu.memory_space<vmem>>, vector<1x8x32xf32>,
    %c6_85 = arith.constant 6 : index
    %c0_86 = arith.constant 0 : index
    %c0_87 = arith.constant 0 : index
    %170 = vector.load %arg6[%c6_85, %c0_86, %c0_87] : memref<8x8x32xf32, #tpu.memory_space<vmem>>, vector<1x8x32xf32>
    %171 = vector.shape_cast %170 : vector<1x8x32xf32> to vector<8x32xf32>
    %172 = vector.shape_cast %154 : vector<8x32xf32> to vector<1x8x32xf32>
    tpu.vector_store %arg6[%c6_85, %c0_86, %c0_87], %172 {strides = array<i32>} : memref<8x8x32xf32, #tpu.memory_space<vmem>>, vector<1x8x32xf32>,
    %c2 = arith.constant 2 : index
    %c0_88 = arith.constant 0 : index
    %c0_89 = arith.constant 0 : index
    %173 = vector.load %arg1[%c2, %c0_88, %c0_89] : memref<8x8x128xf32, #tpu.memory_space<vmem>>, vector<1x8x128xf32>
    %174 = vector.shape_cast %173 : vector<1x8x128xf32> to vector<8x128xf32>
    %c0_90 = arith.constant 0 : index
    %c0_91 = arith.constant 0 : index
    %c0_92 = arith.constant 0 : index
    %175 = vector.load %arg9[%c0_90, %c0_91, %c0_92] : memref<2x8x32xf32, #tpu.memory_space<vmem>>, vector<1x8x32xf32>
    %176 = vector.shape_cast %175 : vector<1x8x32xf32> to vector<8x32xf32>
    %cst_93 = arith.constant dense<0.000000e+00> : vector<8x128xf32>
    %177 = tpu.matmul %176, %3, %cst_93 {dimension_numbers = #tpu.dot_dimension_numbers<[1], [0], [0], [1], [0, 0, 1, 1], [], []>} : vector<8x32xf32>, vector<32x128xf32>, vector<8x128xf32> -> vector<8x128xf32>
    %178 = arith.addf %174, %177 : vector<8x128xf32>
    %c5 = arith.constant 5 : index
    %c0_94 = arith.constant 0 : index
    %c0_95 = arith.constant 0 : index
    %179 = vector.load %arg2[%c5, %c0_94, %c0_95] : memref<8x8x128xf32, #tpu.memory_space<vmem>>, vector<1x8x128xf32>
    %180 = vector.shape_cast %179 : vector<1x8x128xf32> to vector<8x128xf32>
    %c1_96 = arith.constant 1 : index
    %c0_97 = arith.constant 0 : index
    %c0_98 = arith.constant 0 : index
    %181 = vector.load %arg9[%c1_96, %c0_97, %c0_98] : memref<2x8x32xf32, #tpu.memory_space<vmem>>, vector<1x8x32xf32>
    %182 = vector.shape_cast %181 : vector<1x8x32xf32> to vector<8x32xf32>
    %cst_99 = arith.constant dense<0.000000e+00> : vector<8x128xf32>
    %183 = tpu.matmul %182, %4, %cst_99 {dimension_numbers = #tpu.dot_dimension_numbers<[1], [0], [0], [1], [0, 0, 1, 1], [], []>} : vector<8x32xf32>, vector<32x128xf32>, vector<8x128xf32> -> vector<8x128xf32>
    %184 = arith.addf %180, %183 : vector<8x128xf32>
    %c0_100 = arith.constant 0 : index
    %c0_101 = arith.constant 0 : index
    %c0_102 = arith.constant 0 : index
    %185 = vector.load %arg10[%c0_100, %c0_101, %c0_102] : memref<2x8x32xf32, #tpu.memory_space<vmem>>, vector<1x8x32xf32>
    %186 = vector.shape_cast %185 : vector<1x8x32xf32> to vector<8x32xf32>
    %187 = vector.extract_strided_slice %178 {offsets = [0, 0], sizes = [8, 32], strides = [1, 1]} : vector<8x128xf32> to vector<8x32xf32>
    %188 = arith.negf %187 : vector<8x32xf32>
    %189 = math.exp %188 : vector<8x32xf32>
    %cst_103 = arith.constant 1.000000e+00 : f32
    %190 = vector.broadcast %cst_103 : f32 to vector<8x32xf32>
    %191 = arith.addf %190, %189 : vector<8x32xf32>
    %192 = arith.divf %190, %191 : vector<8x32xf32>
    %193 = vector.extract_strided_slice %178 {offsets = [0, 32], sizes = [8, 32], strides = [1, 1]} : vector<8x128xf32> to vector<8x32xf32>
    %194 = arith.negf %193 : vector<8x32xf32>
    %195 = math.exp %194 : vector<8x32xf32>
    %cst_104 = arith.constant 1.000000e+00 : f32
    %196 = vector.broadcast %cst_104 : f32 to vector<8x32xf32>
    %197 = arith.addf %196, %195 : vector<8x32xf32>
    %198 = arith.divf %196, %197 : vector<8x32xf32>
    %199 = vector.extract_strided_slice %178 {offsets = [0, 64], sizes = [8, 32], strides = [1, 1]} : vector<8x128xf32> to vector<8x32xf32>
    %200 = math.tanh %199 : vector<8x32xf32>
    %201 = vector.extract_strided_slice %178 {offsets = [0, 96], sizes = [8, 32], strides = [1, 1]} : vector<8x128xf32> to vector<8x32xf32>
    %202 = arith.negf %201 : vector<8x32xf32>
    %203 = math.exp %202 : vector<8x32xf32>
    %cst_105 = arith.constant 1.000000e+00 : f32
    %204 = vector.broadcast %cst_105 : f32 to vector<8x32xf32>
    %205 = arith.addf %204, %203 : vector<8x32xf32>
    %206 = arith.divf %204, %205 : vector<8x32xf32>
    %207 = arith.mulf %198, %186 : vector<8x32xf32>
    %208 = arith.mulf %192, %200 : vector<8x32xf32>
    %209 = arith.addf %207, %208 : vector<8x32xf32>
    %210 = math.tanh %209 : vector<8x32xf32>
    %211 = arith.mulf %206, %210 : vector<8x32xf32>
    %c1_106 = arith.constant 1 : index
    %c0_107 = arith.constant 0 : index
    %c0_108 = arith.constant 0 : index
    %212 = vector.load %arg10[%c1_106, %c0_107, %c0_108] : memref<2x8x32xf32, #tpu.memory_space<vmem>>, vector<1x8x32xf32>
    %213 = vector.shape_cast %212 : vector<1x8x32xf32> to vector<8x32xf32>
    %214 = vector.extract_strided_slice %184 {offsets = [0, 0], sizes = [8, 32], strides = [1, 1]} : vector<8x128xf32> to vector<8x32xf32>
    %215 = arith.negf %214 : vector<8x32xf32>
    %216 = math.exp %215 : vector<8x32xf32>
    %cst_109 = arith.constant 1.000000e+00 : f32
    %217 = vector.broadcast %cst_109 : f32 to vector<8x32xf32>
    %218 = arith.addf %217, %216 : vector<8x32xf32>
    %219 = arith.divf %217, %218 : vector<8x32xf32>
    %220 = vector.extract_strided_slice %184 {offsets = [0, 32], sizes = [8, 32], strides = [1, 1]} : vector<8x128xf32> to vector<8x32xf32>
    %221 = arith.negf %220 : vector<8x32xf32>
    %222 = math.exp %221 : vector<8x32xf32>
    %cst_110 = arith.constant 1.000000e+00 : f32
    %223 = vector.broadcast %cst_110 : f32 to vector<8x32xf32>
    %224 = arith.addf %223, %222 : vector<8x32xf32>
    %225 = arith.divf %223, %224 : vector<8x32xf32>
    %226 = vector.extract_strided_slice %184 {offsets = [0, 64], sizes = [8, 32], strides = [1, 1]} : vector<8x128xf32> to vector<8x32xf32>
    %227 = math.tanh %226 : vector<8x32xf32>
    %228 = vector.extract_strided_slice %184 {offsets = [0, 96], sizes = [8, 32], strides = [1, 1]} : vector<8x128xf32> to vector<8x32xf32>
    %229 = arith.negf %228 : vector<8x32xf32>
    %230 = math.exp %229 : vector<8x32xf32>
    %cst_111 = arith.constant 1.000000e+00 : f32
    %231 = vector.broadcast %cst_111 : f32 to vector<8x32xf32>
    %232 = arith.addf %231, %230 : vector<8x32xf32>
    %233 = arith.divf %231, %232 : vector<8x32xf32>
    %234 = arith.mulf %225, %213 : vector<8x32xf32>
    %235 = arith.mulf %219, %227 : vector<8x32xf32>
    %236 = arith.addf %234, %235 : vector<8x32xf32>
    %237 = math.tanh %236 : vector<8x32xf32>
    %238 = arith.mulf %233, %237 : vector<8x32xf32>
    %c0_112 = arith.constant 0 : index
    %c0_113 = arith.constant 0 : index
    %c0_114 = arith.constant 0 : index
    %239 = vector.load %arg9[%c0_112, %c0_113, %c0_114] : memref<2x8x32xf32, #tpu.memory_space<vmem>>, vector<1x8x32xf32>
    %240 = vector.shape_cast %239 : vector<1x8x32xf32> to vector<8x32xf32>
    %241 = vector.shape_cast %211 : vector<8x32xf32> to vector<1x8x32xf32>
    tpu.vector_store %arg9[%c0_112, %c0_113, %c0_114], %241 {strides = array<i32>} : memref<2x8x32xf32, #tpu.memory_space<vmem>>, vector<1x8x32xf32>,
    %c0_115 = arith.constant 0 : index
    %c0_116 = arith.constant 0 : index
    %c0_117 = arith.constant 0 : index
    %242 = vector.load %arg10[%c0_115, %c0_116, %c0_117] : memref<2x8x32xf32, #tpu.memory_space<vmem>>, vector<1x8x32xf32>
    %243 = vector.shape_cast %242 : vector<1x8x32xf32> to vector<8x32xf32>
    %244 = vector.shape_cast %209 : vector<8x32xf32> to vector<1x8x32xf32>
    tpu.vector_store %arg10[%c0_115, %c0_116, %c0_117], %244 {strides = array<i32>} : memref<2x8x32xf32, #tpu.memory_space<vmem>>, vector<1x8x32xf32>,
    %c1_118 = arith.constant 1 : index
    %c0_119 = arith.constant 0 : index
    %c0_120 = arith.constant 0 : index
    %245 = vector.load %arg9[%c1_118, %c0_119, %c0_120] : memref<2x8x32xf32, #tpu.memory_space<vmem>>, vector<1x8x32xf32>
    %246 = vector.shape_cast %245 : vector<1x8x32xf32> to vector<8x32xf32>
    %247 = vector.shape_cast %238 : vector<8x32xf32> to vector<1x8x32xf32>
    tpu.vector_store %arg9[%c1_118, %c0_119, %c0_120], %247 {strides = array<i32>} : memref<2x8x32xf32, #tpu.memory_space<vmem>>, vector<1x8x32xf32>,
    %c1_121 = arith.constant 1 : index
    %c0_122 = arith.constant 0 : index
    %c0_123 = arith.constant 0 : index
    %248 = vector.load %arg10[%c1_121, %c0_122, %c0_123] : memref<2x8x32xf32, #tpu.memory_space<vmem>>, vector<1x8x32xf32>
    %249 = vector.shape_cast %248 : vector<1x8x32xf32> to vector<8x32xf32>
    %250 = vector.shape_cast %236 : vector<8x32xf32> to vector<1x8x32xf32>
    tpu.vector_store %arg10[%c1_121, %c0_122, %c0_123], %250 {strides = array<i32>} : memref<2x8x32xf32, #tpu.memory_space<vmem>>, vector<1x8x32xf32>,
    %c2_124 = arith.constant 2 : index
    %c0_125 = arith.constant 0 : index
    %c0_126 = arith.constant 0 : index
    %251 = vector.load %arg5[%c2_124, %c0_125, %c0_126] : memref<8x8x32xf32, #tpu.memory_space<vmem>>, vector<1x8x32xf32>
    %252 = vector.shape_cast %251 : vector<1x8x32xf32> to vector<8x32xf32>
    %253 = vector.shape_cast %211 : vector<8x32xf32> to vector<1x8x32xf32>
    tpu.vector_store %arg5[%c2_124, %c0_125, %c0_126], %253 {strides = array<i32>} : memref<8x8x32xf32, #tpu.memory_space<vmem>>, vector<1x8x32xf32>,
    %c5_127 = arith.constant 5 : index
    %c0_128 = arith.constant 0 : index
    %c0_129 = arith.constant 0 : index
    %254 = vector.load %arg6[%c5_127, %c0_128, %c0_129] : memref<8x8x32xf32, #tpu.memory_space<vmem>>, vector<1x8x32xf32>
    %255 = vector.shape_cast %254 : vector<1x8x32xf32> to vector<8x32xf32>
    %256 = vector.shape_cast %238 : vector<8x32xf32> to vector<1x8x32xf32>
    tpu.vector_store %arg6[%c5_127, %c0_128, %c0_129], %256 {strides = array<i32>} : memref<8x8x32xf32, #tpu.memory_space<vmem>>, vector<1x8x32xf32>,
    %c3 = arith.constant 3 : index
    %c0_130 = arith.constant 0 : index
    %c0_131 = arith.constant 0 : index
    %257 = vector.load %arg1[%c3, %c0_130, %c0_131] : memref<8x8x128xf32, #tpu.memory_space<vmem>>, vector<1x8x128xf32>
    %258 = vector.shape_cast %257 : vector<1x8x128xf32> to vector<8x128xf32>
    %c0_132 = arith.constant 0 : index
    %c0_133 = arith.constant 0 : index
    %c0_134 = arith.constant 0 : index
    %259 = vector.load %arg9[%c0_132, %c0_133, %c0_134] : memref<2x8x32xf32, #tpu.memory_space<vmem>>, vector<1x8x32xf32>
    %260 = vector.shape_cast %259 : vector<1x8x32xf32> to vector<8x32xf32>
    %cst_135 = arith.constant dense<0.000000e+00> : vector<8x128xf32>
    %261 = tpu.matmul %260, %3, %cst_135 {dimension_numbers = #tpu.dot_dimension_numbers<[1], [0], [0], [1], [0, 0, 1, 1], [], []>} : vector<8x32xf32>, vector<32x128xf32>, vector<8x128xf32> -> vector<8x128xf32>
    %262 = arith.addf %258, %261 : vector<8x128xf32>
    %c4 = arith.constant 4 : index
    %c0_136 = arith.constant 0 : index
    %c0_137 = arith.constant 0 : index
    %263 = vector.load %arg2[%c4, %c0_136, %c0_137] : memref<8x8x128xf32, #tpu.memory_space<vmem>>, vector<1x8x128xf32>
    %264 = vector.shape_cast %263 : vector<1x8x128xf32> to vector<8x128xf32>
    %c1_138 = arith.constant 1 : index
    %c0_139 = arith.constant 0 : index
    %c0_140 = arith.constant 0 : index
    %265 = vector.load %arg9[%c1_138, %c0_139, %c0_140] : memref<2x8x32xf32, #tpu.memory_space<vmem>>, vector<1x8x32xf32>
    %266 = vector.shape_cast %265 : vector<1x8x32xf32> to vector<8x32xf32>
    %cst_141 = arith.constant dense<0.000000e+00> : vector<8x128xf32>
    %267 = tpu.matmul %266, %4, %cst_141 {dimension_numbers = #tpu.dot_dimension_numbers<[1], [0], [0], [1], [0, 0, 1, 1], [], []>} : vector<8x32xf32>, vector<32x128xf32>, vector<8x128xf32> -> vector<8x128xf32>
    %268 = arith.addf %264, %267 : vector<8x128xf32>
    %c0_142 = arith.constant 0 : index
    %c0_143 = arith.constant 0 : index
    %c0_144 = arith.constant 0 : index
    %269 = vector.load %arg10[%c0_142, %c0_143, %c0_144] : memref<2x8x32xf32, #tpu.memory_space<vmem>>, vector<1x8x32xf32>
    %270 = vector.shape_cast %269 : vector<1x8x32xf32> to vector<8x32xf32>
    %271 = vector.extract_strided_slice %262 {offsets = [0, 0], sizes = [8, 32], strides = [1, 1]} : vector<8x128xf32> to vector<8x32xf32>
    %272 = arith.negf %271 : vector<8x32xf32>
    %273 = math.exp %272 : vector<8x32xf32>
    %cst_145 = arith.constant 1.000000e+00 : f32
    %274 = vector.broadcast %cst_145 : f32 to vector<8x32xf32>
    %275 = arith.addf %274, %273 : vector<8x32xf32>
    %276 = arith.divf %274, %275 : vector<8x32xf32>
    %277 = vector.extract_strided_slice %262 {offsets = [0, 32], sizes = [8, 32], strides = [1, 1]} : vector<8x128xf32> to vector<8x32xf32>
    %278 = arith.negf %277 : vector<8x32xf32>
    %279 = math.exp %278 : vector<8x32xf32>
    %cst_146 = arith.constant 1.000000e+00 : f32
    %280 = vector.broadcast %cst_146 : f32 to vector<8x32xf32>
    %281 = arith.addf %280, %279 : vector<8x32xf32>
    %282 = arith.divf %280, %281 : vector<8x32xf32>
    %283 = vector.extract_strided_slice %262 {offsets = [0, 64], sizes = [8, 32], strides = [1, 1]} : vector<8x128xf32> to vector<8x32xf32>
    %284 = math.tanh %283 : vector<8x32xf32>
    %285 = vector.extract_strided_slice %262 {offsets = [0, 96], sizes = [8, 32], strides = [1, 1]} : vector<8x128xf32> to vector<8x32xf32>
    %286 = arith.negf %285 : vector<8x32xf32>
    %287 = math.exp %286 : vector<8x32xf32>
    %cst_147 = arith.constant 1.000000e+00 : f32
    %288 = vector.broadcast %cst_147 : f32 to vector<8x32xf32>
    %289 = arith.addf %288, %287 : vector<8x32xf32>
    %290 = arith.divf %288, %289 : vector<8x32xf32>
    %291 = arith.mulf %282, %270 : vector<8x32xf32>
    %292 = arith.mulf %276, %284 : vector<8x32xf32>
    %293 = arith.addf %291, %292 : vector<8x32xf32>
    %294 = math.tanh %293 : vector<8x32xf32>
    %295 = arith.mulf %290, %294 : vector<8x32xf32>
    %c1_148 = arith.constant 1 : index
    %c0_149 = arith.constant 0 : index
    %c0_150 = arith.constant 0 : index
    %296 = vector.load %arg10[%c1_148, %c0_149, %c0_150] : memref<2x8x32xf32, #tpu.memory_space<vmem>>, vector<1x8x32xf32>
    %297 = vector.shape_cast %296 : vector<1x8x32xf32> to vector<8x32xf32>
    %298 = vector.extract_strided_slice %268 {offsets = [0, 0], sizes = [8, 32], strides = [1, 1]} : vector<8x128xf32> to vector<8x32xf32>
    %299 = arith.negf %298 : vector<8x32xf32>
    %300 = math.exp %299 : vector<8x32xf32>
    %cst_151 = arith.constant 1.000000e+00 : f32
    %301 = vector.broadcast %cst_151 : f32 to vector<8x32xf32>
    %302 = arith.addf %301, %300 : vector<8x32xf32>
    %303 = arith.divf %301, %302 : vector<8x32xf32>
    %304 = vector.extract_strided_slice %268 {offsets = [0, 32], sizes = [8, 32], strides = [1, 1]} : vector<8x128xf32> to vector<8x32xf32>
    %305 = arith.negf %304 : vector<8x32xf32>
    %306 = math.exp %305 : vector<8x32xf32>
    %cst_152 = arith.constant 1.000000e+00 : f32
    %307 = vector.broadcast %cst_152 : f32 to vector<8x32xf32>
    %308 = arith.addf %307, %306 : vector<8x32xf32>
    %309 = arith.divf %307, %308 : vector<8x32xf32>
    %310 = vector.extract_strided_slice %268 {offsets = [0, 64], sizes = [8, 32], strides = [1, 1]} : vector<8x128xf32> to vector<8x32xf32>
    %311 = math.tanh %310 : vector<8x32xf32>
    %312 = vector.extract_strided_slice %268 {offsets = [0, 96], sizes = [8, 32], strides = [1, 1]} : vector<8x128xf32> to vector<8x32xf32>
    %313 = arith.negf %312 : vector<8x32xf32>
    %314 = math.exp %313 : vector<8x32xf32>
    %cst_153 = arith.constant 1.000000e+00 : f32
    %315 = vector.broadcast %cst_153 : f32 to vector<8x32xf32>
    %316 = arith.addf %315, %314 : vector<8x32xf32>
    %317 = arith.divf %315, %316 : vector<8x32xf32>
    %318 = arith.mulf %309, %297 : vector<8x32xf32>
    %319 = arith.mulf %303, %311 : vector<8x32xf32>
    %320 = arith.addf %318, %319 : vector<8x32xf32>
    %321 = math.tanh %320 : vector<8x32xf32>
    %322 = arith.mulf %317, %321 : vector<8x32xf32>
    %c0_154 = arith.constant 0 : index
    %c0_155 = arith.constant 0 : index
    %c0_156 = arith.constant 0 : index
    %323 = vector.load %arg9[%c0_154, %c0_155, %c0_156] : memref<2x8x32xf32, #tpu.memory_space<vmem>>, vector<1x8x32xf32>
    %324 = vector.shape_cast %323 : vector<1x8x32xf32> to vector<8x32xf32>
    %325 = vector.shape_cast %295 : vector<8x32xf32> to vector<1x8x32xf32>
    tpu.vector_store %arg9[%c0_154, %c0_155, %c0_156], %325 {strides = array<i32>} : memref<2x8x32xf32, #tpu.memory_space<vmem>>, vector<1x8x32xf32>,
    %c0_157 = arith.constant 0 : index
    %c0_158 = arith.constant 0 : index
    %c0_159 = arith.constant 0 : index
    %326 = vector.load %arg10[%c0_157, %c0_158, %c0_159] : memref<2x8x32xf32, #tpu.memory_space<vmem>>, vector<1x8x32xf32>
    %327 = vector.shape_cast %326 : vector<1x8x32xf32> to vector<8x32xf32>
    %328 = vector.shape_cast %293 : vector<8x32xf32> to vector<1x8x32xf32>
    tpu.vector_store %arg10[%c0_157, %c0_158, %c0_159], %328 {strides = array<i32>} : memref<2x8x32xf32, #tpu.memory_space<vmem>>, vector<1x8x32xf32>,
    %c1_160 = arith.constant 1 : index
    %c0_161 = arith.constant 0 : index
    %c0_162 = arith.constant 0 : index
    %329 = vector.load %arg9[%c1_160, %c0_161, %c0_162] : memref<2x8x32xf32, #tpu.memory_space<vmem>>, vector<1x8x32xf32>
    %330 = vector.shape_cast %329 : vector<1x8x32xf32> to vector<8x32xf32>
    %331 = vector.shape_cast %322 : vector<8x32xf32> to vector<1x8x32xf32>
    tpu.vector_store %arg9[%c1_160, %c0_161, %c0_162], %331 {strides = array<i32>} : memref<2x8x32xf32, #tpu.memory_space<vmem>>, vector<1x8x32xf32>,
    %c1_163 = arith.constant 1 : index
    %c0_164 = arith.constant 0 : index
    %c0_165 = arith.constant 0 : index
    %332 = vector.load %arg10[%c1_163, %c0_164, %c0_165] : memref<2x8x32xf32, #tpu.memory_space<vmem>>, vector<1x8x32xf32>
    %333 = vector.shape_cast %332 : vector<1x8x32xf32> to vector<8x32xf32>
    %334 = vector.shape_cast %320 : vector<8x32xf32> to vector<1x8x32xf32>
    tpu.vector_store %arg10[%c1_163, %c0_164, %c0_165], %334 {strides = array<i32>} : memref<2x8x32xf32, #tpu.memory_space<vmem>>, vector<1x8x32xf32>,
    %c3_166 = arith.constant 3 : index
    %c0_167 = arith.constant 0 : index
    %c0_168 = arith.constant 0 : index
    %335 = vector.load %arg5[%c3_166, %c0_167, %c0_168] : memref<8x8x32xf32, #tpu.memory_space<vmem>>, vector<1x8x32xf32>
    %336 = vector.shape_cast %335 : vector<1x8x32xf32> to vector<8x32xf32>
    %337 = vector.shape_cast %295 : vector<8x32xf32> to vector<1x8x32xf32>
    tpu.vector_store %arg5[%c3_166, %c0_167, %c0_168], %337 {strides = array<i32>} : memref<8x8x32xf32, #tpu.memory_space<vmem>>, vector<1x8x32xf32>,
    %c4_169 = arith.constant 4 : index
    %c0_170 = arith.constant 0 : index
    %c0_171 = arith.constant 0 : index
    %338 = vector.load %arg6[%c4_169, %c0_170, %c0_171] : memref<8x8x32xf32, #tpu.memory_space<vmem>>, vector<1x8x32xf32>
    %339 = vector.shape_cast %338 : vector<1x8x32xf32> to vector<8x32xf32>
    %340 = vector.shape_cast %322 : vector<8x32xf32> to vector<1x8x32xf32>
    tpu.vector_store %arg6[%c4_169, %c0_170, %c0_171], %340 {strides = array<i32>} : memref<8x8x32xf32, #tpu.memory_space<vmem>>, vector<1x8x32xf32>,
    %c4_172 = arith.constant 4 : index
    %c0_173 = arith.constant 0 : index
    %c0_174 = arith.constant 0 : index
    %341 = vector.load %arg1[%c4_172, %c0_173, %c0_174] : memref<8x8x128xf32, #tpu.memory_space<vmem>>, vector<1x8x128xf32>
    %342 = vector.shape_cast %341 : vector<1x8x128xf32> to vector<8x128xf32>
    %c0_175 = arith.constant 0 : index
    %c0_176 = arith.constant 0 : index
    %c0_177 = arith.constant 0 : index
    %343 = vector.load %arg9[%c0_175, %c0_176, %c0_177] : memref<2x8x32xf32, #tpu.memory_space<vmem>>, vector<1x8x32xf32>
    %344 = vector.shape_cast %343 : vector<1x8x32xf32> to vector<8x32xf32>
    %cst_178 = arith.constant dense<0.000000e+00> : vector<8x128xf32>
    %345 = tpu.matmul %344, %3, %cst_178 {dimension_numbers = #tpu.dot_dimension_numbers<[1], [0], [0], [1], [0, 0, 1, 1], [], []>} : vector<8x32xf32>, vector<32x128xf32>, vector<8x128xf32> -> vector<8x128xf32>
    %346 = arith.addf %342, %345 : vector<8x128xf32>
    %c3_179 = arith.constant 3 : index
    %c0_180 = arith.constant 0 : index
    %c0_181 = arith.constant 0 : index
    %347 = vector.load %arg2[%c3_179, %c0_180, %c0_181] : memref<8x8x128xf32, #tpu.memory_space<vmem>>, vector<1x8x128xf32>
    %348 = vector.shape_cast %347 : vector<1x8x128xf32> to vector<8x128xf32>
    %c1_182 = arith.constant 1 : index
    %c0_183 = arith.constant 0 : index
    %c0_184 = arith.constant 0 : index
    %349 = vector.load %arg9[%c1_182, %c0_183, %c0_184] : memref<2x8x32xf32, #tpu.memory_space<vmem>>, vector<1x8x32xf32>
    %350 = vector.shape_cast %349 : vector<1x8x32xf32> to vector<8x32xf32>
    %cst_185 = arith.constant dense<0.000000e+00> : vector<8x128xf32>
    %351 = tpu.matmul %350, %4, %cst_185 {dimension_numbers = #tpu.dot_dimension_numbers<[1], [0], [0], [1], [0, 0, 1, 1], [], []>} : vector<8x32xf32>, vector<32x128xf32>, vector<8x128xf32> -> vector<8x128xf32>
    %352 = arith.addf %348, %351 : vector<8x128xf32>
    %c0_186 = arith.constant 0 : index
    %c0_187 = arith.constant 0 : index
    %c0_188 = arith.constant 0 : index
    %353 = vector.load %arg10[%c0_186, %c0_187, %c0_188] : memref<2x8x32xf32, #tpu.memory_space<vmem>>, vector<1x8x32xf32>
    %354 = vector.shape_cast %353 : vector<1x8x32xf32> to vector<8x32xf32>
    %355 = vector.extract_strided_slice %346 {offsets = [0, 0], sizes = [8, 32], strides = [1, 1]} : vector<8x128xf32> to vector<8x32xf32>
    %356 = arith.negf %355 : vector<8x32xf32>
    %357 = math.exp %356 : vector<8x32xf32>
    %cst_189 = arith.constant 1.000000e+00 : f32
    %358 = vector.broadcast %cst_189 : f32 to vector<8x32xf32>
    %359 = arith.addf %358, %357 : vector<8x32xf32>
    %360 = arith.divf %358, %359 : vector<8x32xf32>
    %361 = vector.extract_strided_slice %346 {offsets = [0, 32], sizes = [8, 32], strides = [1, 1]} : vector<8x128xf32> to vector<8x32xf32>
    %362 = arith.negf %361 : vector<8x32xf32>
    %363 = math.exp %362 : vector<8x32xf32>
    %cst_190 = arith.constant 1.000000e+00 : f32
    %364 = vector.broadcast %cst_190 : f32 to vector<8x32xf32>
    %365 = arith.addf %364, %363 : vector<8x32xf32>
    %366 = arith.divf %364, %365 : vector<8x32xf32>
    %367 = vector.extract_strided_slice %346 {offsets = [0, 64], sizes = [8, 32], strides = [1, 1]} : vector<8x128xf32> to vector<8x32xf32>
    %368 = math.tanh %367 : vector<8x32xf32>
    %369 = vector.extract_strided_slice %346 {offsets = [0, 96], sizes = [8, 32], strides = [1, 1]} : vector<8x128xf32> to vector<8x32xf32>
    %370 = arith.negf %369 : vector<8x32xf32>
    %371 = math.exp %370 : vector<8x32xf32>
    %cst_191 = arith.constant 1.000000e+00 : f32
    %372 = vector.broadcast %cst_191 : f32 to vector<8x32xf32>
    %373 = arith.addf %372, %371 : vector<8x32xf32>
    %374 = arith.divf %372, %373 : vector<8x32xf32>
    %375 = arith.mulf %366, %354 : vector<8x32xf32>
    %376 = arith.mulf %360, %368 : vector<8x32xf32>
    %377 = arith.addf %375, %376 : vector<8x32xf32>
    %378 = math.tanh %377 : vector<8x32xf32>
    %379 = arith.mulf %374, %378 : vector<8x32xf32>
    %c1_192 = arith.constant 1 : index
    %c0_193 = arith.constant 0 : index
    %c0_194 = arith.constant 0 : index
    %380 = vector.load %arg10[%c1_192, %c0_193, %c0_194] : memref<2x8x32xf32, #tpu.memory_space<vmem>>, vector<1x8x32xf32>
    %381 = vector.shape_cast %380 : vector<1x8x32xf32> to vector<8x32xf32>
    %382 = vector.extract_strided_slice %352 {offsets = [0, 0], sizes = [8, 32], strides = [1, 1]} : vector<8x128xf32> to vector<8x32xf32>
    %383 = arith.negf %382 : vector<8x32xf32>
    %384 = math.exp %383 : vector<8x32xf32>
    %cst_195 = arith.constant 1.000000e+00 : f32
    %385 = vector.broadcast %cst_195 : f32 to vector<8x32xf32>
    %386 = arith.addf %385, %384 : vector<8x32xf32>
    %387 = arith.divf %385, %386 : vector<8x32xf32>
    %388 = vector.extract_strided_slice %352 {offsets = [0, 32], sizes = [8, 32], strides = [1, 1]} : vector<8x128xf32> to vector<8x32xf32>
    %389 = arith.negf %388 : vector<8x32xf32>
    %390 = math.exp %389 : vector<8x32xf32>
    %cst_196 = arith.constant 1.000000e+00 : f32
    %391 = vector.broadcast %cst_196 : f32 to vector<8x32xf32>
    %392 = arith.addf %391, %390 : vector<8x32xf32>
    %393 = arith.divf %391, %392 : vector<8x32xf32>
    %394 = vector.extract_strided_slice %352 {offsets = [0, 64], sizes = [8, 32], strides = [1, 1]} : vector<8x128xf32> to vector<8x32xf32>
    %395 = math.tanh %394 : vector<8x32xf32>
    %396 = vector.extract_strided_slice %352 {offsets = [0, 96], sizes = [8, 32], strides = [1, 1]} : vector<8x128xf32> to vector<8x32xf32>
    %397 = arith.negf %396 : vector<8x32xf32>
    %398 = math.exp %397 : vector<8x32xf32>
    %cst_197 = arith.constant 1.000000e+00 : f32
    %399 = vector.broadcast %cst_197 : f32 to vector<8x32xf32>
    %400 = arith.addf %399, %398 : vector<8x32xf32>
    %401 = arith.divf %399, %400 : vector<8x32xf32>
    %402 = arith.mulf %393, %381 : vector<8x32xf32>
    %403 = arith.mulf %387, %395 : vector<8x32xf32>
    %404 = arith.addf %402, %403 : vector<8x32xf32>
    %405 = math.tanh %404 : vector<8x32xf32>
    %406 = arith.mulf %401, %405 : vector<8x32xf32>
    %c0_198 = arith.constant 0 : index
    %c0_199 = arith.constant 0 : index
    %c0_200 = arith.constant 0 : index
    %407 = vector.load %arg9[%c0_198, %c0_199, %c0_200] : memref<2x8x32xf32, #tpu.memory_space<vmem>>, vector<1x8x32xf32>
    %408 = vector.shape_cast %407 : vector<1x8x32xf32> to vector<8x32xf32>
    %409 = vector.shape_cast %379 : vector<8x32xf32> to vector<1x8x32xf32>
    tpu.vector_store %arg9[%c0_198, %c0_199, %c0_200], %409 {strides = array<i32>} : memref<2x8x32xf32, #tpu.memory_space<vmem>>, vector<1x8x32xf32>,
    %c0_201 = arith.constant 0 : index
    %c0_202 = arith.constant 0 : index
    %c0_203 = arith.constant 0 : index
    %410 = vector.load %arg10[%c0_201, %c0_202, %c0_203] : memref<2x8x32xf32, #tpu.memory_space<vmem>>, vector<1x8x32xf32>
    %411 = vector.shape_cast %410 : vector<1x8x32xf32> to vector<8x32xf32>
    %412 = vector.shape_cast %377 : vector<8x32xf32> to vector<1x8x32xf32>
    tpu.vector_store %arg10[%c0_201, %c0_202, %c0_203], %412 {strides = array<i32>} : memref<2x8x32xf32, #tpu.memory_space<vmem>>, vector<1x8x32xf32>,
    %c1_204 = arith.constant 1 : index
    %c0_205 = arith.constant 0 : index
    %c0_206 = arith.constant 0 : index
    %413 = vector.load %arg9[%c1_204, %c0_205, %c0_206] : memref<2x8x32xf32, #tpu.memory_space<vmem>>, vector<1x8x32xf32>
    %414 = vector.shape_cast %413 : vector<1x8x32xf32> to vector<8x32xf32>
    %415 = vector.shape_cast %406 : vector<8x32xf32> to vector<1x8x32xf32>
    tpu.vector_store %arg9[%c1_204, %c0_205, %c0_206], %415 {strides = array<i32>} : memref<2x8x32xf32, #tpu.memory_space<vmem>>, vector<1x8x32xf32>,
    %c1_207 = arith.constant 1 : index
    %c0_208 = arith.constant 0 : index
    %c0_209 = arith.constant 0 : index
    %416 = vector.load %arg10[%c1_207, %c0_208, %c0_209] : memref<2x8x32xf32, #tpu.memory_space<vmem>>, vector<1x8x32xf32>
    %417 = vector.shape_cast %416 : vector<1x8x32xf32> to vector<8x32xf32>
    %418 = vector.shape_cast %404 : vector<8x32xf32> to vector<1x8x32xf32>
    tpu.vector_store %arg10[%c1_207, %c0_208, %c0_209], %418 {strides = array<i32>} : memref<2x8x32xf32, #tpu.memory_space<vmem>>, vector<1x8x32xf32>,
    %c4_210 = arith.constant 4 : index
    %c0_211 = arith.constant 0 : index
    %c0_212 = arith.constant 0 : index
    %419 = vector.load %arg5[%c4_210, %c0_211, %c0_212] : memref<8x8x32xf32, #tpu.memory_space<vmem>>, vector<1x8x32xf32>
    %420 = vector.shape_cast %419 : vector<1x8x32xf32> to vector<8x32xf32>
    %421 = vector.shape_cast %379 : vector<8x32xf32> to vector<1x8x32xf32>
    tpu.vector_store %arg5[%c4_210, %c0_211, %c0_212], %421 {strides = array<i32>} : memref<8x8x32xf32, #tpu.memory_space<vmem>>, vector<1x8x32xf32>,
    %c3_213 = arith.constant 3 : index
    %c0_214 = arith.constant 0 : index
    %c0_215 = arith.constant 0 : index
    %422 = vector.load %arg6[%c3_213, %c0_214, %c0_215] : memref<8x8x32xf32, #tpu.memory_space<vmem>>, vector<1x8x32xf32>
    %423 = vector.shape_cast %422 : vector<1x8x32xf32> to vector<8x32xf32>
    %424 = vector.shape_cast %406 : vector<8x32xf32> to vector<1x8x32xf32>
    tpu.vector_store %arg6[%c3_213, %c0_214, %c0_215], %424 {strides = array<i32>} : memref<8x8x32xf32, #tpu.memory_space<vmem>>, vector<1x8x32xf32>,
    %c5_216 = arith.constant 5 : index
    %c0_217 = arith.constant 0 : index
    %c0_218 = arith.constant 0 : index
    %425 = vector.load %arg1[%c5_216, %c0_217, %c0_218] : memref<8x8x128xf32, #tpu.memory_space<vmem>>, vector<1x8x128xf32>
    %426 = vector.shape_cast %425 : vector<1x8x128xf32> to vector<8x128xf32>
    %c0_219 = arith.constant 0 : index
    %c0_220 = arith.constant 0 : index
    %c0_221 = arith.constant 0 : index
    %427 = vector.load %arg9[%c0_219, %c0_220, %c0_221] : memref<2x8x32xf32, #tpu.memory_space<vmem>>, vector<1x8x32xf32>
    %428 = vector.shape_cast %427 : vector<1x8x32xf32> to vector<8x32xf32>
    %cst_222 = arith.constant dense<0.000000e+00> : vector<8x128xf32>
    %429 = tpu.matmul %428, %3, %cst_222 {dimension_numbers = #tpu.dot_dimension_numbers<[1], [0], [0], [1], [0, 0, 1, 1], [], []>} : vector<8x32xf32>, vector<32x128xf32>, vector<8x128xf32> -> vector<8x128xf32>
    %430 = arith.addf %426, %429 : vector<8x128xf32>
    %c2_223 = arith.constant 2 : index
    %c0_224 = arith.constant 0 : index
    %c0_225 = arith.constant 0 : index
    %431 = vector.load %arg2[%c2_223, %c0_224, %c0_225] : memref<8x8x128xf32, #tpu.memory_space<vmem>>, vector<1x8x128xf32>
    %432 = vector.shape_cast %431 : vector<1x8x128xf32> to vector<8x128xf32>
    %c1_226 = arith.constant 1 : index
    %c0_227 = arith.constant 0 : index
    %c0_228 = arith.constant 0 : index
    %433 = vector.load %arg9[%c1_226, %c0_227, %c0_228] : memref<2x8x32xf32, #tpu.memory_space<vmem>>, vector<1x8x32xf32>
    %434 = vector.shape_cast %433 : vector<1x8x32xf32> to vector<8x32xf32>
    %cst_229 = arith.constant dense<0.000000e+00> : vector<8x128xf32>
    %435 = tpu.matmul %434, %4, %cst_229 {dimension_numbers = #tpu.dot_dimension_numbers<[1], [0], [0], [1], [0, 0, 1, 1], [], []>} : vector<8x32xf32>, vector<32x128xf32>, vector<8x128xf32> -> vector<8x128xf32>
    %436 = arith.addf %432, %435 : vector<8x128xf32>
    %c0_230 = arith.constant 0 : index
    %c0_231 = arith.constant 0 : index
    %c0_232 = arith.constant 0 : index
    %437 = vector.load %arg10[%c0_230, %c0_231, %c0_232] : memref<2x8x32xf32, #tpu.memory_space<vmem>>, vector<1x8x32xf32>
    %438 = vector.shape_cast %437 : vector<1x8x32xf32> to vector<8x32xf32>
    %439 = vector.extract_strided_slice %430 {offsets = [0, 0], sizes = [8, 32], strides = [1, 1]} : vector<8x128xf32> to vector<8x32xf32>
    %440 = arith.negf %439 : vector<8x32xf32>
    %441 = math.exp %440 : vector<8x32xf32>
    %cst_233 = arith.constant 1.000000e+00 : f32
    %442 = vector.broadcast %cst_233 : f32 to vector<8x32xf32>
    %443 = arith.addf %442, %441 : vector<8x32xf32>
    %444 = arith.divf %442, %443 : vector<8x32xf32>
    %445 = vector.extract_strided_slice %430 {offsets = [0, 32], sizes = [8, 32], strides = [1, 1]} : vector<8x128xf32> to vector<8x32xf32>
    %446 = arith.negf %445 : vector<8x32xf32>
    %447 = math.exp %446 : vector<8x32xf32>
    %cst_234 = arith.constant 1.000000e+00 : f32
    %448 = vector.broadcast %cst_234 : f32 to vector<8x32xf32>
    %449 = arith.addf %448, %447 : vector<8x32xf32>
    %450 = arith.divf %448, %449 : vector<8x32xf32>
    %451 = vector.extract_strided_slice %430 {offsets = [0, 64], sizes = [8, 32], strides = [1, 1]} : vector<8x128xf32> to vector<8x32xf32>
    %452 = math.tanh %451 : vector<8x32xf32>
    %453 = vector.extract_strided_slice %430 {offsets = [0, 96], sizes = [8, 32], strides = [1, 1]} : vector<8x128xf32> to vector<8x32xf32>
    %454 = arith.negf %453 : vector<8x32xf32>
    %455 = math.exp %454 : vector<8x32xf32>
    %cst_235 = arith.constant 1.000000e+00 : f32
    %456 = vector.broadcast %cst_235 : f32 to vector<8x32xf32>
    %457 = arith.addf %456, %455 : vector<8x32xf32>
    %458 = arith.divf %456, %457 : vector<8x32xf32>
    %459 = arith.mulf %450, %438 : vector<8x32xf32>
    %460 = arith.mulf %444, %452 : vector<8x32xf32>
    %461 = arith.addf %459, %460 : vector<8x32xf32>
    %462 = math.tanh %461 : vector<8x32xf32>
    %463 = arith.mulf %458, %462 : vector<8x32xf32>
    %c1_236 = arith.constant 1 : index
    %c0_237 = arith.constant 0 : index
    %c0_238 = arith.constant 0 : index
    %464 = vector.load %arg10[%c1_236, %c0_237, %c0_238] : memref<2x8x32xf32, #tpu.memory_space<vmem>>, vector<1x8x32xf32>
    %465 = vector.shape_cast %464 : vector<1x8x32xf32> to vector<8x32xf32>
    %466 = vector.extract_strided_slice %436 {offsets = [0, 0], sizes = [8, 32], strides = [1, 1]} : vector<8x128xf32> to vector<8x32xf32>
    %467 = arith.negf %466 : vector<8x32xf32>
    %468 = math.exp %467 : vector<8x32xf32>
    %cst_239 = arith.constant 1.000000e+00 : f32
    %469 = vector.broadcast %cst_239 : f32 to vector<8x32xf32>
    %470 = arith.addf %469, %468 : vector<8x32xf32>
    %471 = arith.divf %469, %470 : vector<8x32xf32>
    %472 = vector.extract_strided_slice %436 {offsets = [0, 32], sizes = [8, 32], strides = [1, 1]} : vector<8x128xf32> to vector<8x32xf32>
    %473 = arith.negf %472 : vector<8x32xf32>
    %474 = math.exp %473 : vector<8x32xf32>
    %cst_240 = arith.constant 1.000000e+00 : f32
    %475 = vector.broadcast %cst_240 : f32 to vector<8x32xf32>
    %476 = arith.addf %475, %474 : vector<8x32xf32>
    %477 = arith.divf %475, %476 : vector<8x32xf32>
    %478 = vector.extract_strided_slice %436 {offsets = [0, 64], sizes = [8, 32], strides = [1, 1]} : vector<8x128xf32> to vector<8x32xf32>
    %479 = math.tanh %478 : vector<8x32xf32>
    %480 = vector.extract_strided_slice %436 {offsets = [0, 96], sizes = [8, 32], strides = [1, 1]} : vector<8x128xf32> to vector<8x32xf32>
    %481 = arith.negf %480 : vector<8x32xf32>
    %482 = math.exp %481 : vector<8x32xf32>
    %cst_241 = arith.constant 1.000000e+00 : f32
    %483 = vector.broadcast %cst_241 : f32 to vector<8x32xf32>
    %484 = arith.addf %483, %482 : vector<8x32xf32>
    %485 = arith.divf %483, %484 : vector<8x32xf32>
    %486 = arith.mulf %477, %465 : vector<8x32xf32>
    %487 = arith.mulf %471, %479 : vector<8x32xf32>
    %488 = arith.addf %486, %487 : vector<8x32xf32>
    %489 = math.tanh %488 : vector<8x32xf32>
    %490 = arith.mulf %485, %489 : vector<8x32xf32>
    %c0_242 = arith.constant 0 : index
    %c0_243 = arith.constant 0 : index
    %c0_244 = arith.constant 0 : index
    %491 = vector.load %arg9[%c0_242, %c0_243, %c0_244] : memref<2x8x32xf32, #tpu.memory_space<vmem>>, vector<1x8x32xf32>
    %492 = vector.shape_cast %491 : vector<1x8x32xf32> to vector<8x32xf32>
    %493 = vector.shape_cast %463 : vector<8x32xf32> to vector<1x8x32xf32>
    tpu.vector_store %arg9[%c0_242, %c0_243, %c0_244], %493 {strides = array<i32>} : memref<2x8x32xf32, #tpu.memory_space<vmem>>, vector<1x8x32xf32>,
    %c0_245 = arith.constant 0 : index
    %c0_246 = arith.constant 0 : index
    %c0_247 = arith.constant 0 : index
    %494 = vector.load %arg10[%c0_245, %c0_246, %c0_247] : memref<2x8x32xf32, #tpu.memory_space<vmem>>, vector<1x8x32xf32>
    %495 = vector.shape_cast %494 : vector<1x8x32xf32> to vector<8x32xf32>
    %496 = vector.shape_cast %461 : vector<8x32xf32> to vector<1x8x32xf32>
    tpu.vector_store %arg10[%c0_245, %c0_246, %c0_247], %496 {strides = array<i32>} : memref<2x8x32xf32, #tpu.memory_space<vmem>>, vector<1x8x32xf32>,
    %c1_248 = arith.constant 1 : index
    %c0_249 = arith.constant 0 : index
    %c0_250 = arith.constant 0 : index
    %497 = vector.load %arg9[%c1_248, %c0_249, %c0_250] : memref<2x8x32xf32, #tpu.memory_space<vmem>>, vector<1x8x32xf32>
    %498 = vector.shape_cast %497 : vector<1x8x32xf32> to vector<8x32xf32>
    %499 = vector.shape_cast %490 : vector<8x32xf32> to vector<1x8x32xf32>
    tpu.vector_store %arg9[%c1_248, %c0_249, %c0_250], %499 {strides = array<i32>} : memref<2x8x32xf32, #tpu.memory_space<vmem>>, vector<1x8x32xf32>,
    %c1_251 = arith.constant 1 : index
    %c0_252 = arith.constant 0 : index
    %c0_253 = arith.constant 0 : index
    %500 = vector.load %arg10[%c1_251, %c0_252, %c0_253] : memref<2x8x32xf32, #tpu.memory_space<vmem>>, vector<1x8x32xf32>
    %501 = vector.shape_cast %500 : vector<1x8x32xf32> to vector<8x32xf32>
    %502 = vector.shape_cast %488 : vector<8x32xf32> to vector<1x8x32xf32>
    tpu.vector_store %arg10[%c1_251, %c0_252, %c0_253], %502 {strides = array<i32>} : memref<2x8x32xf32, #tpu.memory_space<vmem>>, vector<1x8x32xf32>,
    %c5_254 = arith.constant 5 : index
    %c0_255 = arith.constant 0 : index
    %c0_256 = arith.constant 0 : index
    %503 = vector.load %arg5[%c5_254, %c0_255, %c0_256] : memref<8x8x32xf32, #tpu.memory_space<vmem>>, vector<1x8x32xf32>
    %504 = vector.shape_cast %503 : vector<1x8x32xf32> to vector<8x32xf32>
    %505 = vector.shape_cast %463 : vector<8x32xf32> to vector<1x8x32xf32>
    tpu.vector_store %arg5[%c5_254, %c0_255, %c0_256], %505 {strides = array<i32>} : memref<8x8x32xf32, #tpu.memory_space<vmem>>, vector<1x8x32xf32>,
    %c2_257 = arith.constant 2 : index
    %c0_258 = arith.constant 0 : index
    %c0_259 = arith.constant 0 : index
    %506 = vector.load %arg6[%c2_257, %c0_258, %c0_259] : memref<8x8x32xf32, #tpu.memory_space<vmem>>, vector<1x8x32xf32>
    %507 = vector.shape_cast %506 : vector<1x8x32xf32> to vector<8x32xf32>
    %508 = vector.shape_cast %490 : vector<8x32xf32> to vector<1x8x32xf32>
    tpu.vector_store %arg6[%c2_257, %c0_258, %c0_259], %508 {strides = array<i32>} : memref<8x8x32xf32, #tpu.memory_space<vmem>>, vector<1x8x32xf32>,
    %c6_260 = arith.constant 6 : index
    %c0_261 = arith.constant 0 : index
    %c0_262 = arith.constant 0 : index
    %509 = vector.load %arg1[%c6_260, %c0_261, %c0_262] : memref<8x8x128xf32, #tpu.memory_space<vmem>>, vector<1x8x128xf32>
    %510 = vector.shape_cast %509 : vector<1x8x128xf32> to vector<8x128xf32>
    %c0_263 = arith.constant 0 : index
    %c0_264 = arith.constant 0 : index
    %c0_265 = arith.constant 0 : index
    %511 = vector.load %arg9[%c0_263, %c0_264, %c0_265] : memref<2x8x32xf32, #tpu.memory_space<vmem>>, vector<1x8x32xf32>
    %512 = vector.shape_cast %511 : vector<1x8x32xf32> to vector<8x32xf32>
    %cst_266 = arith.constant dense<0.000000e+00> : vector<8x128xf32>
    %513 = tpu.matmul %512, %3, %cst_266 {dimension_numbers = #tpu.dot_dimension_numbers<[1], [0], [0], [1], [0, 0, 1, 1], [], []>} : vector<8x32xf32>, vector<32x128xf32>, vector<8x128xf32> -> vector<8x128xf32>
    %514 = arith.addf %510, %513 : vector<8x128xf32>
    %c1_267 = arith.constant 1 : index
    %c0_268 = arith.constant 0 : index
    %c0_269 = arith.constant 0 : index
    %515 = vector.load %arg2[%c1_267, %c0_268, %c0_269] : memref<8x8x128xf32, #tpu.memory_space<vmem>>, vector<1x8x128xf32>
    %516 = vector.shape_cast %515 : vector<1x8x128xf32> to vector<8x128xf32>
    %c1_270 = arith.constant 1 : index
    %c0_271 = arith.constant 0 : index
    %c0_272 = arith.constant 0 : index
    %517 = vector.load %arg9[%c1_270, %c0_271, %c0_272] : memref<2x8x32xf32, #tpu.memory_space<vmem>>, vector<1x8x32xf32>
    %518 = vector.shape_cast %517 : vector<1x8x32xf32> to vector<8x32xf32>
    %cst_273 = arith.constant dense<0.000000e+00> : vector<8x128xf32>
    %519 = tpu.matmul %518, %4, %cst_273 {dimension_numbers = #tpu.dot_dimension_numbers<[1], [0], [0], [1], [0, 0, 1, 1], [], []>} : vector<8x32xf32>, vector<32x128xf32>, vector<8x128xf32> -> vector<8x128xf32>
    %520 = arith.addf %516, %519 : vector<8x128xf32>
    %c0_274 = arith.constant 0 : index
    %c0_275 = arith.constant 0 : index
    %c0_276 = arith.constant 0 : index
    %521 = vector.load %arg10[%c0_274, %c0_275, %c0_276] : memref<2x8x32xf32, #tpu.memory_space<vmem>>, vector<1x8x32xf32>
    %522 = vector.shape_cast %521 : vector<1x8x32xf32> to vector<8x32xf32>
    %523 = vector.extract_strided_slice %514 {offsets = [0, 0], sizes = [8, 32], strides = [1, 1]} : vector<8x128xf32> to vector<8x32xf32>
    %524 = arith.negf %523 : vector<8x32xf32>
    %525 = math.exp %524 : vector<8x32xf32>
    %cst_277 = arith.constant 1.000000e+00 : f32
    %526 = vector.broadcast %cst_277 : f32 to vector<8x32xf32>
    %527 = arith.addf %526, %525 : vector<8x32xf32>
    %528 = arith.divf %526, %527 : vector<8x32xf32>
    %529 = vector.extract_strided_slice %514 {offsets = [0, 32], sizes = [8, 32], strides = [1, 1]} : vector<8x128xf32> to vector<8x32xf32>
    %530 = arith.negf %529 : vector<8x32xf32>
    %531 = math.exp %530 : vector<8x32xf32>
    %cst_278 = arith.constant 1.000000e+00 : f32
    %532 = vector.broadcast %cst_278 : f32 to vector<8x32xf32>
    %533 = arith.addf %532, %531 : vector<8x32xf32>
    %534 = arith.divf %532, %533 : vector<8x32xf32>
    %535 = vector.extract_strided_slice %514 {offsets = [0, 64], sizes = [8, 32], strides = [1, 1]} : vector<8x128xf32> to vector<8x32xf32>
    %536 = math.tanh %535 : vector<8x32xf32>
    %537 = vector.extract_strided_slice %514 {offsets = [0, 96], sizes = [8, 32], strides = [1, 1]} : vector<8x128xf32> to vector<8x32xf32>
    %538 = arith.negf %537 : vector<8x32xf32>
    %539 = math.exp %538 : vector<8x32xf32>
    %cst_279 = arith.constant 1.000000e+00 : f32
    %540 = vector.broadcast %cst_279 : f32 to vector<8x32xf32>
    %541 = arith.addf %540, %539 : vector<8x32xf32>
    %542 = arith.divf %540, %541 : vector<8x32xf32>
    %543 = arith.mulf %534, %522 : vector<8x32xf32>
    %544 = arith.mulf %528, %536 : vector<8x32xf32>
    %545 = arith.addf %543, %544 : vector<8x32xf32>
    %546 = math.tanh %545 : vector<8x32xf32>
    %547 = arith.mulf %542, %546 : vector<8x32xf32>
    %c1_280 = arith.constant 1 : index
    %c0_281 = arith.constant 0 : index
    %c0_282 = arith.constant 0 : index
    %548 = vector.load %arg10[%c1_280, %c0_281, %c0_282] : memref<2x8x32xf32, #tpu.memory_space<vmem>>, vector<1x8x32xf32>
    %549 = vector.shape_cast %548 : vector<1x8x32xf32> to vector<8x32xf32>
    %550 = vector.extract_strided_slice %520 {offsets = [0, 0], sizes = [8, 32], strides = [1, 1]} : vector<8x128xf32> to vector<8x32xf32>
    %551 = arith.negf %550 : vector<8x32xf32>
    %552 = math.exp %551 : vector<8x32xf32>
    %cst_283 = arith.constant 1.000000e+00 : f32
    %553 = vector.broadcast %cst_283 : f32 to vector<8x32xf32>
    %554 = arith.addf %553, %552 : vector<8x32xf32>
    %555 = arith.divf %553, %554 : vector<8x32xf32>
    %556 = vector.extract_strided_slice %520 {offsets = [0, 32], sizes = [8, 32], strides = [1, 1]} : vector<8x128xf32> to vector<8x32xf32>
    %557 = arith.negf %556 : vector<8x32xf32>
    %558 = math.exp %557 : vector<8x32xf32>
    %cst_284 = arith.constant 1.000000e+00 : f32
    %559 = vector.broadcast %cst_284 : f32 to vector<8x32xf32>
    %560 = arith.addf %559, %558 : vector<8x32xf32>
    %561 = arith.divf %559, %560 : vector<8x32xf32>
    %562 = vector.extract_strided_slice %520 {offsets = [0, 64], sizes = [8, 32], strides = [1, 1]} : vector<8x128xf32> to vector<8x32xf32>
    %563 = math.tanh %562 : vector<8x32xf32>
    %564 = vector.extract_strided_slice %520 {offsets = [0, 96], sizes = [8, 32], strides = [1, 1]} : vector<8x128xf32> to vector<8x32xf32>
    %565 = arith.negf %564 : vector<8x32xf32>
    %566 = math.exp %565 : vector<8x32xf32>
    %cst_285 = arith.constant 1.000000e+00 : f32
    %567 = vector.broadcast %cst_285 : f32 to vector<8x32xf32>
    %568 = arith.addf %567, %566 : vector<8x32xf32>
    %569 = arith.divf %567, %568 : vector<8x32xf32>
    %570 = arith.mulf %561, %549 : vector<8x32xf32>
    %571 = arith.mulf %555, %563 : vector<8x32xf32>
    %572 = arith.addf %570, %571 : vector<8x32xf32>
    %573 = math.tanh %572 : vector<8x32xf32>
    %574 = arith.mulf %569, %573 : vector<8x32xf32>
    %c0_286 = arith.constant 0 : index
    %c0_287 = arith.constant 0 : index
    %c0_288 = arith.constant 0 : index
    %575 = vector.load %arg9[%c0_286, %c0_287, %c0_288] : memref<2x8x32xf32, #tpu.memory_space<vmem>>, vector<1x8x32xf32>
    %576 = vector.shape_cast %575 : vector<1x8x32xf32> to vector<8x32xf32>
    %577 = vector.shape_cast %547 : vector<8x32xf32> to vector<1x8x32xf32>
    tpu.vector_store %arg9[%c0_286, %c0_287, %c0_288], %577 {strides = array<i32>} : memref<2x8x32xf32, #tpu.memory_space<vmem>>, vector<1x8x32xf32>,
    %c0_289 = arith.constant 0 : index
    %c0_290 = arith.constant 0 : index
    %c0_291 = arith.constant 0 : index
    %578 = vector.load %arg10[%c0_289, %c0_290, %c0_291] : memref<2x8x32xf32, #tpu.memory_space<vmem>>, vector<1x8x32xf32>
    %579 = vector.shape_cast %578 : vector<1x8x32xf32> to vector<8x32xf32>
    %580 = vector.shape_cast %545 : vector<8x32xf32> to vector<1x8x32xf32>
    tpu.vector_store %arg10[%c0_289, %c0_290, %c0_291], %580 {strides = array<i32>} : memref<2x8x32xf32, #tpu.memory_space<vmem>>, vector<1x8x32xf32>,
    %c1_292 = arith.constant 1 : index
    %c0_293 = arith.constant 0 : index
    %c0_294 = arith.constant 0 : index
    %581 = vector.load %arg9[%c1_292, %c0_293, %c0_294] : memref<2x8x32xf32, #tpu.memory_space<vmem>>, vector<1x8x32xf32>
    %582 = vector.shape_cast %581 : vector<1x8x32xf32> to vector<8x32xf32>
    %583 = vector.shape_cast %574 : vector<8x32xf32> to vector<1x8x32xf32>
    tpu.vector_store %arg9[%c1_292, %c0_293, %c0_294], %583 {strides = array<i32>} : memref<2x8x32xf32, #tpu.memory_space<vmem>>, vector<1x8x32xf32>,
    %c1_295 = arith.constant 1 : index
    %c0_296 = arith.constant 0 : index
    %c0_297 = arith.constant 0 : index
    %584 = vector.load %arg10[%c1_295, %c0_296, %c0_297] : memref<2x8x32xf32, #tpu.memory_space<vmem>>, vector<1x8x32xf32>
    %585 = vector.shape_cast %584 : vector<1x8x32xf32> to vector<8x32xf32>
    %586 = vector.shape_cast %572 : vector<8x32xf32> to vector<1x8x32xf32>
    tpu.vector_store %arg10[%c1_295, %c0_296, %c0_297], %586 {strides = array<i32>} : memref<2x8x32xf32, #tpu.memory_space<vmem>>, vector<1x8x32xf32>,
    %c6_298 = arith.constant 6 : index
    %c0_299 = arith.constant 0 : index
    %c0_300 = arith.constant 0 : index
    %587 = vector.load %arg5[%c6_298, %c0_299, %c0_300] : memref<8x8x32xf32, #tpu.memory_space<vmem>>, vector<1x8x32xf32>
    %588 = vector.shape_cast %587 : vector<1x8x32xf32> to vector<8x32xf32>
    %589 = vector.shape_cast %547 : vector<8x32xf32> to vector<1x8x32xf32>
    tpu.vector_store %arg5[%c6_298, %c0_299, %c0_300], %589 {strides = array<i32>} : memref<8x8x32xf32, #tpu.memory_space<vmem>>, vector<1x8x32xf32>,
    %c1_301 = arith.constant 1 : index
    %c0_302 = arith.constant 0 : index
    %c0_303 = arith.constant 0 : index
    %590 = vector.load %arg6[%c1_301, %c0_302, %c0_303] : memref<8x8x32xf32, #tpu.memory_space<vmem>>, vector<1x8x32xf32>
    %591 = vector.shape_cast %590 : vector<1x8x32xf32> to vector<8x32xf32>
    %592 = vector.shape_cast %574 : vector<8x32xf32> to vector<1x8x32xf32>
    tpu.vector_store %arg6[%c1_301, %c0_302, %c0_303], %592 {strides = array<i32>} : memref<8x8x32xf32, #tpu.memory_space<vmem>>, vector<1x8x32xf32>,
    %c7_304 = arith.constant 7 : index
    %c0_305 = arith.constant 0 : index
    %c0_306 = arith.constant 0 : index
    %593 = vector.load %arg1[%c7_304, %c0_305, %c0_306] : memref<8x8x128xf32, #tpu.memory_space<vmem>>, vector<1x8x128xf32>
    %594 = vector.shape_cast %593 : vector<1x8x128xf32> to vector<8x128xf32>
    %c0_307 = arith.constant 0 : index
    %c0_308 = arith.constant 0 : index
    %c0_309 = arith.constant 0 : index
    %595 = vector.load %arg9[%c0_307, %c0_308, %c0_309] : memref<2x8x32xf32, #tpu.memory_space<vmem>>, vector<1x8x32xf32>
    %596 = vector.shape_cast %595 : vector<1x8x32xf32> to vector<8x32xf32>
    %cst_310 = arith.constant dense<0.000000e+00> : vector<8x128xf32>
    %597 = tpu.matmul %596, %3, %cst_310 {dimension_numbers = #tpu.dot_dimension_numbers<[1], [0], [0], [1], [0, 0, 1, 1], [], []>} : vector<8x32xf32>, vector<32x128xf32>, vector<8x128xf32> -> vector<8x128xf32>
    %598 = arith.addf %594, %597 : vector<8x128xf32>
    %c0_311 = arith.constant 0 : index
    %c0_312 = arith.constant 0 : index
    %c0_313 = arith.constant 0 : index
    %599 = vector.load %arg2[%c0_311, %c0_312, %c0_313] : memref<8x8x128xf32, #tpu.memory_space<vmem>>, vector<1x8x128xf32>
    %600 = vector.shape_cast %599 : vector<1x8x128xf32> to vector<8x128xf32>
    %c1_314 = arith.constant 1 : index
    %c0_315 = arith.constant 0 : index
    %c0_316 = arith.constant 0 : index
    %601 = vector.load %arg9[%c1_314, %c0_315, %c0_316] : memref<2x8x32xf32, #tpu.memory_space<vmem>>, vector<1x8x32xf32>
    %602 = vector.shape_cast %601 : vector<1x8x32xf32> to vector<8x32xf32>
    %cst_317 = arith.constant dense<0.000000e+00> : vector<8x128xf32>
    %603 = tpu.matmul %602, %4, %cst_317 {dimension_numbers = #tpu.dot_dimension_numbers<[1], [0], [0], [1], [0, 0, 1, 1], [], []>} : vector<8x32xf32>, vector<32x128xf32>, vector<8x128xf32> -> vector<8x128xf32>
    %604 = arith.addf %600, %603 : vector<8x128xf32>
    %c0_318 = arith.constant 0 : index
    %c0_319 = arith.constant 0 : index
    %c0_320 = arith.constant 0 : index
    %605 = vector.load %arg10[%c0_318, %c0_319, %c0_320] : memref<2x8x32xf32, #tpu.memory_space<vmem>>, vector<1x8x32xf32>
    %606 = vector.shape_cast %605 : vector<1x8x32xf32> to vector<8x32xf32>
    %607 = vector.extract_strided_slice %598 {offsets = [0, 0], sizes = [8, 32], strides = [1, 1]} : vector<8x128xf32> to vector<8x32xf32>
    %608 = arith.negf %607 : vector<8x32xf32>
    %609 = math.exp %608 : vector<8x32xf32>
    %cst_321 = arith.constant 1.000000e+00 : f32
    %610 = vector.broadcast %cst_321 : f32 to vector<8x32xf32>
    %611 = arith.addf %610, %609 : vector<8x32xf32>
    %612 = arith.divf %610, %611 : vector<8x32xf32>
    %613 = vector.extract_strided_slice %598 {offsets = [0, 32], sizes = [8, 32], strides = [1, 1]} : vector<8x128xf32> to vector<8x32xf32>
    %614 = arith.negf %613 : vector<8x32xf32>
    %615 = math.exp %614 : vector<8x32xf32>
    %cst_322 = arith.constant 1.000000e+00 : f32
    %616 = vector.broadcast %cst_322 : f32 to vector<8x32xf32>
    %617 = arith.addf %616, %615 : vector<8x32xf32>
    %618 = arith.divf %616, %617 : vector<8x32xf32>
    %619 = vector.extract_strided_slice %598 {offsets = [0, 64], sizes = [8, 32], strides = [1, 1]} : vector<8x128xf32> to vector<8x32xf32>
    %620 = math.tanh %619 : vector<8x32xf32>
    %621 = vector.extract_strided_slice %598 {offsets = [0, 96], sizes = [8, 32], strides = [1, 1]} : vector<8x128xf32> to vector<8x32xf32>
    %622 = arith.negf %621 : vector<8x32xf32>
    %623 = math.exp %622 : vector<8x32xf32>
    %cst_323 = arith.constant 1.000000e+00 : f32
    %624 = vector.broadcast %cst_323 : f32 to vector<8x32xf32>
    %625 = arith.addf %624, %623 : vector<8x32xf32>
    %626 = arith.divf %624, %625 : vector<8x32xf32>
    %627 = arith.mulf %618, %606 : vector<8x32xf32>
    %628 = arith.mulf %612, %620 : vector<8x32xf32>
    %629 = arith.addf %627, %628 : vector<8x32xf32>
    %630 = math.tanh %629 : vector<8x32xf32>
    %631 = arith.mulf %626, %630 : vector<8x32xf32>
    %c1_324 = arith.constant 1 : index
    %c0_325 = arith.constant 0 : index
    %c0_326 = arith.constant 0 : index
    %632 = vector.load %arg10[%c1_324, %c0_325, %c0_326] : memref<2x8x32xf32, #tpu.memory_space<vmem>>, vector<1x8x32xf32>
    %633 = vector.shape_cast %632 : vector<1x8x32xf32> to vector<8x32xf32>
    %634 = vector.extract_strided_slice %604 {offsets = [0, 0], sizes = [8, 32], strides = [1, 1]} : vector<8x128xf32> to vector<8x32xf32>
    %635 = arith.negf %634 : vector<8x32xf32>
    %636 = math.exp %635 : vector<8x32xf32>
    %cst_327 = arith.constant 1.000000e+00 : f32
    %637 = vector.broadcast %cst_327 : f32 to vector<8x32xf32>
    %638 = arith.addf %637, %636 : vector<8x32xf32>
    %639 = arith.divf %637, %638 : vector<8x32xf32>
    %640 = vector.extract_strided_slice %604 {offsets = [0, 32], sizes = [8, 32], strides = [1, 1]} : vector<8x128xf32> to vector<8x32xf32>
    %641 = arith.negf %640 : vector<8x32xf32>
    %642 = math.exp %641 : vector<8x32xf32>
    %cst_328 = arith.constant 1.000000e+00 : f32
    %643 = vector.broadcast %cst_328 : f32 to vector<8x32xf32>
    %644 = arith.addf %643, %642 : vector<8x32xf32>
    %645 = arith.divf %643, %644 : vector<8x32xf32>
    %646 = vector.extract_strided_slice %604 {offsets = [0, 64], sizes = [8, 32], strides = [1, 1]} : vector<8x128xf32> to vector<8x32xf32>
    %647 = math.tanh %646 : vector<8x32xf32>
    %648 = vector.extract_strided_slice %604 {offsets = [0, 96], sizes = [8, 32], strides = [1, 1]} : vector<8x128xf32> to vector<8x32xf32>
    %649 = arith.negf %648 : vector<8x32xf32>
    %650 = math.exp %649 : vector<8x32xf32>
    %cst_329 = arith.constant 1.000000e+00 : f32
    %651 = vector.broadcast %cst_329 : f32 to vector<8x32xf32>
    %652 = arith.addf %651, %650 : vector<8x32xf32>
    %653 = arith.divf %651, %652 : vector<8x32xf32>
    %654 = arith.mulf %645, %633 : vector<8x32xf32>
    %655 = arith.mulf %639, %647 : vector<8x32xf32>
    %656 = arith.addf %654, %655 : vector<8x32xf32>
    %657 = math.tanh %656 : vector<8x32xf32>
    %658 = arith.mulf %653, %657 : vector<8x32xf32>
    %c0_330 = arith.constant 0 : index
    %c0_331 = arith.constant 0 : index
    %c0_332 = arith.constant 0 : index
    %659 = vector.load %arg9[%c0_330, %c0_331, %c0_332] : memref<2x8x32xf32, #tpu.memory_space<vmem>>, vector<1x8x32xf32>
    %660 = vector.shape_cast %659 : vector<1x8x32xf32> to vector<8x32xf32>
    %661 = vector.shape_cast %631 : vector<8x32xf32> to vector<1x8x32xf32>
    tpu.vector_store %arg9[%c0_330, %c0_331, %c0_332], %661 {strides = array<i32>} : memref<2x8x32xf32, #tpu.memory_space<vmem>>, vector<1x8x32xf32>,
    %c0_333 = arith.constant 0 : index
    %c0_334 = arith.constant 0 : index
    %c0_335 = arith.constant 0 : index
    %662 = vector.load %arg10[%c0_333, %c0_334, %c0_335] : memref<2x8x32xf32, #tpu.memory_space<vmem>>, vector<1x8x32xf32>
    %663 = vector.shape_cast %662 : vector<1x8x32xf32> to vector<8x32xf32>
    %664 = vector.shape_cast %629 : vector<8x32xf32> to vector<1x8x32xf32>
    tpu.vector_store %arg10[%c0_333, %c0_334, %c0_335], %664 {strides = array<i32>} : memref<2x8x32xf32, #tpu.memory_space<vmem>>, vector<1x8x32xf32>,
    %c1_336 = arith.constant 1 : index
    %c0_337 = arith.constant 0 : index
    %c0_338 = arith.constant 0 : index
    %665 = vector.load %arg9[%c1_336, %c0_337, %c0_338] : memref<2x8x32xf32, #tpu.memory_space<vmem>>, vector<1x8x32xf32>
    %666 = vector.shape_cast %665 : vector<1x8x32xf32> to vector<8x32xf32>
    %667 = vector.shape_cast %658 : vector<8x32xf32> to vector<1x8x32xf32>
    tpu.vector_store %arg9[%c1_336, %c0_337, %c0_338], %667 {strides = array<i32>} : memref<2x8x32xf32, #tpu.memory_space<vmem>>, vector<1x8x32xf32>,
    %c1_339 = arith.constant 1 : index
    %c0_340 = arith.constant 0 : index
    %c0_341 = arith.constant 0 : index
    %668 = vector.load %arg10[%c1_339, %c0_340, %c0_341] : memref<2x8x32xf32, #tpu.memory_space<vmem>>, vector<1x8x32xf32>
    %669 = vector.shape_cast %668 : vector<1x8x32xf32> to vector<8x32xf32>
    %670 = vector.shape_cast %656 : vector<8x32xf32> to vector<1x8x32xf32>
    tpu.vector_store %arg10[%c1_339, %c0_340, %c0_341], %670 {strides = array<i32>} : memref<2x8x32xf32, #tpu.memory_space<vmem>>, vector<1x8x32xf32>,
    %c7_342 = arith.constant 7 : index
    %c0_343 = arith.constant 0 : index
    %c0_344 = arith.constant 0 : index
    %671 = vector.load %arg5[%c7_342, %c0_343, %c0_344] : memref<8x8x32xf32, #tpu.memory_space<vmem>>, vector<1x8x32xf32>
    %672 = vector.shape_cast %671 : vector<1x8x32xf32> to vector<8x32xf32>
    %673 = vector.shape_cast %631 : vector<8x32xf32> to vector<1x8x32xf32>
    tpu.vector_store %arg5[%c7_342, %c0_343, %c0_344], %673 {strides = array<i32>} : memref<8x8x32xf32, #tpu.memory_space<vmem>>, vector<1x8x32xf32>,
    %c0_345 = arith.constant 0 : index
    %c0_346 = arith.constant 0 : index
    %c0_347 = arith.constant 0 : index
    %674 = vector.load %arg6[%c0_345, %c0_346, %c0_347] : memref<8x8x32xf32, #tpu.memory_space<vmem>>, vector<1x8x32xf32>
    %675 = vector.shape_cast %674 : vector<1x8x32xf32> to vector<8x32xf32>
    %676 = vector.shape_cast %658 : vector<8x32xf32> to vector<1x8x32xf32>
    tpu.vector_store %arg6[%c0_345, %c0_346, %c0_347], %676 {strides = array<i32>} : memref<8x8x32xf32, #tpu.memory_space<vmem>>, vector<1x8x32xf32>,
    %c0_i32_348 = arith.constant 0 : i32
    %677 = arith.cmpi eq, %arg0, %c0_i32_348 : i32
    %678 = arith.extui %677 : i1 to i32
    %c0_i32_349 = arith.constant 0 : i32
    %679 = arith.cmpi ne, %678, %c0_i32_349 : i32
    scf.if %679 {
      %c0_350 = arith.constant 0 : index
      %c0_351 = arith.constant 0 : index
      %c0_352 = arith.constant 0 : index
      %680 = vector.load %arg9[%c0_350, %c0_351, %c0_352] : memref<2x8x32xf32, #tpu.memory_space<vmem>>, vector<2x8x32xf32>
      %c0_353 = arith.constant 0 : index
      %c0_354 = arith.constant 0 : index
      %c0_355 = arith.constant 0 : index
      %681 = vector.load %arg7[%c0_353, %c0_354, %c0_355] : memref<2x8x32xf32, #tpu.memory_space<vmem>>, vector<2x8x32xf32>
      tpu.vector_store %arg7[%c0_353, %c0_354, %c0_355], %680 {strides = array<i32>} : memref<2x8x32xf32, #tpu.memory_space<vmem>>, vector<2x8x32xf32>,
      %c0_356 = arith.constant 0 : index
      %c0_357 = arith.constant 0 : index
      %c0_358 = arith.constant 0 : index
      %682 = vector.load %arg10[%c0_356, %c0_357, %c0_358] : memref<2x8x32xf32, #tpu.memory_space<vmem>>, vector<2x8x32xf32>
      %c0_359 = arith.constant 0 : index
      %c0_360 = arith.constant 0 : index
      %c0_361 = arith.constant 0 : index
      %683 = vector.load %arg8[%c0_359, %c0_360, %c0_361] : memref<2x8x32xf32, #tpu.memory_space<vmem>>, vector<2x8x32xf32>
      tpu.vector_store %arg8[%c0_359, %c0_360, %c0_361], %682 {strides = array<i32>} : memref<2x8x32xf32, #tpu.memory_space<vmem>>, vector<2x8x32xf32>,
    } else {
    }
    return
  }
  func.func @transform_0(%arg0: i32) -> (i32, i32, i32) {
    %c0_i32 = arith.constant 0 : i32
    %c0_i32_0 = arith.constant 0 : i32
    %c0_i32_1 = arith.constant 0 : i32
    return %arg0, %c0_i32, %c0_i32_0 : i32, i32, i32
  }
  func.func @transform_1(%arg0: i32) -> (i32, i32, i32) {
    %c0_i32 = arith.constant 0 : i32
    %0 = arith.subi %c0_i32, %arg0 : i32
    %c0_i32_0 = arith.constant 0 : i32
    %c1_i32 = arith.constant 1 : i32
    %c0_i32_1 = arith.constant 0 : i32
    return %0, %c0_i32_0, %c1_i32 : i32, i32, i32
  }
  func.func @transform_2(%arg0: i32) -> (i32, i32) {
    %c0_i32 = arith.constant 0 : i32
    %c0_i32_0 = arith.constant 0 : i32
    %c0_i32_1 = arith.constant 0 : i32
    return %c0_i32, %c0_i32_0 : i32, i32
  }
  func.func @transform_3(%arg0: i32) -> (i32, i32) {
    %c0_i32 = arith.constant 0 : i32
    %c0_i32_0 = arith.constant 0 : i32
    %c0_i32_1 = arith.constant 0 : i32
    return %c0_i32, %c0_i32_0 : i32, i32
  }
  func.func @transform_4(%arg0: i32) -> (i32, i32, i32) {
    %c0_i32 = arith.constant 0 : i32
    %c0_i32_0 = arith.constant 0 : i32
    %c0_i32_1 = arith.constant 0 : i32
    return %arg0, %c0_i32, %c0_i32_0 : i32, i32, i32
  }
  func.func @transform_5(%arg0: i32) -> (i32, i32, i32) {
    %c0_i32 = arith.constant 0 : i32
    %0 = arith.subi %c0_i32, %arg0 : i32
    %c0_i32_0 = arith.constant 0 : i32
    %c0_i32_1 = arith.constant 0 : i32
    %c0_i32_2 = arith.constant 0 : i32
    return %0, %c0_i32_0, %c0_i32_1 : i32, i32, i32
  }
  func.func @transform_6(%arg0: i32) -> (i32, i32, i32) {
    %c0_i32 = arith.constant 0 : i32
    %c0_i32_0 = arith.constant 0 : i32
    %c0_i32_1 = arith.constant 0 : i32
    %c0_i32_2 = arith.constant 0 : i32
    return %c0_i32, %c0_i32_0, %c0_i32_1 : i32, i32, i32
  }
  func.func @transform_7(%arg0: i32) -> (i32, i32, i32) {
    %c0_i32 = arith.constant 0 : i32
    %c0_i32_0 = arith.constant 0 : i32
    %c0_i32_1 = arith.constant 0 : i32
    %c0_i32_2 = arith.constant 0 : i32
    return %c0_i32, %c0_i32_0, %c0_i32_1 : i32, i32, i32
  }
}

module attributes {stable_mosaic.version = 11 : i64} {
  func.func @_gates_kernel(%arg0: i32, %arg1: i32, %arg2: memref<64x64xf32, #tpu.memory_space<vmem>>, %arg3: memref<64x256xf32, #tpu.memory_space<vmem>>, %arg4: memref<1x256xf32, #tpu.memory_space<vmem>>, %arg5: memref<64x256xf32, #tpu.memory_space<vmem>>) attributes {dimension_semantics = [#tpu.dimension_semantics<parallel>, #tpu.dimension_semantics<parallel>], iteration_bounds = array<i64: 1, 1>, scalar_prefetch = 0 : i64, scratch_operands = 0 : i64, tpu.core_type = #tpu.core_type<tc>, window_params = [{transform_indices = @transform_0, window_bounds = array<i64: 64, 64>}, {transform_indices = @transform_1, window_bounds = array<i64: 64, 256>}, {transform_indices = @transform_2, window_bounds = array<i64: 1, 256>}, {transform_indices = @transform_3, window_bounds = array<i64: 64, 256>}]} {
    %c0 = arith.constant 0 : index
    %c0_0 = arith.constant 0 : index
    %0 = vector.load %arg2[%c0, %c0_0] : memref<64x64xf32, #tpu.memory_space<vmem>>, vector<64x64xf32>
    %c0_1 = arith.constant 0 : index
    %c0_2 = arith.constant 0 : index
    %1 = vector.load %arg3[%c0_1, %c0_2] : memref<64x256xf32, #tpu.memory_space<vmem>>, vector<64x256xf32>
    %cst = arith.constant dense<0.000000e+00> : vector<64x256xf32>
    %2 = tpu.matmul %0, %1, %cst {dimension_numbers = #tpu.dot_dimension_numbers<[1], [0], [0], [1], [0, 0, 1, 1], [], []>} : vector<64x64xf32>, vector<64x256xf32>, vector<64x256xf32> -> vector<64x256xf32>
    %c0_3 = arith.constant 0 : index
    %c0_4 = arith.constant 0 : index
    %3 = vector.load %arg4[%c0_3, %c0_4] : memref<1x256xf32, #tpu.memory_space<vmem>>, vector<1x256xf32>
    %4 = vector.broadcast %3 : vector<1x256xf32> to vector<64x256xf32>
    %5 = arith.addf %2, %4 : vector<64x256xf32>
    %c0_5 = arith.constant 0 : index
    %c0_6 = arith.constant 0 : index
    %6 = vector.load %arg5[%c0_5, %c0_6] : memref<64x256xf32, #tpu.memory_space<vmem>>, vector<64x256xf32>
    tpu.vector_store %arg5[%c0_5, %c0_6], %5 {strides = array<i32>} : memref<64x256xf32, #tpu.memory_space<vmem>>, vector<64x256xf32>,
    return
  }
  func.func @transform_0(%arg0: i32, %arg1: i32) -> (i32, i32) {
    %c0_i32 = arith.constant 0 : i32
    %c0_i32_0 = arith.constant 0 : i32
    return %arg0, %c0_i32 : i32, i32
  }
  func.func @transform_1(%arg0: i32, %arg1: i32) -> (i32, i32) {
    %c0_i32 = arith.constant 0 : i32
    %c0_i32_0 = arith.constant 0 : i32
    return %c0_i32, %arg1 : i32, i32
  }
  func.func @transform_2(%arg0: i32, %arg1: i32) -> (i32, i32) {
    %c0_i32 = arith.constant 0 : i32
    %c0_i32_0 = arith.constant 0 : i32
    return %c0_i32, %arg1 : i32, i32
  }
  func.func @transform_3(%arg0: i32, %arg1: i32) -> (i32, i32) {
    %c0_i32 = arith.constant 0 : i32
    return %arg0, %arg1 : i32, i32
  }
}

module attributes {stable_mosaic.version = 11 : i64} {
  func.func @_cat_res_prev_proj_kernel(%arg0: i32, %arg1: memref<64x32xf32, #tpu.memory_space<vmem>>, %arg2: memref<64x32xf32, #tpu.memory_space<vmem>>, %arg3: memref<64x16xf32, #tpu.memory_space<vmem>>, %arg4: memref<16x64xf32, #tpu.memory_space<vmem>>, %arg5: memref<64x64xf32, #tpu.memory_space<vmem>>) attributes {dimension_semantics = [#tpu.dimension_semantics<parallel>], iteration_bounds = array<i64: 1>, scalar_prefetch = 0 : i64, scratch_operands = 0 : i64, tpu.core_type = #tpu.core_type<tc>, window_params = [{transform_indices = @transform_0, window_bounds = array<i64: 64, 32>}, {transform_indices = @transform_1, window_bounds = array<i64: 64, 32>}, {transform_indices = @transform_2, window_bounds = array<i64: 64, 16>}, {pipeline_mode = #tpu.pipeline_mode<synchronous>, transform_indices = @transform_3, window_bounds = array<i64: 16, 64>}, {transform_indices = @transform_4, window_bounds = array<i64: 64, 64>}]} {
    %c0 = arith.constant 0 : index
    %c0_0 = arith.constant 0 : index
    %0 = vector.load %arg1[%c0, %c0_0] : memref<64x32xf32, #tpu.memory_space<vmem>>, vector<64x32xf32>
    %c0_1 = arith.constant 0 : index
    %c0_2 = arith.constant 0 : index
    %1 = vector.load %arg2[%c0_1, %c0_2] : memref<64x32xf32, #tpu.memory_space<vmem>>, vector<64x32xf32>
    %2 = tpu.concatenate %0, %1 in 1 : vector<64x32xf32>, vector<64x32xf32> -> vector<64x64xf32>
    %c0_3 = arith.constant 0 : index
    %c0_4 = arith.constant 0 : index
    %3 = vector.load %arg3[%c0_3, %c0_4] : memref<64x16xf32, #tpu.memory_space<vmem>>, vector<64x16xf32>
    %c0_5 = arith.constant 0 : index
    %c0_6 = arith.constant 0 : index
    %4 = vector.load %arg4[%c0_5, %c0_6] : memref<16x64xf32, #tpu.memory_space<vmem>>, vector<16x64xf32>
    %cst = arith.constant dense<0.000000e+00> : vector<64x64xf32>
    %5 = tpu.matmul %3, %4, %cst {dimension_numbers = #tpu.dot_dimension_numbers<[1], [0], [0], [1], [0, 0, 1, 1], [], []>} : vector<64x16xf32>, vector<16x64xf32>, vector<64x64xf32> -> vector<64x64xf32>
    %6 = arith.addf %2, %5 : vector<64x64xf32>
    %c0_7 = arith.constant 0 : index
    %c0_8 = arith.constant 0 : index
    %7 = vector.load %arg5[%c0_7, %c0_8] : memref<64x64xf32, #tpu.memory_space<vmem>>, vector<64x64xf32>
    tpu.vector_store %arg5[%c0_7, %c0_8], %6 {strides = array<i32>} : memref<64x64xf32, #tpu.memory_space<vmem>>, vector<64x64xf32>,
    return
  }
  func.func @transform_0(%arg0: i32) -> (i32, i32) {
    %c0_i32 = arith.constant 0 : i32
    %c0_i32_0 = arith.constant 0 : i32
    return %arg0, %c0_i32 : i32, i32
  }
  func.func @transform_1(%arg0: i32) -> (i32, i32) {
    %c0_i32 = arith.constant 0 : i32
    %c0_i32_0 = arith.constant 0 : i32
    return %arg0, %c0_i32 : i32, i32
  }
  func.func @transform_2(%arg0: i32) -> (i32, i32) {
    %c0_i32 = arith.constant 0 : i32
    %c0_i32_0 = arith.constant 0 : i32
    return %arg0, %c0_i32 : i32, i32
  }
  func.func @transform_3(%arg0: i32) -> (i32, i32) {
    %c0_i32 = arith.constant 0 : i32
    %c0_i32_0 = arith.constant 0 : i32
    %c0_i32_1 = arith.constant 0 : i32
    return %c0_i32, %c0_i32_0 : i32, i32
  }
  func.func @transform_4(%arg0: i32) -> (i32, i32) {
    %c0_i32 = arith.constant 0 : i32
    %c0_i32_0 = arith.constant 0 : i32
    return %arg0, %c0_i32 : i32, i32
  }
}

module attributes {stable_mosaic.version = 11 : i64} {
  func.func @_cat_res_halves_kernel(%arg0: i32, %arg1: memref<64x32xf32, #tpu.memory_space<vmem>>, %arg2: memref<64x32xf32, #tpu.memory_space<vmem>>, %arg3: memref<64x32xf32, #tpu.memory_space<vmem>>, %arg4: memref<64x32xf32, #tpu.memory_space<vmem>>, %arg5: memref<64x64xf32, #tpu.memory_space<vmem>>) attributes {dimension_semantics = [#tpu.dimension_semantics<parallel>], iteration_bounds = array<i64: 1>, scalar_prefetch = 0 : i64, scratch_operands = 0 : i64, tpu.core_type = #tpu.core_type<tc>, window_params = [{transform_indices = @transform_0, window_bounds = array<i64: 64, 32>}, {transform_indices = @transform_1, window_bounds = array<i64: 64, 32>}, {transform_indices = @transform_2, window_bounds = array<i64: 64, 32>}, {transform_indices = @transform_3, window_bounds = array<i64: 64, 32>}, {transform_indices = @transform_4, window_bounds = array<i64: 64, 64>}]} {
    %c0 = arith.constant 0 : index
    %c0_0 = arith.constant 0 : index
    %0 = vector.load %arg1[%c0, %c0_0] : memref<64x32xf32, #tpu.memory_space<vmem>>, vector<64x32xf32>
    %c0_1 = arith.constant 0 : index
    %c0_2 = arith.constant 0 : index
    %1 = vector.load %arg3[%c0_1, %c0_2] : memref<64x32xf32, #tpu.memory_space<vmem>>, vector<64x32xf32>
    %2 = arith.addf %0, %1 : vector<64x32xf32>
    %c0_3 = arith.constant 0 : index
    %c0_4 = arith.constant 0 : index
    %3 = vector.load %arg2[%c0_3, %c0_4] : memref<64x32xf32, #tpu.memory_space<vmem>>, vector<64x32xf32>
    %c0_5 = arith.constant 0 : index
    %c0_6 = arith.constant 0 : index
    %4 = vector.load %arg4[%c0_5, %c0_6] : memref<64x32xf32, #tpu.memory_space<vmem>>, vector<64x32xf32>
    %5 = arith.addf %3, %4 : vector<64x32xf32>
    %6 = tpu.concatenate %2, %5 in 1 : vector<64x32xf32>, vector<64x32xf32> -> vector<64x64xf32>
    %c0_7 = arith.constant 0 : index
    %c0_8 = arith.constant 0 : index
    %7 = vector.load %arg5[%c0_7, %c0_8] : memref<64x64xf32, #tpu.memory_space<vmem>>, vector<64x64xf32>
    tpu.vector_store %arg5[%c0_7, %c0_8], %6 {strides = array<i32>} : memref<64x64xf32, #tpu.memory_space<vmem>>, vector<64x64xf32>,
    return
  }
  func.func @transform_0(%arg0: i32) -> (i32, i32) {
    %c0_i32 = arith.constant 0 : i32
    %c0_i32_0 = arith.constant 0 : i32
    return %arg0, %c0_i32 : i32, i32
  }
  func.func @transform_1(%arg0: i32) -> (i32, i32) {
    %c0_i32 = arith.constant 0 : i32
    %c0_i32_0 = arith.constant 0 : i32
    return %arg0, %c0_i32 : i32, i32
  }
  func.func @transform_2(%arg0: i32) -> (i32, i32) {
    %c0_i32 = arith.constant 0 : i32
    %c0_i32_0 = arith.constant 0 : i32
    return %arg0, %c0_i32 : i32, i32
  }
  func.func @transform_3(%arg0: i32) -> (i32, i32) {
    %c0_i32 = arith.constant 0 : i32
    %c0_i32_0 = arith.constant 0 : i32
    return %arg0, %c0_i32 : i32, i32
  }
  func.func @transform_4(%arg0: i32) -> (i32, i32) {
    %c0_i32 = arith.constant 0 : i32
    %c0_i32_0 = arith.constant 0 : i32
    return %arg0, %c0_i32 : i32, i32
  }
}

module attributes {stable_mosaic.version = 11 : i64} {
  func.func @_cat_kernel(%arg0: i32, %arg1: memref<64x32xf32, #tpu.memory_space<vmem>>, %arg2: memref<64x32xf32, #tpu.memory_space<vmem>>, %arg3: memref<64x64xf32, #tpu.memory_space<vmem>>) attributes {dimension_semantics = [#tpu.dimension_semantics<parallel>], iteration_bounds = array<i64: 1>, scalar_prefetch = 0 : i64, scratch_operands = 0 : i64, tpu.core_type = #tpu.core_type<tc>, window_params = [{transform_indices = @transform_0, window_bounds = array<i64: 64, 32>}, {transform_indices = @transform_1, window_bounds = array<i64: 64, 32>}, {transform_indices = @transform_2, window_bounds = array<i64: 64, 64>}]} {
    %c0 = arith.constant 0 : index
    %c0_0 = arith.constant 0 : index
    %0 = vector.load %arg1[%c0, %c0_0] : memref<64x32xf32, #tpu.memory_space<vmem>>, vector<64x32xf32>
    %c0_1 = arith.constant 0 : index
    %c0_2 = arith.constant 0 : index
    %1 = vector.load %arg2[%c0_1, %c0_2] : memref<64x32xf32, #tpu.memory_space<vmem>>, vector<64x32xf32>
    %2 = tpu.concatenate %0, %1 in 1 : vector<64x32xf32>, vector<64x32xf32> -> vector<64x64xf32>
    %c0_3 = arith.constant 0 : index
    %c0_4 = arith.constant 0 : index
    %3 = vector.load %arg3[%c0_3, %c0_4] : memref<64x64xf32, #tpu.memory_space<vmem>>, vector<64x64xf32>
    tpu.vector_store %arg3[%c0_3, %c0_4], %2 {strides = array<i32>} : memref<64x64xf32, #tpu.memory_space<vmem>>, vector<64x64xf32>,
    return
  }
  func.func @transform_0(%arg0: i32) -> (i32, i32) {
    %c0_i32 = arith.constant 0 : i32
    %c0_i32_0 = arith.constant 0 : i32
    return %arg0, %c0_i32 : i32, i32
  }
  func.func @transform_1(%arg0: i32) -> (i32, i32) {
    %c0_i32 = arith.constant 0 : i32
    %c0_i32_0 = arith.constant 0 : i32
    return %arg0, %c0_i32 : i32, i32
  }
  func.func @transform_2(%arg0: i32) -> (i32, i32) {
    %c0_i32 = arith.constant 0 : i32
    %c0_i32_0 = arith.constant 0 : i32
    return %arg0, %c0_i32 : i32, i32
  }
}

</mosaic_0001>

<llo_original>
// kernel: residual_bilstm_forward.9
$region0: #{residual_bilstm_forward.9}
  #allocation0 [shape = 'u32[]', space=smem, size = 0x4, offset = 0x4, fixed_abs, tag = 'smem constant byte address 0x4 - core index']
  #allocation1 [shape = 'u32[144,128]{1,0:T(1,128)}', space=vmem, size = 0x12000, scoped, tag = 'internal scratch']
  %s0 = inlined_call_operand.vmem [shape: f32[64,16], index: 0, kind: input, shape index: {}]
  %s1 = inlined_call_operand.vmem [shape: f32[16,256], index: 1, kind: input, shape index: {}]
  %s2 = inlined_call_operand.vmem [shape: f32[1,256], index: 2, kind: input, shape index: {}]
  %s3 = inlined_call_operand.vmem [shape: f32[64,256], index: 3, kind: output, shape index: {}]
  %s4 = sld [smem:[#allocation0]]
  $region22: #{residual_bilstm_forward.9} parent=0
    _
  %s6 = ssub.s32 1, %s4
  %s7 = scalar_select 0, %s6, %s4
  // Predicated region
  $region2: #{residual_bilstm_forward.9} parent=0 // pred_check
    _
  $region3: #{residual_bilstm_forward.9} parent=0 // pred_check_branch
    %9 = sbr.rel (0) target = $region5
  $region4: #{residual_bilstm_forward.9} parent=0 // pred_region
    _
  $region5: #{residual_bilstm_forward.9} parent=0 // pred_fallthru
    _
  // Predicated region
  $region6: #{residual_bilstm_forward.9} parent=0 // pred_check
    _
  $region7: #{residual_bilstm_forward.9} parent=0 // pred_check_branch
    %11 = sbr.rel (0) target = $region9
  $region8: #{residual_bilstm_forward.9} parent=0 // pred_region
    _
  $region9: #{residual_bilstm_forward.9} parent=0 // pred_fallthru
    _
  // Predicated region
  $region10: #{residual_bilstm_forward.9} parent=0 // pred_check
    _
  $region11: #{residual_bilstm_forward.9} parent=0 // pred_check_branch
    %13 = sbr.rel (0) target = $region13
  $region12: #{residual_bilstm_forward.9} parent=0 // pred_region
    _
  $region13: #{residual_bilstm_forward.9} parent=0 // pred_fallthru
    _
  %v14 = vld [vmem:[%s0] sm:$0xff]
  %v15 = vld [vmem:[%s0 + $0x8] sm:$0xff]
  %v16 = vld [vmem:[%s0 + $0x10] sm:$0xff]
  %v17 = vld [vmem:[%s0 + $0x18] sm:$0xff]
  %v18 = vld [vmem:[%s0 + $0x20] sm:$0xff]
  %v19 = vld [vmem:[%s0 + $0x28] sm:$0xff]
  %v20 = vld [vmem:[%s0 + $0x30] sm:$0xff]
  %v21 = vld [vmem:[%s0 + $0x38] sm:$0xff]
  %v22 = vld [vmem:[%s1] sm:$0xff]
  %v23 = vld [vmem:[%s1 + $0x8] sm:$0xff]
  %v24 = vld [vmem:[%s1 + $0x10] sm:$0xff]
  %v25 = vld [vmem:[%s1 + $0x18] sm:$0xff]
  %v26 = vld [vmem:[%s2] sm:$0x3]
  %v28 = vlaneseq
  %v29 = vshrl.u32 %v28, 7
  %v30 = vsub.s32 0, %v29
  %v31 = vrot.slane %v26, %v30
  %v32 = vlaneseq
  %v33 = vshrl.u32 %v32, 7
  %v34 = vsub.s32 1, %v33
  %v35 = vrot.slane %v26, %v34
  %vm38 = vcmask 130048
  %v40 = vsel %vm38, %v14, 0
  %v43 = vsel %vm38, %v15, 0
  %v46 = vsel %vm38, %v16, 0
  %v49 = vsel %vm38, %v17, 0
  %v52 = vsel %vm38, %v18, 0
  %v55 = vsel %vm38, %v19, 0
  %v58 = vsel %vm38, %v20, 0
  %v61 = vsel %vm38, %v21, 0
  %63 = vmatprep.subr.mxu0 %v23
  %64 = vmatpush1.msra.mxu0 %v22
  %65 = vmatprep.subr.mxu0 %v25
  %66 = vmatpush1.msra.mxu0 %v24
  %67 = vmatprep.subr.mxu0 0.0
  %68 = vmatpush1.msra.mxu0 0.0
  %69 = vmatprep.subr.mxu0 0.0
  %70 = vmatpush1.msra.mxu0 0.0
  %71 = vmatprep.subr.mxu0 0.0
  %72 = vmatpush1.msra.mxu0 0.0
  %73 = vmatprep.subr.mxu0 0.0
  %74 = vmatpush1.msra.mxu0 0.0
  %75 = vmatprep.subr.mxu0 0.0
  %76 = vmatpush1.msra.mxu0 0.0
  %77 = vmatprep.subr.mxu0 0.0
  %78 = vmatpush1.msra.mxu0 0.0
  %79 = vmatprep.subr.mxu0 0.0
  %80 = vmatpush1.msra.mxu0 0.0
  %81 = vmatprep.subr.mxu0 0.0
  %82 = vmatpush1.msra.mxu0 0.0
  %83 = vmatprep.subr.mxu0 0.0
  %84 = vmatpush1.msra.mxu0 0.0
  %85 = vmatprep.subr.mxu0 0.0
  %86 = vmatpush1.msra.mxu0 0.0
  %87 = vmatprep.subr.mxu0 0.0
  %88 = vmatpush1.msra.mxu0 0.0
  %89 = vmatprep.subr.mxu0 0.0
  %90 = vmatpush1.msra.mxu0 0.0
  %91 = vmatprep.subr.mxu0 0.0
  %92 = vmatpush1.msra.mxu0 0.0
  %93 = vmatprep.subr.mxu0 0.0
  %94 = vmatpush1.msra.mxu0 0.0
  %95 = vmatprep.subr.mxu0 0.0
  %96 = vmatpush1.msra.mxu0 0.0
  %97 = vmatprep.subr.mxu0 0.0
  %98 = vmatpush1.msra.mxu0 0.0
  %99 = vmatprep.subr.mxu0 0.0
  %100 = vmatpush1.msra.mxu0 0.0
  %101 = vmatprep.subr.mxu0 0.0
  %102 = vmatpush1.msra.mxu0 0.0
  %103 = vmatprep.subr.mxu0 0.0
  %104 = vmatpush1.msra.mxu0 0.0
  %105 = vmatprep.subr.mxu0 0.0
  %106 = vmatpush1.msra.mxu0 0.0
  %107 = vmatprep.subr.mxu0 0.0
  %108 = vmatpush1.msra.mxu0 0.0
  %109 = vmatprep.subr.mxu0 0.0
  %110 = vmatpush1.msra.mxu0 0.0
  %111 = vmatprep.subr.mxu0 0.0
  %112 = vmatpush1.msra.mxu0 0.0
  %113 = vmatprep.subr.mxu0 0.0
  %114 = vmatpush1.msra.mxu0 0.0
  %115 = vmatprep.subr.mxu0 0.0
  %116 = vmatpush1.msra.mxu0 0.0
  %117 = vmatprep.subr.mxu0 0.0
  %118 = vmatpush1.msra.mxu0 0.0
  %119 = vmatprep.subr.mxu0 0.0
  %120 = vmatpush1.msra.mxu0 0.0
  %121 = vmatprep.subr.mxu0 0.0
  %122 = vmatpush1.msra.mxu0 0.0
  %123 = vmatprep.subr.mxu0 0.0
  %124 = vmatpush1.msra.mxu0 0.0
  %125 = vmatprep.subr.mxu0 0.0
  %126 = vmatpush1.msra.mxu0 0.0
  %127 = vmatprep.mubr.f32.mxu0 0.0
  %128 = vmatmul.mubr.f32.gmra.mrb[0].mxu0 %v40
  %v129 = vpop.f32.mrb[0].mxu0
  %v130 = vadd.f32 %v31, %v129
  %v131 = vpop.f32.mrb[0].mxu0
  %v132 = vadd.f32 %v35, %v131
  %133 = vmatprep.mubr.f32.mxu0 0.0
  %134 = vmatmul.mubr.f32.gmra.mrb[0].mxu0 %v43
  %v135 = vpop.f32.mrb[0].mxu0
  %v136 = vadd.f32 %v31, %v135
  %v137 = vpop.f32.mrb[0].mxu0
  %v138 = vadd.f32 %v35, %v137
  %139 = vmatprep.mubr.f32.mxu0 0.0
  %140 = vmatmul.mubr.f32.gmra.mrb[0].mxu0 %v46
  %v141 = vpop.f32.mrb[0].mxu0
  %v142 = vadd.f32 %v31, %v141
  %v143 = vpop.f32.mrb[0].mxu0
  %v144 = vadd.f32 %v35, %v143
  %145 = vmatprep.mubr.f32.mxu0 0.0
  %146 = vmatmul.mubr.f32.gmra.mrb[0].mxu0 %v49
  %v147 = vpop.f32.mrb[0].mxu0
  %v148 = vadd.f32 %v31, %v147
  %v149 = vpop.f32.mrb[0].mxu0
  %v150 = vadd.f32 %v35, %v149
  %151 = vmatprep.mubr.f32.mxu0 0.0
  %152 = vmatmul.mubr.f32.gmra.mrb[0].mxu0 %v52
  %v153 = vpop.f32.mrb[0].mxu0
  %v154 = vadd.f32 %v31, %v153
  %v155 = vpop.f32.mrb[0].mxu0
  %v156 = vadd.f32 %v35, %v155
  %157 = vmatprep.mubr.f32.mxu0 0.0
  %158 = vmatmul.mubr.f32.gmra.mrb[0].mxu0 %v55
  %v159 = vpop.f32.mrb[0].mxu0
  %v160 = vadd.f32 %v31, %v159
  %v161 = vpop.f32.mrb[0].mxu0
  %v162 = vadd.f32 %v35, %v161
  %163 = vmatprep.mubr.f32.mxu0 0.0
  %164 = vmatmul.mubr.f32.gmra.mrb[0].mxu0 %v58
  %v165 = vpop.f32.mrb[0].mxu0
  %v166 = vadd.f32 %v31, %v165
  %v167 = vpop.f32.mrb[0].mxu0
  %v168 = vadd.f32 %v35, %v167
  %169 = vmatprep.mubr.f32.mxu0 0.0
  %170 = vmatmul.mubr.f32.gmra.mrb[0].mxu0 %v61
  %v171 = vpop.f32.mrb[0].mxu0
  %v172 = vadd.f32 %v31, %v171
  %v173 = vpop.f32.mrb[0].mxu0
  %v174 = vadd.f32 %v35, %v173
  %175 = vdwg.mxu0
  %176 = vst [vmem:[%s3] sm:$0xff] %v130
  %177 = vst [vmem:[%s3 + $0x8] sm:$0xff] %v132
  %178 = vst [vmem:[%s3 + $0x10] sm:$0xff] %v136
  %179 = vst [vmem:[%s3 + $0x18] sm:$0xff] %v138
  %180 = vst [vmem:[%s3 + $0x20] sm:$0xff] %v142
  %181 = vst [vmem:[%s3 + $0x28] sm:$0xff] %v144
  %182 = vst [vmem:[%s3 + $0x30] sm:$0xff] %v148
  %183 = vst [vmem:[%s3 + $0x38] sm:$0xff] %v150
  %184 = vst [vmem:[%s3 + $0x40] sm:$0xff] %v154
  %185 = vst [vmem:[%s3 + $0x48] sm:$0xff] %v156
  %186 = vst [vmem:[%s3 + $0x50] sm:$0xff] %v160
  %187 = vst [vmem:[%s3 + $0x58] sm:$0xff] %v162
  %188 = vst [vmem:[%s3 + $0x60] sm:$0xff] %v166
  %189 = vst [vmem:[%s3 + $0x68] sm:$0xff] %v168
  %190 = vst [vmem:[%s3 + $0x70] sm:$0xff] %v172
  %191 = vst [vmem:[%s3 + $0x78] sm:$0xff] %v174
  // Predicated region
  $region14: #{residual_bilstm_forward.9} parent=0 // pred_check
    _
  $region15: #{residual_bilstm_forward.9} parent=0 // pred_check_branch
    %193 = sbr.rel (0) target = $region17
  $region16: #{residual_bilstm_forward.9} parent=0 // pred_region
    _
  $region17: #{residual_bilstm_forward.9} parent=0 // pred_fallthru
    _
  // Predicated region
  $region18: #{residual_bilstm_forward.9} parent=0 // pred_check
    _
  $region19: #{residual_bilstm_forward.9} parent=0 // pred_check_branch
    %195 = sbr.rel (0) target = $region21
  $region20: #{residual_bilstm_forward.9} parent=0 // pred_region
    _
  $region21: #{residual_bilstm_forward.9} parent=0 // pred_fallthru
    _

// kernel: residual_bilstm_forward.12
$region0: #{residual_bilstm_forward.12}
  #allocation0 [shape = 'u32[]', space=smem, size = 0x4, offset = 0x4, fixed_abs, tag = 'smem constant byte address 0x4 - core index']
  #allocation1 [shape = 'u32[144,128]{1,0:T(1,128)}', space=vmem, size = 0x12000, scoped, tag = 'internal scratch']
  %s0 = inlined_call_operand.vmem [shape: f32[64,64], index: 0, kind: input, shape index: {}]
  %s1 = inlined_call_operand.vmem [shape: f32[64,256], index: 1, kind: input, shape index: {}]
  %s2 = inlined_call_operand.vmem [shape: f32[1,256], index: 2, kind: input, shape index: {}]
  %s3 = inlined_call_operand.vmem [shape: f32[64,256], index: 3, kind: output, shape index: {}]
  %s4 = sld [smem:[#allocation0]]
  $region22: #{residual_bilstm_forward.12} parent=0
    _
  %s6 = ssub.s32 1, %s4
  %s7 = scalar_select 0, %s6, %s4
  // Predicated region
  $region2: #{residual_bilstm_forward.12} parent=0 // pred_check
    _
  $region3: #{residual_bilstm_forward.12} parent=0 // pred_check_branch
    %9 = sbr.rel (0) target = $region5
  $region4: #{residual_bilstm_forward.12} parent=0 // pred_region
    _
  $region5: #{residual_bilstm_forward.12} parent=0 // pred_fallthru
    _
  // Predicated region
  $region6: #{residual_bilstm_forward.12} parent=0 // pred_check
    _
  $region7: #{residual_bilstm_forward.12} parent=0 // pred_check_branch
    %11 = sbr.rel (0) target = $region9
  $region8: #{residual_bilstm_forward.12} parent=0 // pred_region
    _
  $region9: #{residual_bilstm_forward.12} parent=0 // pred_fallthru
    _
  // Predicated region
  $region10: #{residual_bilstm_forward.12} parent=0 // pred_check
    _
  $region11: #{residual_bilstm_forward.12} parent=0 // pred_check_branch
    %13 = sbr.rel (0) target = $region13
  $region12: #{residual_bilstm_forward.12} parent=0 // pred_region
    _
  $region13: #{residual_bilstm_forward.12} parent=0 // pred_fallthru
    _
  %v14 = vld [vmem:[%s0] sm:$0xff]
  %v15 = vld [vmem:[%s0 + $0x8] sm:$0xff]
  %v16 = vld [vmem:[%s0 + $0x10] sm:$0xff]
  %v17 = vld [vmem:[%s0 + $0x18] sm:$0xff]
  %v18 = vld [vmem:[%s0 + $0x20] sm:$0xff]
  %v19 = vld [vmem:[%s0 + $0x28] sm:$0xff]
  %v20 = vld [vmem:[%s0 + $0x30] sm:$0xff]
  %v21 = vld [vmem:[%s0 + $0x38] sm:$0xff]
  %v22 = vld [vmem:[%s1] sm:$0xff]
  %v23 = vld [vmem:[%s1 + $0x8] sm:$0xff]
  %v24 = vld [vmem:[%s1 + $0x10] sm:$0xff]
  %v25 = vld [vmem:[%s1 + $0x18] sm:$0xff]
  %v26 = vld [vmem:[%s1 + $0x20] sm:$0xff]
  %v27 = vld [vmem:[%s1 + $0x28] sm:$0xff]
  %v28 = vld [vmem:[%s1 + $0x30] sm:$0xff]
  %v29 = vld [vmem:[%s1 + $0x38] sm:$0xff]
  %v30 = vld [vmem:[%s1 + $0x40] sm:$0xff]
  %v31 = vld [vmem:[%s1 + $0x48] sm:$0xff]
  %v32 = vld [vmem:[%s1 + $0x50] sm:$0xff]
  %v33 = vld [vmem:[%s1 + $0x58] sm:$0xff]
  %v34 = vld [vmem:[%s1 + $0x60] sm:$0xff]
  %v35 = vld [vmem:[%s1 + $0x68] sm:$0xff]
  %v36 = vld [vmem:[%s1 + $0x70] sm:$0xff]
  %v37 = vld [vmem:[%s1 + $0x78] sm:$0xff]
  %v38 = vld [vmem:[%s2] sm:$0x3]
  %v40 = vlaneseq
  %v41 = vshrl.u32 %v40, 7
  %v42 = vsub.s32 0, %v41
  %v43 = vrot.slane %v38, %v42
  %v44 = vlaneseq
  %v45 = vshrl.u32 %v44, 7
  %v46 = vsub.s32 1, %v45
  %v47 = vrot.slane %v38, %v46
  %vm50 = vcmask 523264
  %v52 = vsel %vm50, %v14, 0
  %v55 = vsel %vm50, %v15, 0
  %v58 = vsel %vm50, %v16, 0
  %v61 = vsel %vm50, %v17, 0
  %v64 = vsel %vm50, %v18, 0
  %v67 = vsel %vm50, %v19, 0
  %v70 = vsel %vm50, %v20, 0
  %v73 = vsel %vm50, %v21, 0
  %75 = vmatprep.subr.mxu0 %v23
  %76 = vmatpush1.msra.mxu0 %v22
  %77 = vmatprep.subr.mxu0 %v25
  %78 = vmatpush1.msra.mxu0 %v24
  %79 = vmatprep.subr.mxu0 %v27
  %80 = vmatpush1.msra.mxu0 %v26
  %81 = vmatprep.subr.mxu0 %v29
  %82 = vmatpush1.msra.mxu0 %v28
  %83 = vmatprep.subr.mxu0 %v31
  %84 = vmatpush1.msra.mxu0 %v30
  %85 = vmatprep.subr.mxu0 %v33
  %86 = vmatpush1.msra.mxu0 %v32
  %87 = vmatprep.subr.mxu0 %v35
  %88 = vmatpush1.msra.mxu0 %v34
  %89 = vmatprep.subr.mxu0 %v37
  %90 = vmatpush1.msra.mxu0 %v36
  %91 = vmatprep.subr.mxu0 0.0
  %92 = vmatpush1.msra.mxu0 0.0
  %93 = vmatprep.subr.mxu0 0.0
  %94 = vmatpush1.msra.mxu0 0.0
  %95 = vmatprep.subr.mxu0 0.0
  %96 = vmatpush1.msra.mxu0 0.0
  %97 = vmatprep.subr.mxu0 0.0
  %98 = vmatpush1.msra.mxu0 0.0
  %99 = vmatprep.subr.mxu0 0.0
  %100 = vmatpush1.msra.mxu0 0.0
  %101 = vmatprep.subr.mxu0 0.0
  %102 = vmatpush1.msra.mxu0 0.0
  %103 = vmatprep.subr.mxu0 0.0
  %104 = vmatpush1.msra.mxu0 0.0
  %105 = vmatprep.subr.mxu0 0.0
  %106 = vmatpush1.msra.mxu0 0.0
  %107 = vmatprep.subr.mxu0 0.0
  %108 = vmatpush1.msra.mxu0 0.0
  %109 = vmatprep.subr.mxu0 0.0
  %110 = vmatpush1.msra.mxu0 0.0
  %111 = vmatprep.subr.mxu0 0.0
  %112 = vmatpush1.msra.mxu0 0.0
  %113 = vmatprep.subr.mxu0 0.0
  %114 = vmatpush1.msra.mxu0 0.0
  %115 = vmatprep.subr.mxu0 0.0
  %116 = vmatpush1.msra.mxu0 0.0
  %117 = vmatprep.subr.mxu0 0.0
  %118 = vmatpush1.msra.mxu0 0.0
  %119 = vmatprep.subr.mxu0 0.0
  %120 = vmatpush1.msra.mxu0 0.0
  %121 = vmatprep.subr.mxu0 0.0
  %122 = vmatpush1.msra.mxu0 0.0
  %123 = vmatprep.subr.mxu0 0.0
  %124 = vmatpush1.msra.mxu0 0.0
  %125 = vmatprep.subr.mxu0 0.0
  %126 = vmatpush1.msra.mxu0 0.0
  %127 = vmatprep.subr.mxu0 0.0
  %128 = vmatpush1.msra.mxu0 0.0
  %129 = vmatprep.subr.mxu0 0.0
  %130 = vmatpush1.msra.mxu0 0.0
  %131 = vmatprep.subr.mxu0 0.0
  %132 = vmatpush1.msra.mxu0 0.0
  %133 = vmatprep.subr.mxu0 0.0
  %134 = vmatpush1.msra.mxu0 0.0
  %135 = vmatprep.subr.mxu0 0.0
  %136 = vmatpush1.msra.mxu0 0.0
  %137 = vmatprep.subr.mxu0 0.0
  %138 = vmatpush1.msra.mxu0 0.0
  %139 = vmatprep.mubr.f32.mxu0 0.0
  %140 = vmatmul.mubr.f32.gmra.mrb[0].mxu0 %v52
  %v141 = vpop.f32.mrb[0].mxu0
  %v142 = vadd.f32 %v43, %v141
  %v143 = vpop.f32.mrb[0].mxu0
  %v144 = vadd.f32 %v47, %v143
  %145 = vmatprep.mubr.f32.mxu0 0.0
  %146 = vmatmul.mubr.f32.gmra.mrb[0].mxu0 %v55
  %v147 = vpop.f32.mrb[0].mxu0
  %v148 = vadd.f32 %v43, %v147
  %v149 = vpop.f32.mrb[0].mxu0
  %v150 = vadd.f32 %v47, %v149
  %151 = vmatprep.mubr.f32.mxu0 0.0
  %152 = vmatmul.mubr.f32.gmra.mrb[0].mxu0 %v58
  %v153 = vpop.f32.mrb[0].mxu0
  %v154 = vadd.f32 %v43, %v153
  %v155 = vpop.f32.mrb[0].mxu0
  %v156 = vadd.f32 %v47, %v155
  %157 = vmatprep.mubr.f32.mxu0 0.0
  %158 = vmatmul.mubr.f32.gmra.mrb[0].mxu0 %v61
  %v159 = vpop.f32.mrb[0].mxu0
  %v160 = vadd.f32 %v43, %v159
  %v161 = vpop.f32.mrb[0].mxu0
  %v162 = vadd.f32 %v47, %v161
  %163 = vmatprep.mubr.f32.mxu0 0.0
  %164 = vmatmul.mubr.f32.gmra.mrb[0].mxu0 %v64
  %v165 = vpop.f32.mrb[0].mxu0
  %v166 = vadd.f32 %v43, %v165
  %v167 = vpop.f32.mrb[0].mxu0
  %v168 = vadd.f32 %v47, %v167
  %169 = vmatprep.mubr.f32.mxu0 0.0
  %170 = vmatmul.mubr.f32.gmra.mrb[0].mxu0 %v67
  %v171 = vpop.f32.mrb[0].mxu0
  %v172 = vadd.f32 %v43, %v171
  %v173 = vpop.f32.mrb[0].mxu0
  %v174 = vadd.f32 %v47, %v173
  %175 = vmatprep.mubr.f32.mxu0 0.0
  %176 = vmatmul.mubr.f32.gmra.mrb[0].mxu0 %v70
  %v177 = vpop.f32.mrb[0].mxu0
  %v178 = vadd.f32 %v43, %v177
  %v179 = vpop.f32.mrb[0].mxu0
  %v180 = vadd.f32 %v47, %v179
  %181 = vmatprep.mubr.f32.mxu0 0.0
  %182 = vmatmul.mubr.f32.gmra.mrb[0].mxu0 %v73
  %v183 = vpop.f32.mrb[0].mxu0
  %v184 = vadd.f32 %v43, %v183
  %v185 = vpop.f32.mrb[0].mxu0
  %v186 = vadd.f32 %v47, %v185
  %187 = vdwg.mxu0
  %188 = vst [vmem:[%s3] sm:$0xff] %v142
  %189 = vst [vmem:[%s3 + $0x8] sm:$0xff] %v144
  %190 = vst [vmem:[%s3 + $0x10] sm:$0xff] %v148
  %191 = vst [vmem:[%s3 + $0x18] sm:$0xff] %v150
  %192 = vst [vmem:[%s3 + $0x20] sm:$0xff] %v154
  %193 = vst [vmem:[%s3 + $0x28] sm:$0xff] %v156
  %194 = vst [vmem:[%s3 + $0x30] sm:$0xff] %v160
  %195 = vst [vmem:[%s3 + $0x38] sm:$0xff] %v162
  %196 = vst [vmem:[%s3 + $0x40] sm:$0xff] %v166
  %197 = vst [vmem:[%s3 + $0x48] sm:$0xff] %v168
  %198 = vst [vmem:[%s3 + $0x50] sm:$0xff] %v172
  %199 = vst [vmem:[%s3 + $0x58] sm:$0xff] %v174
  %200 = vst [vmem:[%s3 + $0x60] sm:$0xff] %v178
  %201 = vst [vmem:[%s3 + $0x68] sm:$0xff] %v180
  %202 = vst [vmem:[%s3 + $0x70] sm:$0xff] %v184
  %203 = vst [vmem:[%s3 + $0x78] sm:$0xff] %v186
  // Predicated region
  $region14: #{residual_bilstm_forward.12} parent=0 // pred_check
    _
  $region15: #{residual_bilstm_forward.12} parent=0 // pred_check_branch
    %205 = sbr.rel (0) target = $region17
  $region16: #{residual_bilstm_forward.12} parent=0 // pred_region
    _
  $region17: #{residual_bilstm_forward.12} parent=0 // pred_fallthru
    _
  // Predicated region
  $region18: #{residual_bilstm_forward.12} parent=0 // pred_check
    _
  $region19: #{residual_bilstm_forward.12} parent=0 // pred_check_branch
    %207 = sbr.rel (0) target = $region21
  $region20: #{residual_bilstm_forward.12} parent=0 // pred_region
    _
  $region21: #{residual_bilstm_forward.12} parent=0 // pred_fallthru
    _

// kernel: residual_bilstm_forward.11
$region0: #{residual_bilstm_forward.11}
  #allocation0 [shape = 'u32[]', space=smem, size = 0x4, offset = 0x4, fixed_abs, tag = 'smem constant byte address 0x4 - core index']
  #allocation1 [shape = 'u32[144,128]{1,0:T(1,128)}', space=vmem, size = 0x12000, scoped, tag = 'internal scratch']
  %s0 = inlined_call_operand.vmem [shape: f32[64,32], index: 0, kind: input, shape index: {}]
  %s1 = inlined_call_operand.vmem [shape: f32[64,32], index: 1, kind: input, shape index: {}]
  %s2 = inlined_call_operand.vmem [shape: f32[64,16], index: 2, kind: input, shape index: {}]
  %s3 = inlined_call_operand.vmem [shape: f32[16,64], index: 3, kind: input, shape index: {}]
  %s4 = inlined_call_operand.vmem [shape: f32[64,64], index: 4, kind: output, shape index: {}]
  %s5 = sld [smem:[#allocation0]]
  $region26: #{residual_bilstm_forward.11} parent=0
    _
  %s7 = ssub.s32 1, %s5
  %s8 = scalar_select 0, %s7, %s5
  // Predicated region
  $region2: #{residual_bilstm_forward.11} parent=0 // pred_check
    _
  $region3: #{residual_bilstm_forward.11} parent=0 // pred_check_branch
    %10 = sbr.rel (0) target = $region5
  $region4: #{residual_bilstm_forward.11} parent=0 // pred_region
    _
  $region5: #{residual_bilstm_forward.11} parent=0 // pred_fallthru
    _
  // Predicated region
  $region6: #{residual_bilstm_forward.11} parent=0 // pred_check
    _
  $region7: #{residual_bilstm_forward.11} parent=0 // pred_check_branch
    %12 = sbr.rel (0) target = $region9
  $region8: #{residual_bilstm_forward.11} parent=0 // pred_region
    _
  $region9: #{residual_bilstm_forward.11} parent=0 // pred_fallthru
    _
  // Predicated region
  $region10: #{residual_bilstm_forward.11} parent=0 // pred_check
    _
  $region11: #{residual_bilstm_forward.11} parent=0 // pred_check_branch
    %14 = sbr.rel (0) target = $region13
  $region12: #{residual_bilstm_forward.11} parent=0 // pred_region
    _
  $region13: #{residual_bilstm_forward.11} parent=0 // pred_fallthru
    _
  // Predicated region
  $region14: #{residual_bilstm_forward.11} parent=0 // pred_check
    _
  $region15: #{residual_bilstm_forward.11} parent=0 // pred_check_branch
    %16 = sbr.rel (0) target = $region17
  $region16: #{residual_bilstm_forward.11} parent=0 // pred_region
    _
  $region17: #{residual_bilstm_forward.11} parent=0 // pred_fallthru
    _
  %v17 = vld [vmem:[%s0] sm:$0xff]
  %v18 = vld [vmem:[%s0 + $0x8] sm:$0xff]
  %v19 = vld [vmem:[%s0 + $0x10] sm:$0xff]
  %v20 = vld [vmem:[%s0 + $0x18] sm:$0xff]
  %v21 = vld [vmem:[%s0 + $0x20] sm:$0xff]
  %v22 = vld [vmem:[%s0 + $0x28] sm:$0xff]
  %v23 = vld [vmem:[%s0 + $0x30] sm:$0xff]
  %v24 = vld [vmem:[%s0 + $0x38] sm:$0xff]
  %v25 = vld [vmem:[%s1] sm:$0xff]
  %v26 = vld [vmem:[%s1 + $0x8] sm:$0xff]
  %v27 = vld [vmem:[%s1 + $0x10] sm:$0xff]
  %v28 = vld [vmem:[%s1 + $0x18] sm:$0xff]
  %v29 = vld [vmem:[%s1 + $0x20] sm:$0xff]
  %v30 = vld [vmem:[%s1 + $0x28] sm:$0xff]
  %v31 = vld [vmem:[%s1 + $0x30] sm:$0xff]
  %v32 = vld [vmem:[%s1 + $0x38] sm:$0xff]
  %41 = vrot.lane.b32.xlu0 %v25, 32
  %v42 = vpop.permute.xlu0 %41
  %43 = vrot.lane.b32.xlu0 %v26, 32
  %v44 = vpop.permute.xlu0 %43
  %45 = vrot.lane.b32.xlu0 %v27, 32
  %v46 = vpop.permute.xlu0 %45
  %47 = vrot.lane.b32.xlu0 %v28, 32
  %v48 = vpop.permute.xlu0 %47
  %49 = vrot.lane.b32.xlu0 %v29, 32
  %v50 = vpop.permute.xlu0 %49
  %51 = vrot.lane.b32.xlu0 %v30, 32
  %v52 = vpop.permute.xlu0 %51
  %53 = vrot.lane.b32.xlu0 %v31, 32
  %v54 = vpop.permute.xlu0 %53
  %55 = vrot.lane.b32.xlu0 %v32, 32
  %v56 = vpop.permute.xlu0 %55
  %vm65 = vcmask 261120
  %v66 = vsel %vm65, %v17, %v42
  %v67 = vsel %vm65, %v18, %v44
  %v68 = vsel %vm65, %v19, %v46
  %v69 = vsel %vm65, %v20, %v48
  %v70 = vsel %vm65, %v21, %v50
  %v71 = vsel %vm65, %v22, %v52
  %v72 = vsel %vm65, %v23, %v54
  %v73 = vsel %vm65, %v24, %v56
  %v74 = vld [vmem:[%s2] sm:$0xff]
  %v75 = vld [vmem:[%s2 + $0x8] sm:$0xff]
  %v76 = vld [vmem:[%s2 + $0x10] sm:$0xff]
  %v77 = vld [vmem:[%s2 + $0x18] sm:$0xff]
  %v78 = vld [vmem:[%s2 + $0x20] sm:$0xff]
  %v79 = vld [vmem:[%s2 + $0x28] sm:$0xff]
  %v80 = vld [vmem:[%s2 + $0x30] sm:$0xff]
  %v81 = vld [vmem:[%s2 + $0x38] sm:$0xff]
  %v82 = vld [vmem:[%s3] sm:$0xff]
  %v83 = vld [vmem:[%s3 + $0x8] sm:$0xff]
  %vm84 = vcmask 130048
  %v86 = vsel %vm84, %v74, 0
  %v89 = vsel %vm84, %v75, 0
  %v92 = vsel %vm84, %v76, 0
  %v95 = vsel %vm84, %v77, 0
  %v98 = vsel %vm84, %v78, 0
  %v101 = vsel %vm84, %v79, 0
  %v104 = vsel %vm84, %v80, 0
  %v107 = vsel %vm84, %v81, 0
  %109 = vmatprep.subr.mxu0 0.0
  %110 = vmatpush1.msra.mxu0 %v82
  %111 = vmatprep.subr.mxu0 0.0
  %112 = vmatpush1.msra.mxu0 %v83
  %113 = vmatprep.subr.mxu0 0.0
  %114 = vmatpush1.msra.mxu0 0.0
  %115 = vmatprep.subr.mxu0 0.0
  %116 = vmatpush1.msra.mxu0 0.0
  %117 = vmatprep.subr.mxu0 0.0
  %118 = vmatpush1.msra.mxu0 0.0
  %119 = vmatprep.subr.mxu0 0.0
  %120 = vmatpush1.msra.mxu0 0.0
  %121 = vmatprep.subr.mxu0 0.0
  %122 = vmatpush1.msra.mxu0 0.0
  %123 = vmatprep.subr.mxu0 0.0
  %124 = vmatpush1.msra.mxu0 0.0
  %125 = vmatprep.subr.mxu0 0.0
  %126 = vmatpush1.msra.mxu0 0.0
  %127 = vmatprep.subr.mxu0 0.0
  %128 = vmatpush1.msra.mxu0 0.0
  %129 = vmatprep.subr.mxu0 0.0
  %130 = vmatpush1.msra.mxu0 0.0
  %131 = vmatprep.subr.mxu0 0.0
  %132 = vmatpush1.msra.mxu0 0.0
  %133 = vmatprep.subr.mxu0 0.0
  %134 = vmatpush1.msra.mxu0 0.0
  %135 = vmatprep.subr.mxu0 0.0
  %136 = vmatpush1.msra.mxu0 0.0
  %137 = vmatprep.subr.mxu0 0.0
  %138 = vmatpush1.msra.mxu0 0.0
  %139 = vmatprep.subr.mxu0 0.0
  %140 = vmatpush1.msra.mxu0 0.0
  %141 = vmatprep.subr.mxu0 0.0
  %142 = vmatpush1.msra.mxu0 0.0
  %143 = vmatprep.subr.mxu0 0.0
  %144 = vmatpush1.msra.mxu0 0.0
  %145 = vmatprep.subr.mxu0 0.0
  %146 = vmatpush1.msra.mxu0 0.0
  %147 = vmatprep.subr.mxu0 0.0
  %148 = vmatpush1.msra.mxu0 0.0
  %149 = vmatprep.subr.mxu0 0.0
  %150 = vmatpush1.msra.mxu0 0.0
  %151 = vmatprep.subr.mxu0 0.0
  %152 = vmatpush1.msra.mxu0 0.0
  %153 = vmatprep.subr.mxu0 0.0
  %154 = vmatpush1.msra.mxu0 0.0
  %155 = vmatprep.subr.mxu0 0.0
  %156 = vmatpush1.msra.mxu0 0.0
  %157 = vmatprep.subr.mxu0 0.0
  %158 = vmatpush1.msra.mxu0 0.0
  %159 = vmatprep.subr.mxu0 0.0
  %160 = vmatpush1.msra.mxu0 0.0
  %161 = vmatprep.subr.mxu0 0.0
  %162 = vmatpush1.msra.mxu0 0.0
  %163 = vmatprep.subr.mxu0 0.0
  %164 = vmatpush1.msra.mxu0 0.0
  %165 = vmatprep.subr.mxu0 0.0
  %166 = vmatpush1.msra.mxu0 0.0
  %167 = vmatprep.subr.mxu0 0.0
  %168 = vmatpush1.msra.mxu0 0.0
  %169 = vmatprep.subr.mxu0 0.0
  %170 = vmatpush1.msra.mxu0 0.0
  %171 = vmatprep.subr.mxu0 0.0
  %172 = vmatpush1.msra.mxu0 0.0
  %173 = vmatprep.mubr.f32.mxu0 0.0
  %174 = vmatmul.mubr.f32.gmra.mrb[0].mxu0 %v86
  %v175 = vpop.f32.mrb[0].mxu0
  %v176 = vadd.f32 0.0, %v175
  %v177 = vpop.f32.mrb[0].mxu0
  %178 = vmatprep.mubr.f32.mxu0 0.0
  %179 = vmatmul.mubr.f32.gmra.mrb[0].mxu0 %v89
  %v180 = vpop.f32.mrb[0].mxu0
  %v181 = vadd.f32 0.0, %v180
  %v182 = vpop.f32.mrb[0].mxu0
  %183 = vmatprep.mubr.f32.mxu0 0.0
  %184 = vmatmul.mubr.f32.gmra.mrb[0].mxu0 %v92
  %v185 = vpop.f32.mrb[0].mxu0
  %v186 = vadd.f32 0.0, %v185
  %v187 = vpop.f32.mrb[0].mxu0
  %188 = vmatprep.mubr.f32.mxu0 0.0
  %189 = vmatmul.mubr.f32.gmra.mrb[0].mxu0 %v95
  %v190 = vpop.f32.mrb[0].mxu0
  %v191 = vadd.f32 0.0, %v190
  %v192 = vpop.f32.mrb[0].mxu0
  %193 = vmatprep.mubr.f32.mxu0 0.0
  %194 = vmatmul.mubr.f32.gmra.mrb[0].mxu0 %v98
  %v195 = vpop.f32.mrb[0].mxu0
  %v196 = vadd.f32 0.0, %v195
  %v197 = vpop.f32.mrb[0].mxu0
  %198 = vmatprep.mubr.f32.mxu0 0.0
  %199 = vmatmul.mubr.f32.gmra.mrb[0].mxu0 %v101
  %v200 = vpop.f32.mrb[0].mxu0
  %v201 = vadd.f32 0.0, %v200
  %v202 = vpop.f32.mrb[0].mxu0
  %203 = vmatprep.mubr.f32.mxu0 0.0
  %204 = vmatmul.mubr.f32.gmra.mrb[0].mxu0 %v104
  %v205 = vpop.f32.mrb[0].mxu0
  %v206 = vadd.f32 0.0, %v205
  %v207 = vpop.f32.mrb[0].mxu0
  %208 = vmatprep.mubr.f32.mxu0 0.0
  %209 = vmatmul.mubr.f32.gmra.mrb[0].mxu0 %v107
  %v210 = vpop.f32.mrb[0].mxu0
  %v211 = vadd.f32 0.0, %v210
  %v212 = vpop.f32.mrb[0].mxu0
  %213 = vdwg.mxu0
  %v214 = vadd.f32 %v66, %v176
  %v215 = vadd.f32 %v67, %v181
  %v216 = vadd.f32 %v68, %v186
  %v217 = vadd.f32 %v69, %v191
  %v218 = vadd.f32 %v70, %v196
  %v219 = vadd.f32 %v71, %v201
  %v220 = vadd.f32 %v72, %v206
  %v221 = vadd.f32 %v73, %v211
  %vm222 = vcmask 523264
  %223 = vst.msk [vmem:[%s4] sm:$0xff] %vm222, %v214
  %224 = vst.msk [vmem:[%s4 + $0x8] sm:$0xff] %vm222, %v215
  %225 = vst.msk [vmem:[%s4 + $0x10] sm:$0xff] %vm222, %v216
  %226 = vst.msk [vmem:[%s4 + $0x18] sm:$0xff] %vm222, %v217
  %227 = vst.msk [vmem:[%s4 + $0x20] sm:$0xff] %vm222, %v218
  %228 = vst.msk [vmem:[%s4 + $0x28] sm:$0xff] %vm222, %v219
  %229 = vst.msk [vmem:[%s4 + $0x30] sm:$0xff] %vm222, %v220
  %230 = vst.msk [vmem:[%s4 + $0x38] sm:$0xff] %vm222, %v221
  // Predicated region
  $region18: #{residual_bilstm_forward.11} parent=0 // pred_check
    _
  $region19: #{residual_bilstm_forward.11} parent=0 // pred_check_branch
    %232 = sbr.rel (0) target = $region21
  $region20: #{residual_bilstm_forward.11} parent=0 // pred_region
    _
  $region21: #{residual_bilstm_forward.11} parent=0 // pred_fallthru
    _
  // Predicated region
  $region22: #{residual_bilstm_forward.11} parent=0 // pred_check
    _
  $region23: #{residual_bilstm_forward.11} parent=0 // pred_check_branch
    %234 = sbr.rel (0) target = $region25
  $region24: #{residual_bilstm_forward.11} parent=0 // pred_region
    _
  $region25: #{residual_bilstm_forward.11} parent=0 // pred_fallthru
    _

// kernel: residual_bilstm_forward.14
$region0: #{residual_bilstm_forward.14}
  #allocation0 [shape = 'u32[]', space=smem, size = 0x4, offset = 0x4, fixed_abs, tag = 'smem constant byte address 0x4 - core index']
  #allocation1 [shape = 'u32[144,128]{1,0:T(1,128)}', space=vmem, size = 0x12000, scoped, tag = 'internal scratch']
  %s0 = inlined_call_operand.vmem [shape: f32[64,32], index: 0, kind: input, shape index: {}]
  %s1 = inlined_call_operand.vmem [shape: f32[64,32], index: 1, kind: input, shape index: {}]
  %s2 = inlined_call_operand.vmem [shape: f32[64,32], index: 2, kind: input, shape index: {}]
  %s3 = inlined_call_operand.vmem [shape: f32[64,32], index: 3, kind: input, shape index: {}]
  %s4 = inlined_call_operand.vmem [shape: f32[64,64], index: 4, kind: output, shape index: {}]
  %s5 = sld [smem:[#allocation0]]
  $region26: #{residual_bilstm_forward.14} parent=0
    _
  %s7 = ssub.s32 1, %s5
  %s8 = scalar_select 0, %s7, %s5
  // Predicated region
  $region2: #{residual_bilstm_forward.14} parent=0 // pred_check
    _
  $region3: #{residual_bilstm_forward.14} parent=0 // pred_check_branch
    %10 = sbr.rel (0) target = $region5
  $region4: #{residual_bilstm_forward.14} parent=0 // pred_region
    _
  $region5: #{residual_bilstm_forward.14} parent=0 // pred_fallthru
    _
  // Predicated region
  $region6: #{residual_bilstm_forward.14} parent=0 // pred_check
    _
  $region7: #{residual_bilstm_forward.14} parent=0 // pred_check_branch
    %12 = sbr.rel (0) target = $region9
  $region8: #{residual_bilstm_forward.14} parent=0 // pred_region
    _
  $region9: #{residual_bilstm_forward.14} parent=0 // pred_fallthru
    _
  // Predicated region
  $region10: #{residual_bilstm_forward.14} parent=0 // pred_check
    _
  $region11: #{residual_bilstm_forward.14} parent=0 // pred_check_branch
    %14 = sbr.rel (0) target = $region13
  $region12: #{residual_bilstm_forward.14} parent=0 // pred_region
    _
  $region13: #{residual_bilstm_forward.14} parent=0 // pred_fallthru
    _
  // Predicated region
  $region14: #{residual_bilstm_forward.14} parent=0 // pred_check
    _
  $region15: #{residual_bilstm_forward.14} parent=0 // pred_check_branch
    %16 = sbr.rel (0) target = $region17
  $region16: #{residual_bilstm_forward.14} parent=0 // pred_region
    _
  $region17: #{residual_bilstm_forward.14} parent=0 // pred_fallthru
    _
  %v17 = vld [vmem:[%s0] sm:$0xff]
  %v18 = vld [vmem:[%s0 + $0x8] sm:$0xff]
  %v19 = vld [vmem:[%s0 + $0x10] sm:$0xff]
  %v20 = vld [vmem:[%s0 + $0x18] sm:$0xff]
  %v21 = vld [vmem:[%s0 + $0x20] sm:$0xff]
  %v22 = vld [vmem:[%s0 + $0x28] sm:$0xff]
  %v23 = vld [vmem:[%s0 + $0x30] sm:$0xff]
  %v24 = vld [vmem:[%s0 + $0x38] sm:$0xff]
  %v25 = vld [vmem:[%s2] sm:$0xff]
  %v26 = vld [vmem:[%s2 + $0x8] sm:$0xff]
  %v27 = vld [vmem:[%s2 + $0x10] sm:$0xff]
  %v28 = vld [vmem:[%s2 + $0x18] sm:$0xff]
  %v29 = vld [vmem:[%s2 + $0x20] sm:$0xff]
  %v30 = vld [vmem:[%s2 + $0x28] sm:$0xff]
  %v31 = vld [vmem:[%s2 + $0x30] sm:$0xff]
  %v32 = vld [vmem:[%s2 + $0x38] sm:$0xff]
  %v33 = vadd.f32 %v17, %v25
  %v34 = vadd.f32 %v18, %v26
  %v35 = vadd.f32 %v19, %v27
  %v36 = vadd.f32 %v20, %v28
  %v37 = vadd.f32 %v21, %v29
  %v38 = vadd.f32 %v22, %v30
  %v39 = vadd.f32 %v23, %v31
  %v40 = vadd.f32 %v24, %v32
  %v41 = vld [vmem:[%s1] sm:$0xff]
  %v42 = vld [vmem:[%s1 + $0x8] sm:$0xff]
  %v43 = vld [vmem:[%s1 + $0x10] sm:$0xff]
  %v44 = vld [vmem:[%s1 + $0x18] sm:$0xff]
  %v45 = vld [vmem:[%s1 + $0x20] sm:$0xff]
  %v46 = vld [vmem:[%s1 + $0x28] sm:$0xff]
  %v47 = vld [vmem:[%s1 + $0x30] sm:$0xff]
  %v48 = vld [vmem:[%s1 + $0x38] sm:$0xff]
  %v49 = vld [vmem:[%s3] sm:$0xff]
  %v50 = vld [vmem:[%s3 + $0x8] sm:$0xff]
  %v51 = vld [vmem:[%s3 + $0x10] sm:$0xff]
  %v52 = vld [vmem:[%s3 + $0x18] sm:$0xff]
  %v53 = vld [vmem:[%s3 + $0x20] sm:$0xff]
  %v54 = vld [vmem:[%s3 + $0x28] sm:$0xff]
  %v55 = vld [vmem:[%s3 + $0x30] sm:$0xff]
  %v56 = vld [vmem:[%s3 + $0x38] sm:$0xff]
  %v57 = vadd.f32 %v41, %v49
  %v58 = vadd.f32 %v42, %v50
  %v59 = vadd.f32 %v43, %v51
  %v60 = vadd.f32 %v44, %v52
  %v61 = vadd.f32 %v45, %v53
  %v62 = vadd.f32 %v46, %v54
  %v63 = vadd.f32 %v47, %v55
  %v64 = vadd.f32 %v48, %v56
  %73 = vrot.lane.b32.xlu0 %v57, 32
  %v74 = vpop.permute.xlu0 %73
  %75 = vrot.lane.b32.xlu0 %v58, 32
  %v76 = vpop.permute.xlu0 %75
  %77 = vrot.lane.b32.xlu0 %v59, 32
  %v78 = vpop.permute.xlu0 %77
  %79 = vrot.lane.b32.xlu0 %v60, 32
  %v80 = vpop.permute.xlu0 %79
  %81 = vrot.lane.b32.xlu0 %v61, 32
  %v82 = vpop.permute.xlu0 %81
  %83 = vrot.lane.b32.xlu0 %v62, 32
  %v84 = vpop.permute.xlu0 %83
  %85 = vrot.lane.b32.xlu0 %v63, 32
  %v86 = vpop.permute.xlu0 %85
  %87 = vrot.lane.b32.xlu0 %v64, 32
  %v88 = vpop.permute.xlu0 %87
  %vm97 = vcmask 261120
  %v98 = vsel %vm97, %v33, %v74
  %v99 = vsel %vm97, %v34, %v76
  %v100 = vsel %vm97, %v35, %v78
  %v101 = vsel %vm97, %v36, %v80
  %v102 = vsel %vm97, %v37, %v82
  %v103 = vsel %vm97, %v38, %v84
  %v104 = vsel %vm97, %v39, %v86
  %v105 = vsel %vm97, %v40, %v88
  %vm106 = vcmask 523264
  %107 = vst.msk [vmem:[%s4] sm:$0xff] %vm106, %v98
  %108 = vst.msk [vmem:[%s4 + $0x8] sm:$0xff] %vm106, %v99
  %109 = vst.msk [vmem:[%s4 + $0x10] sm:$0xff] %vm106, %v100
  %110 = vst.msk [vmem:[%s4 + $0x18] sm:$0xff] %vm106, %v101
  %111 = vst.msk [vmem:[%s4 + $0x20] sm:$0xff] %vm106, %v102
  %112 = vst.msk [vmem:[%s4 + $0x28] sm:$0xff] %vm106, %v103
  %113 = vst.msk [vmem:[%s4 + $0x30] sm:$0xff] %vm106, %v104
  %114 = vst.msk [vmem:[%s4 + $0x38] sm:$0xff] %vm106, %v105
  // Predicated region
  $region18: #{residual_bilstm_forward.14} parent=0 // pred_check
    _
  $region19: #{residual_bilstm_forward.14} parent=0 // pred_check_branch
    %116 = sbr.rel (0) target = $region21
  $region20: #{residual_bilstm_forward.14} parent=0 // pred_region
    _
  $region21: #{residual_bilstm_forward.14} parent=0 // pred_fallthru
    _
  // Predicated region
  $region22: #{residual_bilstm_forward.14} parent=0 // pred_check
    _
  $region23: #{residual_bilstm_forward.14} parent=0 // pred_check_branch
    %118 = sbr.rel (0) target = $region25
  $region24: #{residual_bilstm_forward.14} parent=0 // pred_region
    _
  $region25: #{residual_bilstm_forward.14} parent=0 // pred_fallthru
    _

// kernel: residual_bilstm_forward.17
$region0: #{residual_bilstm_forward.17}
  #allocation0 [shape = 'u32[]', space=smem, size = 0x4, offset = 0x4, fixed_abs, tag = 'smem constant byte address 0x4 - core index']
  #allocation1 [shape = 'u32[144,128]{1,0:T(1,128)}', space=vmem, size = 0x12000, scoped, tag = 'internal scratch']
  %s0 = inlined_call_operand.vmem [shape: f32[64,32], index: 0, kind: input, shape index: {}]
  %s1 = inlined_call_operand.vmem [shape: f32[64,32], index: 1, kind: input, shape index: {}]
  %s2 = inlined_call_operand.vmem [shape: f32[64,64], index: 2, kind: output, shape index: {}]
  %s3 = sld [smem:[#allocation0]]
  $region18: #{residual_bilstm_forward.17} parent=0
    _
  %s5 = ssub.s32 1, %s3
  %s6 = scalar_select 0, %s5, %s3
  // Predicated region
  $region2: #{residual_bilstm_forward.17} parent=0 // pred_check
    _
  $region3: #{residual_bilstm_forward.17} parent=0 // pred_check_branch
    %8 = sbr.rel (0) target = $region5
  $region4: #{residual_bilstm_forward.17} parent=0 // pred_region
    _
  $region5: #{residual_bilstm_forward.17} parent=0 // pred_fallthru
    _
  // Predicated region
  $region6: #{residual_bilstm_forward.17} parent=0 // pred_check
    _
  $region7: #{residual_bilstm_forward.17} parent=0 // pred_check_branch
    %10 = sbr.rel (0) target = $region9
  $region8: #{residual_bilstm_forward.17} parent=0 // pred_region
    _
  $region9: #{residual_bilstm_forward.17} parent=0 // pred_fallthru
    _
  %v11 = vld [vmem:[%s0] sm:$0xff]
  %v12 = vld [vmem:[%s0 + $0x8] sm:$0xff]
  %v13 = vld [vmem:[%s0 + $0x10] sm:$0xff]
  %v14 = vld [vmem:[%s0 + $0x18] sm:$0xff]
  %v15 = vld [vmem:[%s0 + $0x20] sm:$0xff]
  %v16 = vld [vmem:[%s0 + $0x28] sm:$0xff]
  %v17 = vld [vmem:[%s0 + $0x30] sm:$0xff]
  %v18 = vld [vmem:[%s0 + $0x38] sm:$0xff]
  %v19 = vld [vmem:[%s1] sm:$0xff]
  %v20 = vld [vmem:[%s1 + $0x8] sm:$0xff]
  %v21 = vld [vmem:[%s1 + $0x10] sm:$0xff]
  %v22 = vld [vmem:[%s1 + $0x18] sm:$0xff]
  %v23 = vld [vmem:[%s1 + $0x20] sm:$0xff]
  %v24 = vld [vmem:[%s1 + $0x28] sm:$0xff]
  %v25 = vld [vmem:[%s1 + $0x30] sm:$0xff]
  %v26 = vld [vmem:[%s1 + $0x38] sm:$0xff]
  %35 = vrot.lane.b32.xlu0 %v19, 32
  %v36 = vpop.permute.xlu0 %35
  %37 = vrot.lane.b32.xlu0 %v20, 32
  %v38 = vpop.permute.xlu0 %37
  %39 = vrot.lane.b32.xlu0 %v21, 32
  %v40 = vpop.permute.xlu0 %39
  %41 = vrot.lane.b32.xlu0 %v22, 32
  %v42 = vpop.permute.xlu0 %41
  %43 = vrot.lane.b32.xlu0 %v23, 32
  %v44 = vpop.permute.xlu0 %43
  %45 = vrot.lane.b32.xlu0 %v24, 32
  %v46 = vpop.permute.xlu0 %45
  %47 = vrot.lane.b32.xlu0 %v25, 32
  %v48 = vpop.permute.xlu0 %47
  %49 = vrot.lane.b32.xlu0 %v26, 32
  %v50 = vpop.permute.xlu0 %49
  %vm59 = vcmask 261120
  %v60 = vsel %vm59, %v11, %v36
  %v61 = vsel %vm59, %v12, %v38
  %v62 = vsel %vm59, %v13, %v40
  %v63 = vsel %vm59, %v14, %v42
  %v64 = vsel %vm59, %v15, %v44
  %v65 = vsel %vm59, %v16, %v46
  %v66 = vsel %vm59, %v17, %v48
  %v67 = vsel %vm59, %v18, %v50
  %vm68 = vcmask 523264
  %69 = vst.msk [vmem:[%s2] sm:$0xff] %vm68, %v60
  %70 = vst.msk [vmem:[%s2 + $0x8] sm:$0xff] %vm68, %v61
  %71 = vst.msk [vmem:[%s2 + $0x10] sm:$0xff] %vm68, %v62
  %72 = vst.msk [vmem:[%s2 + $0x18] sm:$0xff] %vm68, %v63
  %73 = vst.msk [vmem:[%s2 + $0x20] sm:$0xff] %vm68, %v64
  %74 = vst.msk [vmem:[%s2 + $0x28] sm:$0xff] %vm68, %v65
  %75 = vst.msk [vmem:[%s2 + $0x30] sm:$0xff] %vm68, %v66
  %76 = vst.msk [vmem:[%s2 + $0x38] sm:$0xff] %vm68, %v67
  // Predicated region
  $region10: #{residual_bilstm_forward.17} parent=0 // pred_check
    _
  $region11: #{residual_bilstm_forward.17} parent=0 // pred_check_branch
    %78 = sbr.rel (0) target = $region13
  $region12: #{residual_bilstm_forward.17} parent=0 // pred_region
    _
  $region13: #{residual_bilstm_forward.17} parent=0 // pred_fallthru
    _
  // Predicated region
  $region14: #{residual_bilstm_forward.17} parent=0 // pred_check
    _
  $region15: #{residual_bilstm_forward.17} parent=0 // pred_check_branch
    %80 = sbr.rel (0) target = $region17
  $region16: #{residual_bilstm_forward.17} parent=0 // pred_region
    _
  $region17: #{residual_bilstm_forward.17} parent=0 // pred_fallthru
    _

// kernel: residual_bilstm_forward.10
$region0: #{residual_bilstm_forward.10}
  #allocation0 [shape = 'u32[]', space=smem, size = 0x4, offset = 0x4, fixed_abs, tag = 'smem constant byte address 0x4 - core index']
  #allocation1 [shape = 'u32[144,128]{1,0:T(1,128)}', space=vmem, size = 0x12000, scoped, tag = 'internal scratch']
  #allocation2 [shape = 'f32[2,8,32]{2,1,0:T(8,128)}', space=vmem, size = 0x2000, scoped, tag = 'scratch operand']
  #allocation3 [shape = 'f32[2,8,32]{2,1,0:T(8,128)}', space=vmem, size = 0x2000, scoped, tag = 'scratch operand']
  %s0 = inlined_call_operand.vmem [shape: f32[8,8,256], index: 0, kind: input, shape index: {}, may-alias: {0,1}]
  %s1 = inlined_call_operand.vmem [shape: f32[8,8,256], index: 1, kind: input, shape index: {}, may-alias: {0,1}]
  %s2 = inlined_call_operand.vmem [shape: f32[32,128], index: 2, kind: input, shape index: {}]
  %s3 = inlined_call_operand.vmem [shape: f32[32,128], index: 3, kind: input, shape index: {}]
  %s4 = inlined_call_operand.vmem [shape: f32[8,8,32], index: 4, kind: output, shape index: {0}]
  %s5 = inlined_call_operand.vmem [shape: f32[8,8,32], index: 5, kind: output, shape index: {1}]
  %s6 = inlined_call_operand.vmem [shape: f32[2,8,32], index: 6, kind: output, shape index: {2}]
  %s7 = inlined_call_operand.vmem [shape: f32[2,8,32], index: 7, kind: output, shape index: {3}]
  %8 = xla_tuple %s4, %s5, %s6, %s7
  %s9 = sld [smem:[#allocation0]]
  $region134: #{residual_bilstm_forward.10} parent=0
    _
  %s11 = ssub.s32 1, %s9
  %s12 = scalar_select 0, %s11, %s9
  $region1: #{residual_bilstm_forward.10} parent=0
    #allocation4 [shape = 'u8[32768]{0}', space=vmem, size = 0x8000, scoped, tag = 'input window, operand 0, single buffered']
    #allocation5 [shape = 'u8[32768]{0}', space=vmem, size = 0x8000, scoped, tag = 'input window, operand 1, single buffered']
    // Predicated region
    $region2: #{residual_bilstm_forward.10} parent=1 // pred_check
      _
    $region3: #{residual_bilstm_forward.10} parent=1 // pred_check_branch
      %14 = sbr.rel (0) target = $region5
    $region4: #{residual_bilstm_forward.10} parent=1 // pred_region
      // Predicated region
      $region6: #{residual_bilstm_forward.10} parent=4 // pred_check
        _
      $region7: #{residual_bilstm_forward.10} parent=4 // pred_check_branch
        %16 = sbr.rel (0) target = $region9
      $region8: #{residual_bilstm_forward.10} parent=4 // pred_region
        // Predicated region
        $region10: #{residual_bilstm_forward.10} parent=8 // pred_check
          _
        $region11: #{residual_bilstm_forward.10} parent=8 // pred_check_branch
          %18 = sbr.rel (0) target = $region13
        $region12: #{residual_bilstm_forward.10} parent=8 // pred_region
          // Predicated region
          $region25: #{residual_bilstm_forward.10} parent=12 // pred_check
            _
          $region26: #{residual_bilstm_forward.10} parent=12 // pred_check_branch
            %47 = sbr.rel (0) target = $region28
          $region27: #{residual_bilstm_forward.10} parent=12 // pred_region
            loop: start=0, step=1, limit=1
            $region29: #{residual_bilstm_forward.10} parent=27 // loop_pre_header
              _
            $region30: #{residual_bilstm_forward.10} parent=27 // loop_header
              %s49 = sphi 0, %s53
              %p50 = scmp.ge.s32.totalorder %s49, 1
              %s54 = sphi %s0, %s0
              %s55 = sphi [#allocation4], [#allocation4]
            $region31: #{residual_bilstm_forward.10} parent=27 // loop_header_branch
              %52 = sbr.rel (%p50) target = $region35
            $region32: #{residual_bilstm_forward.10} parent=27 // loop_body
              %v56 = vld [vmem:[%s54] sm:$0xff]
              %57 = vst [vmem:[%s55] sm:$0xff] %v56
              %v58 = vld [vmem:[%s54 + $0x10] sm:$0xff]
              %59 = vst [vmem:[%s55 + $0x8] sm:$0xff] %v58
              %v60 = vld [vmem:[%s54 + $0x20] sm:$0xff]
              %61 = vst [vmem:[%s55 + $0x10] sm:$0xff] %v60
              %v62 = vld [vmem:[%s54 + $0x30] sm:$0xff]
              %63 = vst [vmem:[%s55 + $0x18] sm:$0xff] %v62
              %v64 = vld [vmem:[%s54 + $0x40] sm:$0xff]
              %65 = vst [vmem:[%s55 + $0x20] sm:$0xff] %v64
              %v66 = vld [vmem:[%s54 + $0x50] sm:$0xff]
              %67 = vst [vmem:[%s55 + $0x28] sm:$0xff] %v66
              %v68 = vld [vmem:[%s54 + $0x60] sm:$0xff]
              %69 = vst [vmem:[%s55 + $0x30] sm:$0xff] %v68
              %v70 = vld [vmem:[%s54 + $0x70] sm:$0xff]
              %71 = vst [vmem:[%s55 + $0x38] sm:$0xff] %v70
            $region33: #{residual_bilstm_forward.10} parent=27 // loop_footer
              %s53 = sadd.s32 1, %s49
            $region34: #{residual_bilstm_forward.10} parent=27 // loop_footer_branch
              %48 = sbr.rel target = $region30
            $region35: #{residual_bilstm_forward.10} parent=27 // loop_exit
              _
          $region28: #{residual_bilstm_forward.10} parent=12 // pred_fallthru
            _
          // Predicated region
          $region36: #{residual_bilstm_forward.10} parent=12 // pred_check
            _
          $region37: #{residual_bilstm_forward.10} parent=12 // pred_check_branch
            %73 = sbr.rel target = $region39
          $region38: #{residual_bilstm_forward.10} parent=12 // pred_region
            _
          $region39: #{residual_bilstm_forward.10} parent=12 // pred_fallthru
            _
        $region13: #{residual_bilstm_forward.10} parent=8 // pred_fallthru
          _
        // Predicated region
        $region14: #{residual_bilstm_forward.10} parent=8 // pred_check
          _
        $region15: #{residual_bilstm_forward.10} parent=8 // pred_check_branch
          %20 = sbr.rel target = $region17
        $region16: #{residual_bilstm_forward.10} parent=8 // pred_region
          loop: start=0, step=1, limit=1
          $region18: #{residual_bilstm_forward.10} parent=16 // loop_pre_header
            _
          $region19: #{residual_bilstm_forward.10} parent=16 // loop_header
            %s23 = sphi 0, %s27
            %p24 = scmp.ge.s32.totalorder %s23, 1
            %s28 = sphi %s0, %s0
            %s29 = sphi [#allocation4], [#allocation4]
          $region20: #{residual_bilstm_forward.10} parent=16 // loop_header_branch
            %26 = sbr.rel (%p24) target = $region24
          $region21: #{residual_bilstm_forward.10} parent=16 // loop_body
            %v30 = vld [vmem:[%s28] sm:$0xff]
            %31 = vst [vmem:[%s29] sm:$0xff] %v30
            %v32 = vld [vmem:[%s28 + $0x10] sm:$0xff]
            %33 = vst [vmem:[%s29 + $0x8] sm:$0xff] %v32
            %v34 = vld [vmem:[%s28 + $0x20] sm:$0xff]
            %35 = vst [vmem:[%s29 + $0x10] sm:$0xff] %v34
            %v36 = vld [vmem:[%s28 + $0x30] sm:$0xff]
            %37 = vst [vmem:[%s29 + $0x18] sm:$0xff] %v36
            %v38 = vld [vmem:[%s28 + $0x40] sm:$0xff]
            %39 = vst [vmem:[%s29 + $0x20] sm:$0xff] %v38
            %v40 = vld [vmem:[%s28 + $0x50] sm:$0xff]
            %41 = vst [vmem:[%s29 + $0x28] sm:$0xff] %v40
            %v42 = vld [vmem:[%s28 + $0x60] sm:$0xff]
            %43 = vst [vmem:[%s29 + $0x30] sm:$0xff] %v42
            %v44 = vld [vmem:[%s28 + $0x70] sm:$0xff]
            %45 = vst [vmem:[%s29 + $0x38] sm:$0xff] %v44
          $region22: #{residual_bilstm_forward.10} parent=16 // loop_footer
            %s27 = sadd.s32 1, %s23
          $region23: #{residual_bilstm_forward.10} parent=16 // loop_footer_branch
            %22 = sbr.rel target = $region19
          $region24: #{residual_bilstm_forward.10} parent=16 // loop_exit
            _
        $region17: #{residual_bilstm_forward.10} parent=8 // pred_fallthru
          _
      $region9: #{residual_bilstm_forward.10} parent=4 // pred_fallthru
        _
      %74 = vnop
    $region5: #{residual_bilstm_forward.10} parent=1 // pred_fallthru
      _
    // Predicated region
    $region40: #{residual_bilstm_forward.10} parent=1 // pred_check
      _
    $region41: #{residual_bilstm_forward.10} parent=1 // pred_check_branch
      %76 = sbr.rel (0) target = $region43
    $region42: #{residual_bilstm_forward.10} parent=1 // pred_region
      %s77 = ssub.s32 0, 0
      %s78 = smul.u32 8, %s77
      %s79 = smul.addr %s78, 2
      %s80 = sadd.s32 1, %s79
      %s81 = smul.addr %s80, 8
      %s82 = scalar_lea.vmem %s1, %s81
      // Predicated region
      $region44: #{residual_bilstm_forward.10} parent=42 // pred_check
        _
      $region45: #{residual_bilstm_forward.10} parent=42 // pred_check_branch
        %84 = sbr.rel (0) target = $region47
      $region46: #{residual_bilstm_forward.10} parent=42 // pred_region
        // Predicated region
        $region48: #{residual_bilstm_forward.10} parent=46 // pred_check
          _
        $region49: #{residual_bilstm_forward.10} parent=46 // pred_check_branch
          %86 = sbr.rel (0) target = $region51
        $region50: #{residual_bilstm_forward.10} parent=46 // pred_region
          // Predicated region
          $region63: #{residual_bilstm_forward.10} parent=50 // pred_check
            _
          $region64: #{residual_bilstm_forward.10} parent=50 // pred_check_branch
            %115 = sbr.rel (0) target = $region66
          $region65: #{residual_bilstm_forward.10} parent=50 // pred_region
            loop: start=0, step=1, limit=1
            $region67: #{residual_bilstm_forward.10} parent=65 // loop_pre_header
              _
            $region68: #{residual_bilstm_forward.10} parent=65 // loop_header
              %s117 = sphi 0, %s121
              %p118 = scmp.ge.s32.totalorder %s117, 1
              %s122 = sphi %s82, %s82
              %s123 = sphi [#allocation5], [#allocation5]
            $region69: #{residual_bilstm_forward.10} parent=65 // loop_header_branch
              %120 = sbr.rel (%p118) target = $region73
            $region70: #{residual_bilstm_forward.10} parent=65 // loop_body
              %v124 = vld [vmem:[%s122] sm:$0xff]
              %125 = vst [vmem:[%s123] sm:$0xff] %v124
              %v126 = vld [vmem:[%s122 + $0x10] sm:$0xff]
              %127 = vst [vmem:[%s123 + $0x8] sm:$0xff] %v126
              %v128 = vld [vmem:[%s122 + $0x20] sm:$0xff]
              %129 = vst [vmem:[%s123 + $0x10] sm:$0xff] %v128
              %v130 = vld [vmem:[%s122 + $0x30] sm:$0xff]
              %131 = vst [vmem:[%s123 + $0x18] sm:$0xff] %v130
              %v132 = vld [vmem:[%s122 + $0x40] sm:$0xff]
              %133 = vst [vmem:[%s123 + $0x20] sm:$0xff] %v132
              %v134 = vld [vmem:[%s122 + $0x50] sm:$0xff]
              %135 = vst [vmem:[%s123 + $0x28] sm:$0xff] %v134
              %v136 = vld [vmem:[%s122 + $0x60] sm:$0xff]
              %137 = vst [vmem:[%s123 + $0x30] sm:$0xff] %v136
              %v138 = vld [vmem:[%s122 + $0x70] sm:$0xff]
              %139 = vst [vmem:[%s123 + $0x38] sm:$0xff] %v138
            $region71: #{residual_bilstm_forward.10} parent=65 // loop_footer
              %s121 = sadd.s32 1, %s117
            $region72: #{residual_bilstm_forward.10} parent=65 // loop_footer_branch
              %116 = sbr.rel target = $region68
            $region73: #{residual_bilstm_forward.10} parent=65 // loop_exit
              _
          $region66: #{residual_bilstm_forward.10} parent=50 // pred_fallthru
            _
          // Predicated region
          $region74: #{residual_bilstm_forward.10} parent=50 // pred_check
            _
          $region75: #{residual_bilstm_forward.10} parent=50 // pred_check_branch
            %141 = sbr.rel target = $region77
          $region76: #{residual_bilstm_forward.10} parent=50 // pred_region
            _
          $region77: #{residual_bilstm_forward.10} parent=50 // pred_fallthru
            _
        $region51: #{residual_bilstm_forward.10} parent=46 // pred_fallthru
          _
        // Predicated region
        $region52: #{residual_bilstm_forward.10} parent=46 // pred_check
          _
        $region53: #{residual_bilstm_forward.10} parent=46 // pred_check_branch
          %88 = sbr.rel target = $region55
        $region54: #{residual_bilstm_forward.10} parent=46 // pred_region
          loop: start=0, step=1, limit=1
          $region56: #{residual_bilstm_forward.10} parent=54 // loop_pre_header
            _
          $region57: #{residual_bilstm_forward.10} parent=54 // loop_header
            %s91 = sphi 0, %s95
            %p92 = scmp.ge.s32.totalorder %s91, 1
            %s96 = sphi %s82, %s82
            %s97 = sphi [#allocation5], [#allocation5]
          $region58: #{residual_bilstm_forward.10} parent=54 // loop_header_branch
            %94 = sbr.rel (%p92) target = $region62
          $region59: #{residual_bilstm_forward.10} parent=54 // loop_body
            %v98 = vld [vmem:[%s96] sm:$0xff]
            %99 = vst [vmem:[%s97] sm:$0xff] %v98
            %v100 = vld [vmem:[%s96 + $0x10] sm:$0xff]
            %101 = vst [vmem:[%s97 + $0x8] sm:$0xff] %v100
            %v102 = vld [vmem:[%s96 + $0x20] sm:$0xff]
            %103 = vst [vmem:[%s97 + $0x10] sm:$0xff] %v102
            %v104 = vld [vmem:[%s96 + $0x30] sm:$0xff]
            %105 = vst [vmem:[%s97 + $0x18] sm:$0xff] %v104
            %v106 = vld [vmem:[%s96 + $0x40] sm:$0xff]
            %107 = vst [vmem:[%s97 + $0x20] sm:$0xff] %v106
            %v108 = vld [vmem:[%s96 + $0x50] sm:$0xff]
            %109 = vst [vmem:[%s97 + $0x28] sm:$0xff] %v108
            %v110 = vld [vmem:[%s96 + $0x60] sm:$0xff]
            %111 = vst [vmem:[%s97 + $0x30] sm:$0xff] %v110
            %v112 = vld [vmem:[%s96 + $0x70] sm:$0xff]
            %113 = vst [vmem:[%s97 + $0x38] sm:$0xff] %v112
          $region60: #{residual_bilstm_forward.10} parent=54 // loop_footer
            %s95 = sadd.s32 1, %s91
          $region61: #{residual_bilstm_forward.10} parent=54 // loop_footer_branch
            %90 = sbr.rel target = $region57
          $region62: #{residual_bilstm_forward.10} parent=54 // loop_exit
            _
        $region55: #{residual_bilstm_forward.10} parent=46 // pred_fallthru
          _
      $region47: #{residual_bilstm_forward.10} parent=42 // pred_fallthru
        _
      %142 = vnop
    $region43: #{residual_bilstm_forward.10} parent=1 // pred_fallthru
      _
    // Predicated region
    $region78: #{residual_bilstm_forward.10} parent=1 // pred_check
      _
    $region79: #{residual_bilstm_forward.10} parent=1 // pred_check_branch
      %144 = sbr.rel (0) target = $region81
    $region80: #{residual_bilstm_forward.10} parent=1 // pred_region
      _
    $region81: #{residual_bilstm_forward.10} parent=1 // pred_fallthru
      _
    // Predicated region
    $region82: #{residual_bilstm_forward.10} parent=1 // pred_check
      _
    $region83: #{residual_bilstm_forward.10} parent=1 // pred_check_branch
      %146 = sbr.rel (0) target = $region85
    $region84: #{residual_bilstm_forward.10} parent=1 // pred_region
      _
    $region85: #{residual_bilstm_forward.10} parent=1 // pred_fallthru
      _
    // Predicated region
    $region86: #{residual_bilstm_forward.10} parent=1 // pred_check
      _
    $region87: #{residual_bilstm_forward.10} parent=1 // pred_check_branch
      %148 = sbr.rel (0) target = $region89
    $region88: #{residual_bilstm_forward.10} parent=1 // pred_region
      _
    $region89: #{residual_bilstm_forward.10} parent=1 // pred_fallthru
      _
    // Predicated region
    $region90: #{residual_bilstm_forward.10} parent=1 // pred_check
      _
    $region91: #{residual_bilstm_forward.10} parent=1 // pred_check_branch
      %150 = sbr.rel (0) target = $region93
    $region92: #{residual_bilstm_forward.10} parent=1 // pred_region
      _
    $region93: #{residual_bilstm_forward.10} parent=1 // pred_fallthru
      _
    %s151 = ssub.s32 0, 0
    %s152 = smul.u32 8, %s151
    %p153 = scmp.lt.s32.totalorder %s152, 7
    %s154 = scalar_select %p153, %s152, 7
    %s155 = smul.addr %s154, 8
    %s156 = scalar_lea.vmem %s5, %s155
    %s157 = ssub.s32 0, 0
    %s158 = smul.u32 8, %s157
    %s159 = ssub.s32 0, 0
    %s160 = smul.u32 8, %s159
    %p161 = scmp.lt.s32.totalorder %s160, 7
    %s162 = scalar_select %p161, %s160, 7
    %s163 = smul.addr %s162, 8
    %s164 = scalar_lea.vmem %s5, %s163
    %s165 = ssub.s32 0, 0
    %s166 = smul.u32 8, %s165
    %p167 = scmp.eq.s32.totalorder 0, 0
    // Predicated region
    $region94: #{residual_bilstm_forward.10} parent=1 // pred_check
      %p168 = pneg %p167
    $region95: #{residual_bilstm_forward.10} parent=1 // pred_check_branch
      %170 = sbr.rel (%p168) target = $region97
    $region96: #{residual_bilstm_forward.10} parent=1 // pred_region
      %vm171 = vcmask 261120
      %172 = vst.msk [vmem:[#allocation2] sm:$0xff] %vm171, 0.0
      %173 = vst.msk [vmem:[#allocation2 + $0x8] sm:$0xff] %vm171, 0.0
      %174 = vst.msk [vmem:[#allocation3] sm:$0xff] %vm171, 0.0
      %175 = vst.msk [vmem:[#allocation3 + $0x8] sm:$0xff] %vm171, 0.0
    $region97: #{residual_bilstm_forward.10} parent=1 // pred_fallthru
      _
    %v176 = vld [vmem:[%s2] sm:$0xff]
    %v177 = vld [vmem:[%s2 + $0x8] sm:$0xff]
    %v178 = vld [vmem:[%s2 + $0x10] sm:$0xff]
    %v179 = vld [vmem:[%s2 + $0x18] sm:$0xff]
    %v180 = vld [vmem:[%s3] sm:$0xff]
    %v181 = vld [vmem:[%s3 + $0x8] sm:$0xff]
    %v182 = vld [vmem:[%s3 + $0x10] sm:$0xff]
    %v183 = vld [vmem:[%s3 + $0x18] sm:$0xff]
    %v184 = vld [vmem:[#allocation4] sm:$0xff]
    %v185 = vld [vmem:[#allocation2] sm:$0xff]
    %vm186 = vcmask 261120
    %v188 = vsel %vm186, %v185, 0
    %190 = vmatprep.subr.mxu0 0.0
    %191 = vmatpush1.msra.mxu0 %v176
    %192 = vmatprep.subr.mxu0 0.0
    %193 = vmatpush1.msra.mxu0 %v177
    %194 = vmatprep.subr.mxu0 0.0
    %195 = vmatpush1.msra.mxu0 %v178
    %196 = vmatprep.subr.mxu0 0.0
    %197 = vmatpush1.msra.mxu0 %v179
    %198 = vmatprep.subr.mxu0 0.0
    %199 = vmatpush1.msra.mxu0 0.0
    %200 = vmatprep.subr.mxu0 0.0
    %201 = vmatpush1.msra.mxu0 0.0
    %202 = vmatprep.subr.mxu0 0.0
    %203 = vmatpush1.msra.mxu0 0.0
    %204 = vmatprep.subr.mxu0 0.0
    %205 = vmatpush1.msra.mxu0 0.0
    %206 = vmatprep.subr.mxu0 0.0
    %207 = vmatpush1.msra.mxu0 0.0
    %208 = vmatprep.subr.mxu0 0.0
    %209 = vmatpush1.msra.mxu0 0.0
    %210 = vmatprep.subr.mxu0 0.0
    %211 = vmatpush1.msra.mxu0 0.0
    %212 = vmatprep.subr.mxu0 0.0
    %213 = vmatpush1.msra.mxu0 0.0
    %214 = vmatprep.subr.mxu0 0.0
    %215 = vmatpush1.msra.mxu0 0.0
    %216 = vmatprep.subr.mxu0 0.0
    %217 = vmatpush1.msra.mxu0 0.0
    %218 = vmatprep.subr.mxu0 0.0
    %219 = vmatpush1.msra.mxu0 0.0
    %220 = vmatprep.subr.mxu0 0.0
    %221 = vmatpush1.msra.mxu0 0.0
    %222 = vmatprep.subr.mxu0 0.0
    %223 = vmatpush1.msra.mxu0 0.0
    %224 = vmatprep.subr.mxu0 0.0
    %225 = vmatpush1.msra.mxu0 0.0
    %226 = vmatprep.subr.mxu0 0.0
    %227 = vmatpush1.msra.mxu0 0.0
    %228 = vmatprep.subr.mxu0 0.0
    %229 = vmatpush1.msra.mxu0 0.0
    %230 = vmatprep.subr.mxu0 0.0
    %231 = vmatpush1.msra.mxu0 0.0
    %232 = vmatprep.subr.mxu0 0.0
    %233 = vmatpush1.msra.mxu0 0.0
    %234 = vmatprep.subr.mxu0 0.0
    %235 = vmatpush1.msra.mxu0 0.0
    %236 = vmatprep.subr.mxu0 0.0
    %237 = vmatpush1.msra.mxu0 0.0
    %238 = vmatprep.subr.mxu0 0.0
    %239 = vmatpush1.msra.mxu0 0.0
    %240 = vmatprep.subr.mxu0 0.0
    %241 = vmatpush1.msra.mxu0 0.0
    %242 = vmatprep.subr.mxu0 0.0
    %243 = vmatpush1.msra.mxu0 0.0
    %244 = vmatprep.subr.mxu0 0.0
    %245 = vmatpush1.msra.mxu0 0.0
    %246 = vmatprep.subr.mxu0 0.0
    %247 = vmatpush1.msra.mxu0 0.0
    %248 = vmatprep.subr.mxu0 0.0
    %249 = vmatpush1.msra.mxu0 0.0
    %250 = vmatprep.subr.mxu0 0.0
    %251 = vmatpush1.msra.mxu0 0.0
    %252 = vmatprep.subr.mxu0 0.0
    %253 = vmatpush1.msra.mxu0 0.0
    %254 = vmatprep.mubr.f32.mxu0 0.0
    %255 = vmatmul.mubr.f32.gmra.mrb[0].mxu0 %v188
    %v256 = vpop.f32.mrb[0].mxu0
    %v257 = vadd.f32 0.0, %v256
    %v258 = vpop.f32.mrb[0].mxu0
    %259 = vdwg.mxu0
    %v260 = vadd.f32 %v184, %v257
    %s261 = scalar_lea.vmem [#allocation5], 56
    %v262 = vld [vmem:[%s261] sm:$0xff]
    %s263 = scalar_lea.vmem [#allocation2], 8
    %v264 = vld [vmem:[%s263] sm:$0xff]
    %v266 = vsel %vm186, %v264, 0
    %268 = vmatprep.subr.mxu0 0.0
    %269 = vmatpush1.msra.mxu0 %v180
    %270 = vmatprep.subr.mxu0 0.0
    %271 = vmatpush1.msra.mxu0 %v181
    %272 = vmatprep.subr.mxu0 0.0
    %273 = vmatpush1.msra.mxu0 %v182
    %274 = vmatprep.subr.mxu0 0.0
    %275 = vmatpush1.msra.mxu0 %v183
    %276 = vmatprep.subr.mxu0 0.0
    %277 = vmatpush1.msra.mxu0 0.0
    %278 = vmatprep.subr.mxu0 0.0
    %279 = vmatpush1.msra.mxu0 0.0
    %280 = vmatprep.subr.mxu0 0.0
    %281 = vmatpush1.msra.mxu0 0.0
    %282 = vmatprep.subr.mxu0 0.0
    %283 = vmatpush1.msra.mxu0 0.0
    %284 = vmatprep.subr.mxu0 0.0
    %285 = vmatpush1.msra.mxu0 0.0
    %286 = vmatprep.subr.mxu0 0.0
    %287 = vmatpush1.msra.mxu0 0.0
    %288 = vmatprep.subr.mxu0 0.0
    %289 = vmatpush1.msra.mxu0 0.0
    %290 = vmatprep.subr.mxu0 0.0
    %291 = vmatpush1.msra.mxu0 0.0
    %292 = vmatprep.subr.mxu0 0.0
    %293 = vmatpush1.msra.mxu0 0.0
    %294 = vmatprep.subr.mxu0 0.0
    %295 = vmatpush1.msra.mxu0 0.0
    %296 = vmatprep.subr.mxu0 0.0
    %297 = vmatpush1.msra.mxu0 0.0
    %298 = vmatprep.subr.mxu0 0.0
    %299 = vmatpush1.msra.mxu0 0.0
    %300 = vmatprep.subr.mxu0 0.0
    %301 = vmatpush1.msra.mxu0 0.0
    %302 = vmatprep.subr.mxu0 0.0
    %303 = vmatpush1.msra.mxu0 0.0
    %304 = vmatprep.subr.mxu0 0.0
    %305 = vmatpush1.msra.mxu0 0.0
    %306 = vmatprep.subr.mxu0 0.0
    %307 = vmatpush1.msra.mxu0 0.0
    %308 = vmatprep.subr.mxu0 0.0
    %309 = vmatpush1.msra.mxu0 0.0
    %310 = vmatprep.subr.mxu0 0.0
    %311 = vmatpush1.msra.mxu0 0.0
    %312 = vmatprep.subr.mxu0 0.0
    %313 = vmatpush1.msra.mxu0 0.0
    %314 = vmatprep.subr.mxu0 0.0
    %315 = vmatpush1.msra.mxu0 0.0
    %316 = vmatprep.subr.mxu0 0.0
    %317 = vmatpush1.msra.mxu0 0.0
    %318 = vmatprep.subr.mxu0 0.0
    %319 = vmatpush1.msra.mxu0 0.0
    %320 = vmatprep.subr.mxu0 0.0
    %321 = vmatpush1.msra.mxu0 0.0
    %322 = vmatprep.subr.mxu0 0.0
    %323 = vmatpush1.msra.mxu0 0.0
    %324 = vmatprep.subr.mxu0 0.0
    %325 = vmatpush1.msra.mxu0 0.0
    %326 = vmatprep.subr.mxu0 0.0
    %327 = vmatpush1.msra.mxu0 0.0
    %328 = vmatprep.subr.mxu0 0.0
    %329 = vmatpush1.msra.mxu0 0.0
    %330 = vmatprep.subr.mxu0 0.0
    %331 = vmatpush1.msra.mxu0 0.0
    %332 = vmatprep.mubr.f32.mxu0 0.0
    %333 = vmatmul.mubr.f32.gmra.mrb[0].mxu0 %v266
    %v334 = vpop.f32.mrb[0].mxu0
    %v335 = vadd.f32 0.0, %v334
    %v336 = vpop.f32.mrb[0].mxu0
    %337 = vdwg.mxu0
    %v338 = vadd.f32 %v262, %v335
    %v339 = vld [vmem:[#allocation3] sm:$0xff]
    %v340 = vxor.u32 %v260, 2147483648
    %v341 = vmul.f32 %v340, 1.442695
    %v342 = vpow.pop %v341
    %v343 = vadd.f32 %v342, 1.0
    %v344 = vrcp.pop %v343
    %v345 = vmul.f32 1.0, %v344
    %v346 = vtanh.pop %v260
    %348 = vrot.lane.b32.xlu0 %v339, 32
    %v349 = vpop.permute.xlu0 %348
    %v351 = vmul.f32 %v345, %v349
    %353 = vrot.lane.b32.xlu0 %v346, 64
    %v354 = vpop.permute.xlu0 %353
    %v356 = vmul.f32 %v345, %v354
    %358 = vrot.lane.b32.xlu0 %v356, 32
    %v359 = vpop.permute.xlu0 %358
    %v361 = vadd.f32 %v351, %v359
    %v362 = vtanh.pop %v361
    %364 = vrot.lane.b32.xlu0 %v362, 64
    %v365 = vpop.permute.xlu0 %364
    %v367 = vmul.f32 %v345, %v365
    %s368 = scalar_lea.vmem [#allocation3], 8
    %v369 = vld [vmem:[%s368] sm:$0xff]
    %v370 = vxor.u32 %v338, 2147483648
    %v371 = vmul.f32 %v370, 1.442695
    %v372 = vpow.pop %v371
    %v373 = vadd.f32 %v372, 1.0
    %v374 = vrcp.pop %v373
    %v375 = vmul.f32 1.0, %v374
    %v376 = vtanh.pop %v338
    %378 = vrot.lane.b32.xlu0 %v369, 32
    %v379 = vpop.permute.xlu0 %378
    %v381 = vmul.f32 %v375, %v379
    %383 = vrot.lane.b32.xlu0 %v376, 64
    %v384 = vpop.permute.xlu0 %383
    %v386 = vmul.f32 %v375, %v384
    %388 = vrot.lane.b32.xlu0 %v386, 32
    %v389 = vpop.permute.xlu0 %388
    %v391 = vadd.f32 %v381, %v389
    %v392 = vtanh.pop %v391
    %394 = vrot.lane.b32.xlu0 %v392, 64
    %v395 = vpop.permute.xlu0 %394
    %v397 = vmul.f32 %v375, %v395
    %399 = vrot.lane.b32.xlu0 %v367, 32
    %v400 = vpop.permute.xlu0 %399
    %402 = vst.msk [vmem:[#allocation2] sm:$0xff] %vm186, %v400
    %404 = vrot.lane.b32.xlu0 %v361, 96
    %v405 = vpop.permute.xlu0 %404
    %407 = vst.msk [vmem:[#allocation3] sm:$0xff] %vm186, %v405
    %409 = vrot.lane.b32.xlu0 %v397, 32
    %v410 = vpop.permute.xlu0 %409
    %412 = vst.msk [vmem:[%s263] sm:$0xff] %vm186, %v410
    %414 = vrot.lane.b32.xlu0 %v391, 96
    %v415 = vpop.permute.xlu0 %414
    %417 = vst.msk [vmem:[%s368] sm:$0xff] %vm186, %v415
    %418 = vst.msk [vmem:[%s4] sm:$0xff] %vm186, %v400
    %s419 = scalar_lea.vmem %s164, 56
    %420 = vst.msk [vmem:[%s419] sm:$0xff] %vm186, %v410
    %s421 = scalar_lea.vmem [#allocation4], 8
    %v422 = vld [vmem:[%s421] sm:$0xff]
    %v423 = vld [vmem:[#allocation2] sm:$0xff]
    %v425 = vsel %vm186, %v423, 0
    %427 = vmatprep.subr.mxu0 0.0
    %428 = vmatpush1.msra.mxu0 %v176
    %429 = vmatprep.subr.mxu0 0.0
    %430 = vmatpush1.msra.mxu0 %v177
    %431 = vmatprep.subr.mxu0 0.0
    %432 = vmatpush1.msra.mxu0 %v178
    %433 = vmatprep.subr.mxu0 0.0
    %434 = vmatpush1.msra.mxu0 %v179
    %435 = vmatprep.subr.mxu0 0.0
    %436 = vmatpush1.msra.mxu0 0.0
    %437 = vmatprep.subr.mxu0 0.0
    %438 = vmatpush1.msra.mxu0 0.0
    %439 = vmatprep.subr.mxu0 0.0
    %440 = vmatpush1.msra.mxu0 0.0
    %441 = vmatprep.subr.mxu0 0.0
    %442 = vmatpush1.msra.mxu0 0.0
    %443 = vmatprep.subr.mxu0 0.0
    %444 = vmatpush1.msra.mxu0 0.0
    %445 = vmatprep.subr.mxu0 0.0
    %446 = vmatpush1.msra.mxu0 0.0
    %447 = vmatprep.subr.mxu0 0.0
    %448 = vmatpush1.msra.mxu0 0.0
    %449 = vmatprep.subr.mxu0 0.0
    %450 = vmatpush1.msra.mxu0 0.0
    %451 = vmatprep.subr.mxu0 0.0
    %452 = vmatpush1.msra.mxu0 0.0
    %453 = vmatprep.subr.mxu0 0.0
    %454 = vmatpush1.msra.mxu0 0.0
    %455 = vmatprep.subr.mxu0 0.0
    %456 = vmatpush1.msra.mxu0 0.0
    %457 = vmatprep.subr.mxu0 0.0
    %458 = vmatpush1.msra.mxu0 0.0
    %459 = vmatprep.subr.mxu0 0.0
    %460 = vmatpush1.msra.mxu0 0.0
    %461 = vmatprep.subr.mxu0 0.0
    %462 = vmatpush1.msra.mxu0 0.0
    %463 = vmatprep.subr.mxu0 0.0
    %464 = vmatpush1.msra.mxu0 0.0
    %465 = vmatprep.subr.mxu0 0.0
    %466 = vmatpush1.msra.mxu0 0.0
    %467 = vmatprep.subr.mxu0 0.0
    %468 = vmatpush1.msra.mxu0 0.0
    %469 = vmatprep.subr.mxu0 0.0
    %470 = vmatpush1.msra.mxu0 0.0
    %471 = vmatprep.subr.mxu0 0.0
    %472 = vmatpush1.msra.mxu0 0.0
    %473 = vmatprep.subr.mxu0 0.0
    %474 = vmatpush1.msra.mxu0 0.0
    %475 = vmatprep.subr.mxu0 0.0
    %476 = vmatpush1.msra.mxu0 0.0
    %477 = vmatprep.subr.mxu0 0.0
    %478 = vmatpush1.msra.mxu0 0.0
    %479 = vmatprep.subr.mxu0 0.0
    %480 = vmatpush1.msra.mxu0 0.0
    %481 = vmatprep.subr.mxu0 0.0
    %482 = vmatpush1.msra.mxu0 0.0
    %483 = vmatprep.subr.mxu0 0.0
    %484 = vmatpush1.msra.mxu0 0.0
    %485 = vmatprep.subr.mxu0 0.0
    %486 = vmatpush1.msra.mxu0 0.0
    %487 = vmatprep.subr.mxu0 0.0
    %488 = vmatpush1.msra.mxu0 0.0
    %489 = vmatprep.subr.mxu0 0.0
    %490 = vmatpush1.msra.mxu0 0.0
    %491 = vmatprep.mubr.f32.mxu0 0.0
    %492 = vmatmul.mubr.f32.gmra.mrb[0].mxu0 %v425
    %v493 = vpop.f32.mrb[0].mxu0
    %v494 = vadd.f32 0.0, %v493
    %v495 = vpop.f32.mrb[0].mxu0
    %496 = vdwg.mxu0
    %v497 = vadd.f32 %v422, %v494
    %s498 = scalar_lea.vmem [#allocation5], 48
    %v499 = vld [vmem:[%s498] sm:$0xff]
    %v500 = vld [vmem:[%s263] sm:$0xff]
    %v502 = vsel %vm186, %v500, 0
    %504 = vmatprep.subr.mxu0 0.0
    %505 = vmatpush1.msra.mxu0 %v180
    %506 = vmatprep.subr.mxu0 0.0
    %507 = vmatpush1.msra.mxu0 %v181
    %508 = vmatprep.subr.mxu0 0.0
    %509 = vmatpush1.msra.mxu0 %v182
    %510 = vmatprep.subr.mxu0 0.0
    %511 = vmatpush1.msra.mxu0 %v183
    %512 = vmatprep.subr.mxu0 0.0
    %513 = vmatpush1.msra.mxu0 0.0
    %514 = vmatprep.subr.mxu0 0.0
    %515 = vmatpush1.msra.mxu0 0.0
    %516 = vmatprep.subr.mxu0 0.0
    %517 = vmatpush1.msra.mxu0 0.0
    %518 = vmatprep.subr.mxu0 0.0
    %519 = vmatpush1.msra.mxu0 0.0
    %520 = vmatprep.subr.mxu0 0.0
    %521 = vmatpush1.msra.mxu0 0.0
    %522 = vmatprep.subr.mxu0 0.0
    %523 = vmatpush1.msra.mxu0 0.0
    %524 = vmatprep.subr.mxu0 0.0
    %525 = vmatpush1.msra.mxu0 0.0
    %526 = vmatprep.subr.mxu0 0.0
    %527 = vmatpush1.msra.mxu0 0.0
    %528 = vmatprep.subr.mxu0 0.0
    %529 = vmatpush1.msra.mxu0 0.0
    %530 = vmatprep.subr.mxu0 0.0
    %531 = vmatpush1.msra.mxu0 0.0
    %532 = vmatprep.subr.mxu0 0.0
    %533 = vmatpush1.msra.mxu0 0.0
    %534 = vmatprep.subr.mxu0 0.0
    %535 = vmatpush1.msra.mxu0 0.0
    %536 = vmatprep.subr.mxu0 0.0
    %537 = vmatpush1.msra.mxu0 0.0
    %538 = vmatprep.subr.mxu0 0.0
    %539 = vmatpush1.msra.mxu0 0.0
    %540 = vmatprep.subr.mxu0 0.0
    %541 = vmatpush1.msra.mxu0 0.0
    %542 = vmatprep.subr.mxu0 0.0
    %543 = vmatpush1.msra.mxu0 0.0
    %544 = vmatprep.subr.mxu0 0.0
    %545 = vmatpush1.msra.mxu0 0.0
    %546 = vmatprep.subr.mxu0 0.0
    %547 = vmatpush1.msra.mxu0 0.0
    %548 = vmatprep.subr.mxu0 0.0
    %549 = vmatpush1.msra.mxu0 0.0
    %550 = vmatprep.subr.mxu0 0.0
    %551 = vmatpush1.msra.mxu0 0.0
    %552 = vmatprep.subr.mxu0 0.0
    %553 = vmatpush1.msra.mxu0 0.0
    %554 = vmatprep.subr.mxu0 0.0
    %555 = vmatpush1.msra.mxu0 0.0
    %556 = vmatprep.subr.mxu0 0.0
    %557 = vmatpush1.msra.mxu0 0.0
    %558 = vmatprep.subr.mxu0 0.0
    %559 = vmatpush1.msra.mxu0 0.0
    %560 = vmatprep.subr.mxu0 0.0
    %561 = vmatpush1.msra.mxu0 0.0
    %562 = vmatprep.subr.mxu0 0.0
    %563 = vmatpush1.msra.mxu0 0.0
    %564 = vmatprep.subr.mxu0 0.0
    %565 = vmatpush1.msra.mxu0 0.0
    %566 = vmatprep.subr.mxu0 0.0
    %567 = vmatpush1.msra.mxu0 0.0
    %568 = vmatprep.mubr.f32.mxu0 0.0
    %569 = vmatmul.mubr.f32.gmra.mrb[0].mxu0 %v502
    %v570 = vpop.f32.mrb[0].mxu0
    %v571 = vadd.f32 0.0, %v570
    %v572 = vpop.f32.mrb[0].mxu0
    %573 = vdwg.mxu0
    %v574 = vadd.f32 %v499, %v571
    %v575 = vld [vmem:[#allocation3] sm:$0xff]
    %v576 = vxor.u32 %v497, 2147483648
    %v577 = vmul.f32 %v576, 1.442695
    %v578 = vpow.pop %v577
    %v579 = vadd.f32 %v578, 1.0
    %v580 = vrcp.pop %v579
    %v581 = vmul.f32 1.0, %v580
    %v582 = vtanh.pop %v497
    %584 = vrot.lane.b32.xlu0 %v575, 32
    %v585 = vpop.permute.xlu0 %584
    %v587 = vmul.f32 %v581, %v585
    %589 = vrot.lane.b32.xlu0 %v582, 64
    %v590 = vpop.permute.xlu0 %589
    %v592 = vmul.f32 %v581, %v590
    %594 = vrot.lane.b32.xlu0 %v592, 32
    %v595 = vpop.permute.xlu0 %594
    %v597 = vadd.f32 %v587, %v595
    %v598 = vtanh.pop %v597
    %600 = vrot.lane.b32.xlu0 %v598, 64
    %v601 = vpop.permute.xlu0 %600
    %v603 = vmul.f32 %v581, %v601
    %v604 = vld [vmem:[%s368] sm:$0xff]
    %v605 = vxor.u32 %v574, 2147483648
    %v606 = vmul.f32 %v605, 1.442695
    %v607 = vpow.pop %v606
    %v608 = vadd.f32 %v607, 1.0
    %v609 = vrcp.pop %v608
    %v610 = vmul.f32 1.0, %v609
    %v611 = vtanh.pop %v574
    %613 = vrot.lane.b32.xlu0 %v604, 32
    %v614 = vpop.permute.xlu0 %613
    %v616 = vmul.f32 %v610, %v614
    %618 = vrot.lane.b32.xlu0 %v611, 64
    %v619 = vpop.permute.xlu0 %618
    %v621 = vmul.f32 %v610, %v619
    %623 = vrot.lane.b32.xlu0 %v621, 32
    %v624 = vpop.permute.xlu0 %623
    %v626 = vadd.f32 %v616, %v624
    %v627 = vtanh.pop %v626
    %629 = vrot.lane.b32.xlu0 %v627, 64
    %v630 = vpop.permute.xlu0 %629
    %v632 = vmul.f32 %v610, %v630
    %634 = vrot.lane.b32.xlu0 %v603, 32
    %v635 = vpop.permute.xlu0 %634
    %637 = vst.msk [vmem:[#allocation2] sm:$0xff] %vm186, %v635
    %639 = vrot.lane.b32.xlu0 %v597, 96
    %v640 = vpop.permute.xlu0 %639
    %642 = vst.msk [vmem:[#allocation3] sm:$0xff] %vm186, %v640
    %644 = vrot.lane.b32.xlu0 %v632, 32
    %v645 = vpop.permute.xlu0 %644
    %647 = vst.msk [vmem:[%s263] sm:$0xff] %vm186, %v645
    %649 = vrot.lane.b32.xlu0 %v626, 96
    %v650 = vpop.permute.xlu0 %649
    %652 = vst.msk [vmem:[%s368] sm:$0xff] %vm186, %v650
    %s653 = scalar_lea.vmem %s4, 8
    %654 = vst.msk [vmem:[%s653] sm:$0xff] %vm186, %v635
    %s655 = scalar_lea.vmem %s164, 48
    %656 = vst.msk [vmem:[%s655] sm:$0xff] %vm186, %v645
    %s657 = scalar_lea.vmem [#allocation4], 16
    %v658 = vld [vmem:[%s657] sm:$0xff]
    %v659 = vld [vmem:[#allocation2] sm:$0xff]
    %v661 = vsel %vm186, %v659, 0
    %663 = vmatprep.subr.mxu0 0.0
    %664 = vmatpush1.msra.mxu0 %v176
    %665 = vmatprep.subr.mxu0 0.0
    %666 = vmatpush1.msra.mxu0 %v177
    %667 = vmatprep.subr.mxu0 0.0
    %668 = vmatpush1.msra.mxu0 %v178
    %669 = vmatprep.subr.mxu0 0.0
    %670 = vmatpush1.msra.mxu0 %v179
    %671 = vmatprep.subr.mxu0 0.0
    %672 = vmatpush1.msra.mxu0 0.0
    %673 = vmatprep.subr.mxu0 0.0
    %674 = vmatpush1.msra.mxu0 0.0
    %675 = vmatprep.subr.mxu0 0.0
    %676 = vmatpush1.msra.mxu0 0.0
    %677 = vmatprep.subr.mxu0 0.0
    %678 = vmatpush1.msra.mxu0 0.0
    %679 = vmatprep.subr.mxu0 0.0
    %680 = vmatpush1.msra.mxu0 0.0
    %681 = vmatprep.subr.mxu0 0.0
    %682 = vmatpush1.msra.mxu0 0.0
    %683 = vmatprep.subr.mxu0 0.0
    %684 = vmatpush1.msra.mxu0 0.0
    %685 = vmatprep.subr.mxu0 0.0
    %686 = vmatpush1.msra.mxu0 0.0
    %687 = vmatprep.subr.mxu0 0.0
    %688 = vmatpush1.msra.mxu0 0.0
    %689 = vmatprep.subr.mxu0 0.0
    %690 = vmatpush1.msra.mxu0 0.0
    %691 = vmatprep.subr.mxu0 0.0
    %692 = vmatpush1.msra.mxu0 0.0
    %693 = vmatprep.subr.mxu0 0.0
    %694 = vmatpush1.msra.mxu0 0.0
    %695 = vmatprep.subr.mxu0 0.0
    %696 = vmatpush1.msra.mxu0 0.0
    %697 = vmatprep.subr.mxu0 0.0
    %698 = vmatpush1.msra.mxu0 0.0
    %699 = vmatprep.subr.mxu0 0.0
    %700 = vmatpush1.msra.mxu0 0.0
    %701 = vmatprep.subr.mxu0 0.0
    %702 = vmatpush1.msra.mxu0 0.0
    %703 = vmatprep.subr.mxu0 0.0
    %704 = vmatpush1.msra.mxu0 0.0
    %705 = vmatprep.subr.mxu0 0.0
    %706 = vmatpush1.msra.mxu0 0.0
    %707 = vmatprep.subr.mxu0 0.0
    %708 = vmatpush1.msra.mxu0 0.0
    %709 = vmatprep.subr.mxu0 0.0
    %710 = vmatpush1.msra.mxu0 0.0
    %711 = vmatprep.subr.mxu0 0.0
    %712 = vmatpush1.msra.mxu0 0.0
    %713 = vmatprep.subr.mxu0 0.0
    %714 = vmatpush1.msra.mxu0 0.0
    %715 = vmatprep.subr.mxu0 0.0
    %716 = vmatpush1.msra.mxu0 0.0
    %717 = vmatprep.subr.mxu0 0.0
    %718 = vmatpush1.msra.mxu0 0.0
    %719 = vmatprep.subr.mxu0 0.0
    %720 = vmatpush1.msra.mxu0 0.0
    %721 = vmatprep.subr.mxu0 0.0
    %722 = vmatpush1.msra.mxu0 0.0
    %723 = vmatprep.subr.mxu0 0.0
    %724 = vmatpush1.msra.mxu0 0.0
    %725 = vmatprep.subr.mxu0 0.0
    %726 = vmatpush1.msra.mxu0 0.0
    %727 = vmatprep.mubr.f32.mxu0 0.0
    %728 = vmatmul.mubr.f32.gmra.mrb[0].mxu0 %v661
    %v729 = vpop.f32.mrb[0].mxu0
    %v730 = vadd.f32 0.0, %v729
    %v731 = vpop.f32.mrb[0].mxu0
    %732 = vdwg.mxu0
    %v733 = vadd.f32 %v658, %v730
    %s734 = scalar_lea.vmem [#allocation5], 40
    %v735 = vld [vmem:[%s734] sm:$0xff]
    %v736 = vld [vmem:[%s263] sm:$0xff]
    %v738 = vsel %vm186, %v736, 0
    %740 = vmatprep.subr.mxu0 0.0
    %741 = vmatpush1.msra.mxu0 %v180
    %742 = vmatprep.subr.mxu0 0.0
    %743 = vmatpush1.msra.mxu0 %v181
    %744 = vmatprep.subr.mxu0 0.0
    %745 = vmatpush1.msra.mxu0 %v182
    %746 = vmatprep.subr.mxu0 0.0
    %747 = vmatpush1.msra.mxu0 %v183
    %748 = vmatprep.subr.mxu0 0.0
    %749 = vmatpush1.msra.mxu0 0.0
    %750 = vmatprep.subr.mxu0 0.0
    %751 = vmatpush1.msra.mxu0 0.0
    %752 = vmatprep.subr.mxu0 0.0
    %753 = vmatpush1.msra.mxu0 0.0
    %754 = vmatprep.subr.mxu0 0.0
    %755 = vmatpush1.msra.mxu0 0.0
    %756 = vmatprep.subr.mxu0 0.0
    %757 = vmatpush1.msra.mxu0 0.0
    %758 = vmatprep.subr.mxu0 0.0
    %759 = vmatpush1.msra.mxu0 0.0
    %760 = vmatprep.subr.mxu0 0.0
    %761 = vmatpush1.msra.mxu0 0.0
    %762 = vmatprep.subr.mxu0 0.0
    %763 = vmatpush1.msra.mxu0 0.0
    %764 = vmatprep.subr.mxu0 0.0
    %765 = vmatpush1.msra.mxu0 0.0
    %766 = vmatprep.subr.mxu0 0.0
    %767 = vmatpush1.msra.mxu0 0.0
    %768 = vmatprep.subr.mxu0 0.0
    %769 = vmatpush1.msra.mxu0 0.0
    %770 = vmatprep.subr.mxu0 0.0
    %771 = vmatpush1.msra.mxu0 0.0
    %772 = vmatprep.subr.mxu0 0.0
    %773 = vmatpush1.msra.mxu0 0.0
    %774 = vmatprep.subr.mxu0 0.0
    %775 = vmatpush1.msra.mxu0 0.0
    %776 = vmatprep.subr.mxu0 0.0
    %777 = vmatpush1.msra.mxu0 0.0
    %778 = vmatprep.subr.mxu0 0.0
    %779 = vmatpush1.msra.mxu0 0.0
    %780 = vmatprep.subr.mxu0 0.0
    %781 = vmatpush1.msra.mxu0 0.0
    %782 = vmatprep.subr.mxu0 0.0
    %783 = vmatpush1.msra.mxu0 0.0
    %784 = vmatprep.subr.mxu0 0.0
    %785 = vmatpush1.msra.mxu0 0.0
    %786 = vmatprep.subr.mxu0 0.0
    %787 = vmatpush1.msra.mxu0 0.0
    %788 = vmatprep.subr.mxu0 0.0
    %789 = vmatpush1.msra.mxu0 0.0
    %790 = vmatprep.subr.mxu0 0.0
    %791 = vmatpush1.msra.mxu0 0.0
    %792 = vmatprep.subr.mxu0 0.0
    %793 = vmatpush1.msra.mxu0 0.0
    %794 = vmatprep.subr.mxu0 0.0
    %795 = vmatpush1.msra.mxu0 0.0
    %796 = vmatprep.subr.mxu0 0.0
    %797 = vmatpush1.msra.mxu0 0.0
    %798 = vmatprep.subr.mxu0 0.0
    %799 = vmatpush1.msra.mxu0 0.0
    %800 = vmatprep.subr.mxu0 0.0
    %801 = vmatpush1.msra.mxu0 0.0
    %802 = vmatprep.subr.mxu0 0.0
    %803 = vmatpush1.msra.mxu0 0.0
    %804 = vmatprep.mubr.f32.mxu0 0.0
    %805 = vmatmul.mubr.f32.gmra.mrb[0].mxu0 %v738
    %v806 = vpop.f32.mrb[0].mxu0
    %v807 = vadd.f32 0.0, %v806
    %v808 = vpop.f32.mrb[0].mxu0
    %809 = vdwg.mxu0
    %v810 = vadd.f32 %v735, %v807
    %v811 = vld [vmem:[#allocation3] sm:$0xff]
    %v812 = vxor.u32 %v733, 2147483648
    %v813 = vmul.f32 %v812, 1.442695
    %v814 = vpow.pop %v813
    %v815 = vadd.f32 %v814, 1.0
    %v816 = vrcp.pop %v815
    %v817 = vmul.f32 1.0, %v816
    %v818 = vtanh.pop %v733
    %820 = vrot.lane.b32.xlu0 %v811, 32
    %v821 = vpop.permute.xlu0 %820
    %v823 = vmul.f32 %v817, %v821
    %825 = vrot.lane.b32.xlu0 %v818, 64
    %v826 = vpop.permute.xlu0 %825
    %v828 = vmul.f32 %v817, %v826
    %830 = vrot.lane.b32.xlu0 %v828, 32
    %v831 = vpop.permute.xlu0 %830
    %v833 = vadd.f32 %v823, %v831
    %v834 = vtanh.pop %v833
    %836 = vrot.lane.b32.xlu0 %v834, 64
    %v837 = vpop.permute.xlu0 %836
    %v839 = vmul.f32 %v817, %v837
    %v840 = vld [vmem:[%s368] sm:$0xff]
    %v841 = vxor.u32 %v810, 2147483648
    %v842 = vmul.f32 %v841, 1.442695
    %v843 = vpow.pop %v842
    %v844 = vadd.f32 %v843, 1.0
    %v845 = vrcp.pop %v844
    %v846 = vmul.f32 1.0, %v845
    %v847 = vtanh.pop %v810
    %849 = vrot.lane.b32.xlu0 %v840, 32
    %v850 = vpop.permute.xlu0 %849
    %v852 = vmul.f32 %v846, %v850
    %854 = vrot.lane.b32.xlu0 %v847, 64
    %v855 = vpop.permute.xlu0 %854
    %v857 = vmul.f32 %v846, %v855
    %859 = vrot.lane.b32.xlu0 %v857, 32
    %v860 = vpop.permute.xlu0 %859
    %v862 = vadd.f32 %v852, %v860
    %v863 = vtanh.pop %v862
    %865 = vrot.lane.b32.xlu0 %v863, 64
    %v866 = vpop.permute.xlu0 %865
    %v868 = vmul.f32 %v846, %v866
    %870 = vrot.lane.b32.xlu0 %v839, 32
    %v871 = vpop.permute.xlu0 %870
    %873 = vst.msk [vmem:[#allocation2] sm:$0xff] %vm186, %v871
    %875 = vrot.lane.b32.xlu0 %v833, 96
    %v876 = vpop.permute.xlu0 %875
    %878 = vst.msk [vmem:[#allocation3] sm:$0xff] %vm186, %v876
    %880 = vrot.lane.b32.xlu0 %v868, 32
    %v881 = vpop.permute.xlu0 %880
    %883 = vst.msk [vmem:[%s263] sm:$0xff] %vm186, %v881
    %885 = vrot.lane.b32.xlu0 %v862, 96
    %v886 = vpop.permute.xlu0 %885
    %888 = vst.msk [vmem:[%s368] sm:$0xff] %vm186, %v886
    %s889 = scalar_lea.vmem %s4, 16
    %890 = vst.msk [vmem:[%s889] sm:$0xff] %vm186, %v871
    %s891 = scalar_lea.vmem %s164, 40
    %892 = vst.msk [vmem:[%s891] sm:$0xff] %vm186, %v881
    %s893 = scalar_lea.vmem [#allocation4], 24
    %v894 = vld [vmem:[%s893] sm:$0xff]
    %v895 = vld [vmem:[#allocation2] sm:$0xff]
    %v897 = vsel %vm186, %v895, 0
    %899 = vmatprep.subr.mxu0 0.0
    %900 = vmatpush1.msra.mxu0 %v176
    %901 = vmatprep.subr.mxu0 0.0
    %902 = vmatpush1.msra.mxu0 %v177
    %903 = vmatprep.subr.mxu0 0.0
    %904 = vmatpush1.msra.mxu0 %v178
    %905 = vmatprep.subr.mxu0 0.0
    %906 = vmatpush1.msra.mxu0 %v179
    %907 = vmatprep.subr.mxu0 0.0
    %908 = vmatpush1.msra.mxu0 0.0
    %909 = vmatprep.subr.mxu0 0.0
    %910 = vmatpush1.msra.mxu0 0.0
    %911 = vmatprep.subr.mxu0 0.0
    %912 = vmatpush1.msra.mxu0 0.0
    %913 = vmatprep.subr.mxu0 0.0
    %914 = vmatpush1.msra.mxu0 0.0
    %915 = vmatprep.subr.mxu0 0.0
    %916 = vmatpush1.msra.mxu0 0.0
    %917 = vmatprep.subr.mxu0 0.0
    %918 = vmatpush1.msra.mxu0 0.0
    %919 = vmatprep.subr.mxu0 0.0
    %920 = vmatpush1.msra.mxu0 0.0
    %921 = vmatprep.subr.mxu0 0.0
    %922 = vmatpush1.msra.mxu0 0.0
    %923 = vmatprep.subr.mxu0 0.0
    %924 = vmatpush1.msra.mxu0 0.0
    %925 = vmatprep.subr.mxu0 0.0
    %926 = vmatpush1.msra.mxu0 0.0
    %927 = vmatprep.subr.mxu0 0.0
    %928 = vmatpush1.msra.mxu0 0.0
    %929 = vmatprep.subr.mxu0 0.0
    %930 = vmatpush1.msra.mxu0 0.0
    %931 = vmatprep.subr.mxu0 0.0
    %932 = vmatpush1.msra.mxu0 0.0
    %933 = vmatprep.subr.mxu0 0.0
    %934 = vmatpush1.msra.mxu0 0.0
    %935 = vmatprep.subr.mxu0 0.0
    %936 = vmatpush1.msra.mxu0 0.0
    %937 = vmatprep.subr.mxu0 0.0
    %938 = vmatpush1.msra.mxu0 0.0
    %939 = vmatprep.subr.mxu0 0.0
    %940 = vmatpush1.msra.mxu0 0.0
    %941 = vmatprep.subr.mxu0 0.0
    %942 = vmatpush1.msra.mxu0 0.0
    %943 = vmatprep.subr.mxu0 0.0
    %944 = vmatpush1.msra.mxu0 0.0
    %945 = vmatprep.subr.mxu0 0.0
    %946 = vmatpush1.msra.mxu0 0.0
    %947 = vmatprep.subr.mxu0 0.0
    %948 = vmatpush1.msra.mxu0 0.0
    %949 = vmatprep.subr.mxu0 0.0
    %950 = vmatpush1.msra.mxu0 0.0
    %951 = vmatprep.subr.mxu0 0.0
    %952 = vmatpush1.msra.mxu0 0.0
    %953 = vmatprep.subr.mxu0 0.0
    %954 = vmatpush1.msra.mxu0 0.0
    %955 = vmatprep.subr.mxu0 0.0
    %956 = vmatpush1.msra.mxu0 0.0
    %957 = vmatprep.subr.mxu0 0.0
    %958 = vmatpush1.msra.mxu0 0.0
    %959 = vmatprep.subr.mxu0 0.0
    %960 = vmatpush1.msra.mxu0 0.0
    %961 = vmatprep.subr.mxu0 0.0
    %962 = vmatpush1.msra.mxu0 0.0
    %963 = vmatprep.mubr.f32.mxu0 0.0
    %964 = vmatmul.mubr.f32.gmra.mrb[0].mxu0 %v897
    %v965 = vpop.f32.mrb[0].mxu0
    %v966 = vadd.f32 0.0, %v965
    %v967 = vpop.f32.mrb[0].mxu0
    %968 = vdwg.mxu0
    %v969 = vadd.f32 %v894, %v966
    %s970 = scalar_lea.vmem [#allocation5], 32
    %v971 = vld [vmem:[%s970] sm:$0xff]
    %v972 = vld [vmem:[%s263] sm:$0xff]
    %v974 = vsel %vm186, %v972, 0
    %976 = vmatprep.subr.mxu0 0.0
    %977 = vmatpush1.msra.mxu0 %v180
    %978 = vmatprep.subr.mxu0 0.0
    %979 = vmatpush1.msra.mxu0 %v181
    %980 = vmatprep.subr.mxu0 0.0
    %981 = vmatpush1.msra.mxu0 %v182
    %982 = vmatprep.subr.mxu0 0.0
    %983 = vmatpush1.msra.mxu0 %v183
    %984 = vmatprep.subr.mxu0 0.0
    %985 = vmatpush1.msra.mxu0 0.0
    %986 = vmatprep.subr.mxu0 0.0
    %987 = vmatpush1.msra.mxu0 0.0
    %988 = vmatprep.subr.mxu0 0.0
    %989 = vmatpush1.msra.mxu0 0.0
    %990 = vmatprep.subr.mxu0 0.0
    %991 = vmatpush1.msra.mxu0 0.0
    %992 = vmatprep.subr.mxu0 0.0
    %993 = vmatpush1.msra.mxu0 0.0
    %994 = vmatprep.subr.mxu0 0.0
    %995 = vmatpush1.msra.mxu0 0.0
    %996 = vmatprep.subr.mxu0 0.0
    %997 = vmatpush1.msra.mxu0 0.0
    %998 = vmatprep.subr.mxu0 0.0
    %999 = vmatpush1.msra.mxu0 0.0
    %1000 = vmatprep.subr.mxu0 0.0
    %1001 = vmatpush1.msra.mxu0 0.0
    %1002 = vmatprep.subr.mxu0 0.0
    %1003 = vmatpush1.msra.mxu0 0.0
    %1004 = vmatprep.subr.mxu0 0.0
    %1005 = vmatpush1.msra.mxu0 0.0
    %1006 = vmatprep.subr.mxu0 0.0
    %1007 = vmatpush1.msra.mxu0 0.0
    %1008 = vmatprep.subr.mxu0 0.0
    %1009 = vmatpush1.msra.mxu0 0.0
    %1010 = vmatprep.subr.mxu0 0.0
    %1011 = vmatpush1.msra.mxu0 0.0
    %1012 = vmatprep.subr.mxu0 0.0
    %1013 = vmatpush1.msra.mxu0 0.0
    %1014 = vmatprep.subr.mxu0 0.0
    %1015 = vmatpush1.msra.mxu0 0.0
    %1016 = vmatprep.subr.mxu0 0.0
    %1017 = vmatpush1.msra.mxu0 0.0
    %1018 = vmatprep.subr.mxu0 0.0
    %1019 = vmatpush1.msra.mxu0 0.0
    %1020 = vmatprep.subr.mxu0 0.0
    %1021 = vmatpush1.msra.mxu0 0.0
    %1022 = vmatprep.subr.mxu0 0.0
    %1023 = vmatpush1.msra.mxu0 0.0
    %1024 = vmatprep.subr.mxu0 0.0
    %1025 = vmatpush1.msra.mxu0 0.0
    %1026 = vmatprep.subr.mxu0 0.0
    %1027 = vmatpush1.msra.mxu0 0.0
    %1028 = vmatprep.subr.mxu0 0.0
    %1029 = vmatpush1.msra.mxu0 0.0
    %1030 = vmatprep.subr.mxu0 0.0
    %1031 = vmatpush1.msra.mxu0 0.0
    %1032 = vmatprep.subr.mxu0 0.0
    %1033 = vmatpush1.msra.mxu0 0.0
    %1034 = vmatprep.subr.mxu0 0.0
    %1035 = vmatpush1.msra.mxu0 0.0
    %1036 = vmatprep.subr.mxu0 0.0
    %1037 = vmatpush1.msra.mxu0 0.0
    %1038 = vmatprep.subr.mxu0 0.0
    %1039 = vmatpush1.msra.mxu0 0.0
    %1040 = vmatprep.mubr.f32.mxu0 0.0
    %1041 = vmatmul.mubr.f32.gmra.mrb[0].mxu0 %v974
    %v1042 = vpop.f32.mrb[0].mxu0
    %v1043 = vadd.f32 0.0, %v1042
    %v1044 = vpop.f32.mrb[0].mxu0
    %1045 = vdwg.mxu0
    %v1046 = vadd.f32 %v971, %v1043
    %v1047 = vld [vmem:[#allocation3] sm:$0xff]
    %v1048 = vxor.u32 %v969, 2147483648
    %v1049 = vmul.f32 %v1048, 1.442695
    %v1050 = vpow.pop %v1049
    %v1051 = vadd.f32 %v1050, 1.0
    %v1052 = vrcp.pop %v1051
    %v1053 = vmul.f32 1.0, %v1052
    %v1054 = vtanh.pop %v969
    %1056 = vrot.lane.b32.xlu0 %v1047, 32
    %v1057 = vpop.permute.xlu0 %1056
    %v1059 = vmul.f32 %v1053, %v1057
    %1061 = vrot.lane.b32.xlu0 %v1054, 64
    %v1062 = vpop.permute.xlu0 %1061
    %v1064 = vmul.f32 %v1053, %v1062
    %1066 = vrot.lane.b32.xlu0 %v1064, 32
    %v1067 = vpop.permute.xlu0 %1066
    %v1069 = vadd.f32 %v1059, %v1067
    %v1070 = vtanh.pop %v1069
    %1072 = vrot.lane.b32.xlu0 %v1070, 64
    %v1073 = vpop.permute.xlu0 %1072
    %v1075 = vmul.f32 %v1053, %v1073
    %v1076 = vld [vmem:[%s368] sm:$0xff]
    %v1077 = vxor.u32 %v1046, 2147483648
    %v1078 = vmul.f32 %v1077, 1.442695
    %v1079 = vpow.pop %v1078
    %v1080 = vadd.f32 %v1079, 1.0
    %v1081 = vrcp.pop %v1080
    %v1082 = vmul.f32 1.0, %v1081
    %v1083 = vtanh.pop %v1046
    %1085 = vrot.lane.b32.xlu0 %v1076, 32
    %v1086 = vpop.permute.xlu0 %1085
    %v1088 = vmul.f32 %v1082, %v1086
    %1090 = vrot.lane.b32.xlu0 %v1083, 64
    %v1091 = vpop.permute.xlu0 %1090
    %v1093 = vmul.f32 %v1082, %v1091
    %1095 = vrot.lane.b32.xlu0 %v1093, 32
    %v1096 = vpop.permute.xlu0 %1095
    %v1098 = vadd.f32 %v1088, %v1096
    %v1099 = vtanh.pop %v1098
    %1101 = vrot.lane.b32.xlu0 %v1099, 64
    %v1102 = vpop.permute.xlu0 %1101
    %v1104 = vmul.f32 %v1082, %v1102
    %1106 = vrot.lane.b32.xlu0 %v1075, 32
    %v1107 = vpop.permute.xlu0 %1106
    %1109 = vst.msk [vmem:[#allocation2] sm:$0xff] %vm186, %v1107
    %1111 = vrot.lane.b32.xlu0 %v1069, 96
    %v1112 = vpop.permute.xlu0 %1111
    %1114 = vst.msk [vmem:[#allocation3] sm:$0xff] %vm186, %v1112
    %1116 = vrot.lane.b32.xlu0 %v1104, 32
    %v1117 = vpop.permute.xlu0 %1116
    %1119 = vst.msk [vmem:[%s263] sm:$0xff] %vm186, %v1117
    %1121 = vrot.lane.b32.xlu0 %v1098, 96
    %v1122 = vpop.permute.xlu0 %1121
    %1124 = vst.msk [vmem:[%s368] sm:$0xff] %vm186, %v1122
    %s1125 = scalar_lea.vmem %s4, 24
    %1126 = vst.msk [vmem:[%s1125] sm:$0xff] %vm186, %v1107
    %s1127 = scalar_lea.vmem %s164, 32
    %1128 = vst.msk [vmem:[%s1127] sm:$0xff] %vm186, %v1117
    %s1129 = scalar_lea.vmem [#allocation4], 32
    %v1130 = vld [vmem:[%s1129] sm:$0xff]
    %v1131 = vld [vmem:[#allocation2] sm:$0xff]
    %v1133 = vsel %vm186, %v1131, 0
    %1135 = vmatprep.subr.mxu0 0.0
    %1136 = vmatpush1.msra.mxu0 %v176
    %1137 = vmatprep.subr.mxu0 0.0
    %1138 = vmatpush1.msra.mxu0 %v177
    %1139 = vmatprep.subr.mxu0 0.0
    %1140 = vmatpush1.msra.mxu0 %v178
    %1141 = vmatprep.subr.mxu0 0.0
    %1142 = vmatpush1.msra.mxu0 %v179
    %1143 = vmatprep.subr.mxu0 0.0
    %1144 = vmatpush1.msra.mxu0 0.0
    %1145 = vmatprep.subr.mxu0 0.0
    %1146 = vmatpush1.msra.mxu0 0.0
    %1147 = vmatprep.subr.mxu0 0.0
    %1148 = vmatpush1.msra.mxu0 0.0
    %1149 = vmatprep.subr.mxu0 0.0
    %1150 = vmatpush1.msra.mxu0 0.0
    %1151 = vmatprep.subr.mxu0 0.0
    %1152 = vmatpush1.msra.mxu0 0.0
    %1153 = vmatprep.subr.mxu0 0.0
    %1154 = vmatpush1.msra.mxu0 0.0
    %1155 = vmatprep.subr.mxu0 0.0
    %1156 = vmatpush1.msra.mxu0 0.0
    %1157 = vmatprep.subr.mxu0 0.0
    %1158 = vmatpush1.msra.mxu0 0.0
    %1159 = vmatprep.subr.mxu0 0.0
    %1160 = vmatpush1.msra.mxu0 0.0
    %1161 = vmatprep.subr.mxu0 0.0
    %1162 = vmatpush1.msra.mxu0 0.0
    %1163 = vmatprep.subr.mxu0 0.0
    %1164 = vmatpush1.msra.mxu0 0.0
    %1165 = vmatprep.subr.mxu0 0.0
    %1166 = vmatpush1.msra.mxu0 0.0
    %1167 = vmatprep.subr.mxu0 0.0
    %1168 = vmatpush1.msra.mxu0 0.0
    %1169 = vmatprep.subr.mxu0 0.0
    %1170 = vmatpush1.msra.mxu0 0.0
    %1171 = vmatprep.subr.mxu0 0.0
    %1172 = vmatpush1.msra.mxu0 0.0
    %1173 = vmatprep.subr.mxu0 0.0
    %1174 = vmatpush1.msra.mxu0 0.0
    %1175 = vmatprep.subr.mxu0 0.0
    %1176 = vmatpush1.msra.mxu0 0.0
    %1177 = vmatprep.subr.mxu0 0.0
    %1178 = vmatpush1.msra.mxu0 0.0
    %1179 = vmatprep.subr.mxu0 0.0
    %1180 = vmatpush1.msra.mxu0 0.0
    %1181 = vmatprep.subr.mxu0 0.0
    %1182 = vmatpush1.msra.mxu0 0.0
    %1183 = vmatprep.subr.mxu0 0.0
    %1184 = vmatpush1.msra.mxu0 0.0
    %1185 = vmatprep.subr.mxu0 0.0
    %1186 = vmatpush1.msra.mxu0 0.0
    %1187 = vmatprep.subr.mxu0 0.0
    %1188 = vmatpush1.msra.mxu0 0.0
    %1189 = vmatprep.subr.mxu0 0.0
    %1190 = vmatpush1.msra.mxu0 0.0
    %1191 = vmatprep.subr.mxu0 0.0
    %1192 = vmatpush1.msra.mxu0 0.0
    %1193 = vmatprep.subr.mxu0 0.0
    %1194 = vmatpush1.msra.mxu0 0.0
    %1195 = vmatprep.subr.mxu0 0.0
    %1196 = vmatpush1.msra.mxu0 0.0
    %1197 = vmatprep.subr.mxu0 0.0
    %1198 = vmatpush1.msra.mxu0 0.0
    %1199 = vmatprep.mubr.f32.mxu0 0.0
    %1200 = vmatmul.mubr.f32.gmra.mrb[0].mxu0 %v1133
    %v1201 = vpop.f32.mrb[0].mxu0
    %v1202 = vadd.f32 0.0, %v1201
    %v1203 = vpop.f32.mrb[0].mxu0
    %1204 = vdwg.mxu0
    %v1205 = vadd.f32 %v1130, %v1202
    %s1206 = scalar_lea.vmem [#allocation5], 24
    %v1207 = vld [vmem:[%s1206] sm:$0xff]
    %v1208 = vld [vmem:[%s263] sm:$0xff]
    %v1210 = vsel %vm186, %v1208, 0
    %1212 = vmatprep.subr.mxu0 0.0
    %1213 = vmatpush1.msra.mxu0 %v180
    %1214 = vmatprep.subr.mxu0 0.0
    %1215 = vmatpush1.msra.mxu0 %v181
    %1216 = vmatprep.subr.mxu0 0.0
    %1217 = vmatpush1.msra.mxu0 %v182
    %1218 = vmatprep.subr.mxu0 0.0
    %1219 = vmatpush1.msra.mxu0 %v183
    %1220 = vmatprep.subr.mxu0 0.0
    %1221 = vmatpush1.msra.mxu0 0.0
    %1222 = vmatprep.subr.mxu0 0.0
    %1223 = vmatpush1.msra.mxu0 0.0
    %1224 = vmatprep.subr.mxu0 0.0
    %1225 = vmatpush1.msra.mxu0 0.0
    %1226 = vmatprep.subr.mxu0 0.0
    %1227 = vmatpush1.msra.mxu0 0.0
    %1228 = vmatprep.subr.mxu0 0.0
    %1229 = vmatpush1.msra.mxu0 0.0
    %1230 = vmatprep.subr.mxu0 0.0
    %1231 = vmatpush1.msra.mxu0 0.0
    %1232 = vmatprep.subr.mxu0 0.0
    %1233 = vmatpush1.msra.mxu0 0.0
    %1234 = vmatprep.subr.mxu0 0.0
    %1235 = vmatpush1.msra.mxu0 0.0
    %1236 = vmatprep.subr.mxu0 0.0
    %1237 = vmatpush1.msra.mxu0 0.0
    %1238 = vmatprep.subr.mxu0 0.0
    %1239 = vmatpush1.msra.mxu0 0.0
    %1240 = vmatprep.subr.mxu0 0.0
    %1241 = vmatpush1.msra.mxu0 0.0
    %1242 = vmatprep.subr.mxu0 0.0
    %1243 = vmatpush1.msra.mxu0 0.0
    %1244 = vmatprep.subr.mxu0 0.0
    %1245 = vmatpush1.msra.mxu0 0.0
    %1246 = vmatprep.subr.mxu0 0.0
    %1247 = vmatpush1.msra.mxu0 0.0
    %1248 = vmatprep.subr.mxu0 0.0
    %1249 = vmatpush1.msra.mxu0 0.0
    %1250 = vmatprep.subr.mxu0 0.0
    %1251 = vmatpush1.msra.mxu0 0.0
    %1252 = vmatprep.subr.mxu0 0.0
    %1253 = vmatpush1.msra.mxu0 0.0
    %1254 = vmatprep.subr.mxu0 0.0
    %1255 = vmatpush1.msra.mxu0 0.0
    %1256 = vmatprep.subr.mxu0 0.0
    %1257 = vmatpush1.msra.mxu0 0.0
    %1258 = vmatprep.subr.mxu0 0.0
    %1259 = vmatpush1.msra.mxu0 0.0
    %1260 = vmatprep.subr.mxu0 0.0
    %1261 = vmatpush1.msra.mxu0 0.0
    %1262 = vmatprep.subr.mxu0 0.0
    %1263 = vmatpush1.msra.mxu0 0.0
    %1264 = vmatprep.subr.mxu0 0.0
    %1265 = vmatpush1.msra.mxu0 0.0
    %1266 = vmatprep.subr.mxu0 0.0
    %1267 = vmatpush1.msra.mxu0 0.0
    %1268 = vmatprep.subr.mxu0 0.0
    %1269 = vmatpush1.msra.mxu0 0.0
    %1270 = vmatprep.subr.mxu0 0.0
    %1271 = vmatpush1.msra.mxu0 0.0
    %1272 = vmatprep.subr.mxu0 0.0
    %1273 = vmatpush1.msra.mxu0 0.0
    %1274 = vmatprep.subr.mxu0 0.0
    %1275 = vmatpush1.msra.mxu0 0.0
    %1276 = vmatprep.mubr.f32.mxu0 0.0
    %1277 = vmatmul.mubr.f32.gmra.mrb[0].mxu0 %v1210
    %v1278 = vpop.f32.mrb[0].mxu0
    %v1279 = vadd.f32 0.0, %v1278
    %v1280 = vpop.f32.mrb[0].mxu0
    %1281 = vdwg.mxu0
    %v1282 = vadd.f32 %v1207, %v1279
    %v1283 = vld [vmem:[#allocation3] sm:$0xff]
    %v1284 = vxor.u32 %v1205, 2147483648
    %v1285 = vmul.f32 %v1284, 1.442695
    %v1286 = vpow.pop %v1285
    %v1287 = vadd.f32 %v1286, 1.0
    %v1288 = vrcp.pop %v1287
    %v1289 = vmul.f32 1.0, %v1288
    %v1290 = vtanh.pop %v1205
    %1292 = vrot.lane.b32.xlu0 %v1283, 32
    %v1293 = vpop.permute.xlu0 %1292
    %v1295 = vmul.f32 %v1289, %v1293
    %1297 = vrot.lane.b32.xlu0 %v1290, 64
    %v1298 = vpop.permute.xlu0 %1297
    %v1300 = vmul.f32 %v1289, %v1298
    %1302 = vrot.lane.b32.xlu0 %v1300, 32
    %v1303 = vpop.permute.xlu0 %1302
    %v1305 = vadd.f32 %v1295, %v1303
    %v1306 = vtanh.pop %v1305
    %1308 = vrot.lane.b32.xlu0 %v1306, 64
    %v1309 = vpop.permute.xlu0 %1308
    %v1311 = vmul.f32 %v1289, %v1309
    %v1312 = vld [vmem:[%s368] sm:$0xff]
    %v1313 = vxor.u32 %v1282, 2147483648
    %v1314 = vmul.f32 %v1313, 1.442695
    %v1315 = vpow.pop %v1314
    %v1316 = vadd.f32 %v1315, 1.0
    %v1317 = vrcp.pop %v1316
    %v1318 = vmul.f32 1.0, %v1317
    %v1319 = vtanh.pop %v1282
    %1321 = vrot.lane.b32.xlu0 %v1312, 32
    %v1322 = vpop.permute.xlu0 %1321
    %v1324 = vmul.f32 %v1318, %v1322
    %1326 = vrot.lane.b32.xlu0 %v1319, 64
    %v1327 = vpop.permute.xlu0 %1326
    %v1329 = vmul.f32 %v1318, %v1327
    %1331 = vrot.lane.b32.xlu0 %v1329, 32
    %v1332 = vpop.permute.xlu0 %1331
    %v1334 = vadd.f32 %v1324, %v1332
    %v1335 = vtanh.pop %v1334
    %1337 = vrot.lane.b32.xlu0 %v1335, 64
    %v1338 = vpop.permute.xlu0 %1337
    %v1340 = vmul.f32 %v1318, %v1338
    %1342 = vrot.lane.b32.xlu0 %v1311, 32
    %v1343 = vpop.permute.xlu0 %1342
    %1345 = vst.msk [vmem:[#allocation2] sm:$0xff] %vm186, %v1343
    %1347 = vrot.lane.b32.xlu0 %v1305, 96
    %v1348 = vpop.permute.xlu0 %1347
    %1350 = vst.msk [vmem:[#allocation3] sm:$0xff] %vm186, %v1348
    %1352 = vrot.lane.b32.xlu0 %v1340, 32
    %v1353 = vpop.permute.xlu0 %1352
    %1355 = vst.msk [vmem:[%s263] sm:$0xff] %vm186, %v1353
    %1357 = vrot.lane.b32.xlu0 %v1334, 96
    %v1358 = vpop.permute.xlu0 %1357
    %1360 = vst.msk [vmem:[%s368] sm:$0xff] %vm186, %v1358
    %s1361 = scalar_lea.vmem %s4, 32
    %1362 = vst.msk [vmem:[%s1361] sm:$0xff] %vm186, %v1343
    %s1363 = scalar_lea.vmem %s164, 24
    %1364 = vst.msk [vmem:[%s1363] sm:$0xff] %vm186, %v1353
    %s1365 = scalar_lea.vmem [#allocation4], 40
    %v1366 = vld [vmem:[%s1365] sm:$0xff]
    %v1367 = vld [vmem:[#allocation2] sm:$0xff]
    %v1369 = vsel %vm186, %v1367, 0
    %1371 = vmatprep.subr.mxu0 0.0
    %1372 = vmatpush1.msra.mxu0 %v176
    %1373 = vmatprep.subr.mxu0 0.0
    %1374 = vmatpush1.msra.mxu0 %v177
    %1375 = vmatprep.subr.mxu0 0.0
    %1376 = vmatpush1.msra.mxu0 %v178
    %1377 = vmatprep.subr.mxu0 0.0
    %1378 = vmatpush1.msra.mxu0 %v179
    %1379 = vmatprep.subr.mxu0 0.0
    %1380 = vmatpush1.msra.mxu0 0.0
    %1381 = vmatprep.subr.mxu0 0.0
    %1382 = vmatpush1.msra.mxu0 0.0
    %1383 = vmatprep.subr.mxu0 0.0
    %1384 = vmatpush1.msra.mxu0 0.0
    %1385 = vmatprep.subr.mxu0 0.0
    %1386 = vmatpush1.msra.mxu0 0.0
    %1387 = vmatprep.subr.mxu0 0.0
    %1388 = vmatpush1.msra.mxu0 0.0
    %1389 = vmatprep.subr.mxu0 0.0
    %1390 = vmatpush1.msra.mxu0 0.0
    %1391 = vmatprep.subr.mxu0 0.0
    %1392 = vmatpush1.msra.mxu0 0.0
    %1393 = vmatprep.subr.mxu0 0.0
    %1394 = vmatpush1.msra.mxu0 0.0
    %1395 = vmatprep.subr.mxu0 0.0
    %1396 = vmatpush1.msra.mxu0 0.0
    %1397 = vmatprep.subr.mxu0 0.0
    %1398 = vmatpush1.msra.mxu0 0.0
    %1399 = vmatprep.subr.mxu0 0.0
    %1400 = vmatpush1.msra.mxu0 0.0
    %1401 = vmatprep.subr.mxu0 0.0
    %1402 = vmatpush1.msra.mxu0 0.0
    %1403 = vmatprep.subr.mxu0 0.0
    %1404 = vmatpush1.msra.mxu0 0.0
    %1405 = vmatprep.subr.mxu0 0.0
    %1406 = vmatpush1.msra.mxu0 0.0
    %1407 = vmatprep.subr.mxu0 0.0
    %1408 = vmatpush1.msra.mxu0 0.0
    %1409 = vmatprep.subr.mxu0 0.0
    %1410 = vmatpush1.msra.mxu0 0.0
    %1411 = vmatprep.subr.mxu0 0.0
    %1412 = vmatpush1.msra.mxu0 0.0
    %1413 = vmatprep.subr.mxu0 0.0
    %1414 = vmatpush1.msra.mxu0 0.0
    %1415 = vmatprep.subr.mxu0 0.0
    %1416 = vmatpush1.msra.mxu0 0.0
    %1417 = vmatprep.subr.mxu0 0.0
    %1418 = vmatpush1.msra.mxu0 0.0
    %1419 = vmatprep.subr.mxu0 0.0
    %1420 = vmatpush1.msra.mxu0 0.0
    %1421 = vmatprep.subr.mxu0 0.0
    %1422 = vmatpush1.msra.mxu0 0.0
    %1423 = vmatprep.subr.mxu0 0.0
    %1424 = vmatpush1.msra.mxu0 0.0
    %1425 = vmatprep.subr.mxu0 0.0
    %1426 = vmatpush1.msra.mxu0 0.0
    %1427 = vmatprep.subr.mxu0 0.0
    %1428 = vmatpush1.msra.mxu0 0.0
    %1429 = vmatprep.subr.mxu0 0.0
    %1430 = vmatpush1.msra.mxu0 0.0
    %1431 = vmatprep.subr.mxu0 0.0
    %1432 = vmatpush1.msra.mxu0 0.0
    %1433 = vmatprep.subr.mxu0 0.0
    %1434 = vmatpush1.msra.mxu0 0.0
    %1435 = vmatprep.mubr.f32.mxu0 0.0
    %1436 = vmatmul.mubr.f32.gmra.mrb[0].mxu0 %v1369
    %v1437 = vpop.f32.mrb[0].mxu0
    %v1438 = vadd.f32 0.0, %v1437
    %v1439 = vpop.f32.mrb[0].mxu0
    %1440 = vdwg.mxu0
    %v1441 = vadd.f32 %v1366, %v1438
    %s1442 = scalar_lea.vmem [#allocation5], 16
    %v1443 = vld [vmem:[%s1442] sm:$0xff]
    %v1444 = vld [vmem:[%s263] sm:$0xff]
    %v1446 = vsel %vm186, %v1444, 0
    %1448 = vmatprep.subr.mxu0 0.0
    %1449 = vmatpush1.msra.mxu0 %v180
    %1450 = vmatprep.subr.mxu0 0.0
    %1451 = vmatpush1.msra.mxu0 %v181
    %1452 = vmatprep.subr.mxu0 0.0
    %1453 = vmatpush1.msra.mxu0 %v182
    %1454 = vmatprep.subr.mxu0 0.0
    %1455 = vmatpush1.msra.mxu0 %v183
    %1456 = vmatprep.subr.mxu0 0.0
    %1457 = vmatpush1.msra.mxu0 0.0
    %1458 = vmatprep.subr.mxu0 0.0
    %1459 = vmatpush1.msra.mxu0 0.0
    %1460 = vmatprep.subr.mxu0 0.0
    %1461 = vmatpush1.msra.mxu0 0.0
    %1462 = vmatprep.subr.mxu0 0.0
    %1463 = vmatpush1.msra.mxu0 0.0
    %1464 = vmatprep.subr.mxu0 0.0
    %1465 = vmatpush1.msra.mxu0 0.0
    %1466 = vmatprep.subr.mxu0 0.0
    %1467 = vmatpush1.msra.mxu0 0.0
    %1468 = vmatprep.subr.mxu0 0.0
    %1469 = vmatpush1.msra.mxu0 0.0
    %1470 = vmatprep.subr.mxu0 0.0
    %1471 = vmatpush1.msra.mxu0 0.0
    %1472 = vmatprep.subr.mxu0 0.0
    %1473 = vmatpush1.msra.mxu0 0.0
    %1474 = vmatprep.subr.mxu0 0.0
    %1475 = vmatpush1.msra.mxu0 0.0
    %1476 = vmatprep.subr.mxu0 0.0
    %1477 = vmatpush1.msra.mxu0 0.0
    %1478 = vmatprep.subr.mxu0 0.0
    %1479 = vmatpush1.msra.mxu0 0.0
    %1480 = vmatprep.subr.mxu0 0.0
    %1481 = vmatpush1.msra.mxu0 0.0
    %1482 = vmatprep.subr.mxu0 0.0
    %1483 = vmatpush1.msra.mxu0 0.0
    %1484 = vmatprep.subr.mxu0 0.0
    %1485 = vmatpush1.msra.mxu0 0.0
    %1486 = vmatprep.subr.mxu0 0.0
    %1487 = vmatpush1.msra.mxu0 0.0
    %1488 = vmatprep.subr.mxu0 0.0
    %1489 = vmatpush1.msra.mxu0 0.0
    %1490 = vmatprep.subr.mxu0 0.0
    %1491 = vmatpush1.msra.mxu0 0.0
    %1492 = vmatprep.subr.mxu0 0.0
    %1493 = vmatpush1.msra.mxu0 0.0
    %1494 = vmatprep.subr.mxu0 0.0
    %1495 = vmatpush1.msra.mxu0 0.0
    %1496 = vmatprep.subr.mxu0 0.0
    %1497 = vmatpush1.msra.mxu0 0.0
    %1498 = vmatprep.subr.mxu0 0.0
    %1499 = vmatpush1.msra.mxu0 0.0
    %1500 = vmatprep.subr.mxu0 0.0
    %1501 = vmatpush1.msra.mxu0 0.0
    %1502 = vmatprep.subr.mxu0 0.0
    %1503 = vmatpush1.msra.mxu0 0.0
    %1504 = vmatprep.subr.mxu0 0.0
    %1505 = vmatpush1.msra.mxu0 0.0
    %1506 = vmatprep.subr.mxu0 0.0
    %1507 = vmatpush1.msra.mxu0 0.0
    %1508 = vmatprep.subr.mxu0 0.0
    %1509 = vmatpush1.msra.mxu0 0.0
    %1510 = vmatprep.subr.mxu0 0.0
    %1511 = vmatpush1.msra.mxu0 0.0
    %1512 = vmatprep.mubr.f32.mxu0 0.0
    %1513 = vmatmul.mubr.f32.gmra.mrb[0].mxu0 %v1446
    %v1514 = vpop.f32.mrb[0].mxu0
    %v1515 = vadd.f32 0.0, %v1514
    %v1516 = vpop.f32.mrb[0].mxu0
    %1517 = vdwg.mxu0
    %v1518 = vadd.f32 %v1443, %v1515
    %v1519 = vld [vmem:[#allocation3] sm:$0xff]
    %v1520 = vxor.u32 %v1441, 2147483648
    %v1521 = vmul.f32 %v1520, 1.442695
    %v1522 = vpow.pop %v1521
    %v1523 = vadd.f32 %v1522, 1.0
    %v1524 = vrcp.pop %v1523
    %v1525 = vmul.f32 1.0, %v1524
    %v1526 = vtanh.pop %v1441
    %1528 = vrot.lane.b32.xlu0 %v1519, 32
    %v1529 = vpop.permute.xlu0 %1528
    %v1531 = vmul.f32 %v1525, %v1529
    %1533 = vrot.lane.b32.xlu0 %v1526, 64
    %v1534 = vpop.permute.xlu0 %1533
    %v1536 = vmul.f32 %v1525, %v1534
    %1538 = vrot.lane.b32.xlu0 %v1536, 32
    %v1539 = vpop.permute.xlu0 %1538
    %v1541 = vadd.f32 %v1531, %v1539
    %v1542 = vtanh.pop %v1541
    %1544 = vrot.lane.b32.xlu0 %v1542, 64
    %v1545 = vpop.permute.xlu0 %1544
    %v1547 = vmul.f32 %v1525, %v1545
    %v1548 = vld [vmem:[%s368] sm:$0xff]
    %v1549 = vxor.u32 %v1518, 2147483648
    %v1550 = vmul.f32 %v1549, 1.442695
    %v1551 = vpow.pop %v1550
    %v1552 = vadd.f32 %v1551, 1.0
    %v1553 = vrcp.pop %v1552
    %v1554 = vmul.f32 1.0, %v1553
    %v1555 = vtanh.pop %v1518
    %1557 = vrot.lane.b32.xlu0 %v1548, 32
    %v1558 = vpop.permute.xlu0 %1557
    %v1560 = vmul.f32 %v1554, %v1558
    %1562 = vrot.lane.b32.xlu0 %v1555, 64
    %v1563 = vpop.permute.xlu0 %1562
    %v1565 = vmul.f32 %v1554, %v1563
    %1567 = vrot.lane.b32.xlu0 %v1565, 32
    %v1568 = vpop.permute.xlu0 %1567
    %v1570 = vadd.f32 %v1560, %v1568
    %v1571 = vtanh.pop %v1570
    %1573 = vrot.lane.b32.xlu0 %v1571, 64
    %v1574 = vpop.permute.xlu0 %1573
    %v1576 = vmul.f32 %v1554, %v1574
    %1578 = vrot.lane.b32.xlu0 %v1547, 32
    %v1579 = vpop.permute.xlu0 %1578
    %1581 = vst.msk [vmem:[#allocation2] sm:$0xff] %vm186, %v1579
    %1583 = vrot.lane.b32.xlu0 %v1541, 96
    %v1584 = vpop.permute.xlu0 %1583
    %1586 = vst.msk [vmem:[#allocation3] sm:$0xff] %vm186, %v1584
    %1588 = vrot.lane.b32.xlu0 %v1576, 32
    %v1589 = vpop.permute.xlu0 %1588
    %1591 = vst.msk [vmem:[%s263] sm:$0xff] %vm186, %v1589
    %1593 = vrot.lane.b32.xlu0 %v1570, 96
    %v1594 = vpop.permute.xlu0 %1593
    %1596 = vst.msk [vmem:[%s368] sm:$0xff] %vm186, %v1594
    %s1597 = scalar_lea.vmem %s4, 40
    %1598 = vst.msk [vmem:[%s1597] sm:$0xff] %vm186, %v1579
    %s1599 = scalar_lea.vmem %s164, 16
    %1600 = vst.msk [vmem:[%s1599] sm:$0xff] %vm186, %v1589
    %s1601 = scalar_lea.vmem [#allocation4], 48
    %v1602 = vld [vmem:[%s1601] sm:$0xff]
    %v1603 = vld [vmem:[#allocation2] sm:$0xff]
    %v1605 = vsel %vm186, %v1603, 0
    %1607 = vmatprep.subr.mxu0 0.0
    %1608 = vmatpush1.msra.mxu0 %v176
    %1609 = vmatprep.subr.mxu0 0.0
    %1610 = vmatpush1.msra.mxu0 %v177
    %1611 = vmatprep.subr.mxu0 0.0
    %1612 = vmatpush1.msra.mxu0 %v178
    %1613 = vmatprep.subr.mxu0 0.0
    %1614 = vmatpush1.msra.mxu0 %v179
    %1615 = vmatprep.subr.mxu0 0.0
    %1616 = vmatpush1.msra.mxu0 0.0
    %1617 = vmatprep.subr.mxu0 0.0
    %1618 = vmatpush1.msra.mxu0 0.0
    %1619 = vmatprep.subr.mxu0 0.0
    %1620 = vmatpush1.msra.mxu0 0.0
    %1621 = vmatprep.subr.mxu0 0.0
    %1622 = vmatpush1.msra.mxu0 0.0
    %1623 = vmatprep.subr.mxu0 0.0
    %1624 = vmatpush1.msra.mxu0 0.0
    %1625 = vmatprep.subr.mxu0 0.0
    %1626 = vmatpush1.msra.mxu0 0.0
    %1627 = vmatprep.subr.mxu0 0.0
    %1628 = vmatpush1.msra.mxu0 0.0
    %1629 = vmatprep.subr.mxu0 0.0
    %1630 = vmatpush1.msra.mxu0 0.0
    %1631 = vmatprep.subr.mxu0 0.0
    %1632 = vmatpush1.msra.mxu0 0.0
    %1633 = vmatprep.subr.mxu0 0.0
    %1634 = vmatpush1.msra.mxu0 0.0
    %1635 = vmatprep.subr.mxu0 0.0
    %1636 = vmatpush1.msra.mxu0 0.0
    %1637 = vmatprep.subr.mxu0 0.0
    %1638 = vmatpush1.msra.mxu0 0.0
    %1639 = vmatprep.subr.mxu0 0.0
    %1640 = vmatpush1.msra.mxu0 0.0
    %1641 = vmatprep.subr.mxu0 0.0
    %1642 = vmatpush1.msra.mxu0 0.0
    %1643 = vmatprep.subr.mxu0 0.0
    %1644 = vmatpush1.msra.mxu0 0.0
    %1645 = vmatprep.subr.mxu0 0.0
    %1646 = vmatpush1.msra.mxu0 0.0
    %1647 = vmatprep.subr.mxu0 0.0
    %1648 = vmatpush1.msra.mxu0 0.0
    %1649 = vmatprep.subr.mxu0 0.0
    %1650 = vmatpush1.msra.mxu0 0.0
    %1651 = vmatprep.subr.mxu0 0.0
    %1652 = vmatpush1.msra.mxu0 0.0
    %1653 = vmatprep.subr.mxu0 0.0
    %1654 = vmatpush1.msra.mxu0 0.0
    %1655 = vmatprep.subr.mxu0 0.0
    %1656 = vmatpush1.msra.mxu0 0.0
    %1657 = vmatprep.subr.mxu0 0.0
    %1658 = vmatpush1.msra.mxu0 0.0
    %1659 = vmatprep.subr.mxu0 0.0
    %1660 = vmatpush1.msra.mxu0 0.0
    %1661 = vmatprep.subr.mxu0 0.0
    %1662 = vmatpush1.msra.mxu0 0.0
    %1663 = vmatprep.subr.mxu0 0.0
    %1664 = vmatpush1.msra.mxu0 0.0
    %1665 = vmatprep.subr.mxu0 0.0
    %1666 = vmatpush1.msra.mxu0 0.0
    %1667 = vmatprep.subr.mxu0 0.0
    %1668 = vmatpush1.msra.mxu0 0.0
    %1669 = vmatprep.subr.mxu0 0.0
    %1670 = vmatpush1.msra.mxu0 0.0
    %1671 = vmatprep.mubr.f32.mxu0 0.0
    %1672 = vmatmul.mubr.f32.gmra.mrb[0].mxu0 %v1605
    %v1673 = vpop.f32.mrb[0].mxu0
    %v1674 = vadd.f32 0.0, %v1673
    %v1675 = vpop.f32.mrb[0].mxu0
    %1676 = vdwg.mxu0
    %v1677 = vadd.f32 %v1602, %v1674
    %s1678 = scalar_lea.vmem [#allocation5], 8
    %v1679 = vld [vmem:[%s1678] sm:$0xff]
    %v1680 = vld [vmem:[%s263] sm:$0xff]
    %v1682 = vsel %vm186, %v1680, 0
    %1684 = vmatprep.subr.mxu0 0.0
    %1685 = vmatpush1.msra.mxu0 %v180
    %1686 = vmatprep.subr.mxu0 0.0
    %1687 = vmatpush1.msra.mxu0 %v181
    %1688 = vmatprep.subr.mxu0 0.0
    %1689 = vmatpush1.msra.mxu0 %v182
    %1690 = vmatprep.subr.mxu0 0.0
    %1691 = vmatpush1.msra.mxu0 %v183
    %1692 = vmatprep.subr.mxu0 0.0
    %1693 = vmatpush1.msra.mxu0 0.0
    %1694 = vmatprep.subr.mxu0 0.0
    %1695 = vmatpush1.msra.mxu0 0.0
    %1696 = vmatprep.subr.mxu0 0.0
    %1697 = vmatpush1.msra.mxu0 0.0
    %1698 = vmatprep.subr.mxu0 0.0
    %1699 = vmatpush1.msra.mxu0 0.0
    %1700 = vmatprep.subr.mxu0 0.0
    %1701 = vmatpush1.msra.mxu0 0.0
    %1702 = vmatprep.subr.mxu0 0.0
    %1703 = vmatpush1.msra.mxu0 0.0
    %1704 = vmatprep.subr.mxu0 0.0
    %1705 = vmatpush1.msra.mxu0 0.0
    %1706 = vmatprep.subr.mxu0 0.0
    %1707 = vmatpush1.msra.mxu0 0.0
    %1708 = vmatprep.subr.mxu0 0.0
    %1709 = vmatpush1.msra.mxu0 0.0
    %1710 = vmatprep.subr.mxu0 0.0
    %1711 = vmatpush1.msra.mxu0 0.0
    %1712 = vmatprep.subr.mxu0 0.0
    %1713 = vmatpush1.msra.mxu0 0.0
    %1714 = vmatprep.subr.mxu0 0.0
    %1715 = vmatpush1.msra.mxu0 0.0
    %1716 = vmatprep.subr.mxu0 0.0
    %1717 = vmatpush1.msra.mxu0 0.0
    %1718 = vmatprep.subr.mxu0 0.0
    %1719 = vmatpush1.msra.mxu0 0.0
    %1720 = vmatprep.subr.mxu0 0.0
    %1721 = vmatpush1.msra.mxu0 0.0
    %1722 = vmatprep.subr.mxu0 0.0
    %1723 = vmatpush1.msra.mxu0 0.0
    %1724 = vmatprep.subr.mxu0 0.0
    %1725 = vmatpush1.msra.mxu0 0.0
    %1726 = vmatprep.subr.mxu0 0.0
    %1727 = vmatpush1.msra.mxu0 0.0
    %1728 = vmatprep.subr.mxu0 0.0
    %1729 = vmatpush1.msra.mxu0 0.0
    %1730 = vmatprep.subr.mxu0 0.0
    %1731 = vmatpush1.msra.mxu0 0.0
    %1732 = vmatprep.subr.mxu0 0.0
    %1733 = vmatpush1.msra.mxu0 0.0
    %1734 = vmatprep.subr.mxu0 0.0
    %1735 = vmatpush1.msra.mxu0 0.0
    %1736 = vmatprep.subr.mxu0 0.0
    %1737 = vmatpush1.msra.mxu0 0.0
    %1738 = vmatprep.subr.mxu0 0.0
    %1739 = vmatpush1.msra.mxu0 0.0
    %1740 = vmatprep.subr.mxu0 0.0
    %1741 = vmatpush1.msra.mxu0 0.0
    %1742 = vmatprep.subr.mxu0 0.0
    %1743 = vmatpush1.msra.mxu0 0.0
    %1744 = vmatprep.subr.mxu0 0.0
    %1745 = vmatpush1.msra.mxu0 0.0
    %1746 = vmatprep.subr.mxu0 0.0
    %1747 = vmatpush1.msra.mxu0 0.0
    %1748 = vmatprep.mubr.f32.mxu0 0.0
    %1749 = vmatmul.mubr.f32.gmra.mrb[0].mxu0 %v1682
    %v1750 = vpop.f32.mrb[0].mxu0
    %v1751 = vadd.f32 0.0, %v1750
    %v1752 = vpop.f32.mrb[0].mxu0
    %1753 = vdwg.mxu0
    %v1754 = vadd.f32 %v1679, %v1751
    %v1755 = vld [vmem:[#allocation3] sm:$0xff]
    %v1756 = vxor.u32 %v1677, 2147483648
    %v1757 = vmul.f32 %v1756, 1.442695
    %v1758 = vpow.pop %v1757
    %v1759 = vadd.f32 %v1758, 1.0
    %v1760 = vrcp.pop %v1759
    %v1761 = vmul.f32 1.0, %v1760
    %v1762 = vtanh.pop %v1677
    %1764 = vrot.lane.b32.xlu0 %v1755, 32
    %v1765 = vpop.permute.xlu0 %1764
    %v1767 = vmul.f32 %v1761, %v1765
    %1769 = vrot.lane.b32.xlu0 %v1762, 64
    %v1770 = vpop.permute.xlu0 %1769
    %v1772 = vmul.f32 %v1761, %v1770
    %1774 = vrot.lane.b32.xlu0 %v1772, 32
    %v1775 = vpop.permute.xlu0 %1774
    %v1777 = vadd.f32 %v1767, %v1775
    %v1778 = vtanh.pop %v1777
    %1780 = vrot.lane.b32.xlu0 %v1778, 64
    %v1781 = vpop.permute.xlu0 %1780
    %v1783 = vmul.f32 %v1761, %v1781
    %v1784 = vld [vmem:[%s368] sm:$0xff]
    %v1785 = vxor.u32 %v1754, 2147483648
    %v1786 = vmul.f32 %v1785, 1.442695
    %v1787 = vpow.pop %v1786
    %v1788 = vadd.f32 %v1787, 1.0
    %v1789 = vrcp.pop %v1788
    %v1790 = vmul.f32 1.0, %v1789
    %v1791 = vtanh.pop %v1754
    %1793 = vrot.lane.b32.xlu0 %v1784, 32
    %v1794 = vpop.permute.xlu0 %1793
    %v1796 = vmul.f32 %v1790, %v1794
    %1798 = vrot.lane.b32.xlu0 %v1791, 64
    %v1799 = vpop.permute.xlu0 %1798
    %v1801 = vmul.f32 %v1790, %v1799
    %1803 = vrot.lane.b32.xlu0 %v1801, 32
    %v1804 = vpop.permute.xlu0 %1803
    %v1806 = vadd.f32 %v1796, %v1804
    %v1807 = vtanh.pop %v1806
    %1809 = vrot.lane.b32.xlu0 %v1807, 64
    %v1810 = vpop.permute.xlu0 %1809
    %v1812 = vmul.f32 %v1790, %v1810
    %1814 = vrot.lane.b32.xlu0 %v1783, 32
    %v1815 = vpop.permute.xlu0 %1814
    %1817 = vst.msk [vmem:[#allocation2] sm:$0xff] %vm186, %v1815
    %1819 = vrot.lane.b32.xlu0 %v1777, 96
    %v1820 = vpop.permute.xlu0 %1819
    %1822 = vst.msk [vmem:[#allocation3] sm:$0xff] %vm186, %v1820
    %1824 = vrot.lane.b32.xlu0 %v1812, 32
    %v1825 = vpop.permute.xlu0 %1824
    %1827 = vst.msk [vmem:[%s263] sm:$0xff] %vm186, %v1825
    %1829 = vrot.lane.b32.xlu0 %v1806, 96
    %v1830 = vpop.permute.xlu0 %1829
    %1832 = vst.msk [vmem:[%s368] sm:$0xff] %vm186, %v1830
    %s1833 = scalar_lea.vmem %s4, 48
    %1834 = vst.msk [vmem:[%s1833] sm:$0xff] %vm186, %v1815
    %s1835 = scalar_lea.vmem %s164, 8
    %1836 = vst.msk [vmem:[%s1835] sm:$0xff] %vm186, %v1825
    %s1837 = scalar_lea.vmem [#allocation4], 56
    %v1838 = vld [vmem:[%s1837] sm:$0xff]
    %v1839 = vld [vmem:[#allocation2] sm:$0xff]
    %v1841 = vsel %vm186, %v1839, 0
    %1843 = vmatprep.subr.mxu0 0.0
    %1844 = vmatpush1.msra.mxu0 %v176
    %1845 = vmatprep.subr.mxu0 0.0
    %1846 = vmatpush1.msra.mxu0 %v177
    %1847 = vmatprep.subr.mxu0 0.0
    %1848 = vmatpush1.msra.mxu0 %v178
    %1849 = vmatprep.subr.mxu0 0.0
    %1850 = vmatpush1.msra.mxu0 %v179
    %1851 = vmatprep.subr.mxu0 0.0
    %1852 = vmatpush1.msra.mxu0 0.0
    %1853 = vmatprep.subr.mxu0 0.0
    %1854 = vmatpush1.msra.mxu0 0.0
    %1855 = vmatprep.subr.mxu0 0.0
    %1856 = vmatpush1.msra.mxu0 0.0
    %1857 = vmatprep.subr.mxu0 0.0
    %1858 = vmatpush1.msra.mxu0 0.0
    %1859 = vmatprep.subr.mxu0 0.0
    %1860 = vmatpush1.msra.mxu0 0.0
    %1861 = vmatprep.subr.mxu0 0.0
    %1862 = vmatpush1.msra.mxu0 0.0
    %1863 = vmatprep.subr.mxu0 0.0
    %1864 = vmatpush1.msra.mxu0 0.0
    %1865 = vmatprep.subr.mxu0 0.0
    %1866 = vmatpush1.msra.mxu0 0.0
    %1867 = vmatprep.subr.mxu0 0.0
    %1868 = vmatpush1.msra.mxu0 0.0
    %1869 = vmatprep.subr.mxu0 0.0
    %1870 = vmatpush1.msra.mxu0 0.0
    %1871 = vmatprep.subr.mxu0 0.0
    %1872 = vmatpush1.msra.mxu0 0.0
    %1873 = vmatprep.subr.mxu0 0.0
    %1874 = vmatpush1.msra.mxu0 0.0
    %1875 = vmatprep.subr.mxu0 0.0
    %1876 = vmatpush1.msra.mxu0 0.0
    %1877 = vmatprep.subr.mxu0 0.0
    %1878 = vmatpush1.msra.mxu0 0.0
    %1879 = vmatprep.subr.mxu0 0.0
    %1880 = vmatpush1.msra.mxu0 0.0
    %1881 = vmatprep.subr.mxu0 0.0
    %1882 = vmatpush1.msra.mxu0 0.0
    %1883 = vmatprep.subr.mxu0 0.0
    %1884 = vmatpush1.msra.mxu0 0.0
    %1885 = vmatprep.subr.mxu0 0.0
    %1886 = vmatpush1.msra.mxu0 0.0
    %1887 = vmatprep.subr.mxu0 0.0
    %1888 = vmatpush1.msra.mxu0 0.0
    %1889 = vmatprep.subr.mxu0 0.0
    %1890 = vmatpush1.msra.mxu0 0.0
    %1891 = vmatprep.subr.mxu0 0.0
    %1892 = vmatpush1.msra.mxu0 0.0
    %1893 = vmatprep.subr.mxu0 0.0
    %1894 = vmatpush1.msra.mxu0 0.0
    %1895 = vmatprep.subr.mxu0 0.0
    %1896 = vmatpush1.msra.mxu0 0.0
    %1897 = vmatprep.subr.mxu0 0.0
    %1898 = vmatpush1.msra.mxu0 0.0
    %1899 = vmatprep.subr.mxu0 0.0
    %1900 = vmatpush1.msra.mxu0 0.0
    %1901 = vmatprep.subr.mxu0 0.0
    %1902 = vmatpush1.msra.mxu0 0.0
    %1903 = vmatprep.subr.mxu0 0.0
    %1904 = vmatpush1.msra.mxu0 0.0
    %1905 = vmatprep.subr.mxu0 0.0
    %1906 = vmatpush1.msra.mxu0 0.0
    %1907 = vmatprep.mubr.f32.mxu0 0.0
    %1908 = vmatmul.mubr.f32.gmra.mrb[0].mxu0 %v1841
    %v1909 = vpop.f32.mrb[0].mxu0
    %v1910 = vadd.f32 0.0, %v1909
    %v1911 = vpop.f32.mrb[0].mxu0
    %1912 = vdwg.mxu0
    %v1913 = vadd.f32 %v1838, %v1910
    %v1914 = vld [vmem:[#allocation5] sm:$0xff]
    %v1915 = vld [vmem:[%s263] sm:$0xff]
    %v1917 = vsel %vm186, %v1915, 0
    %1919 = vmatprep.subr.mxu0 0.0
    %1920 = vmatpush1.msra.mxu0 %v180
    %1921 = vmatprep.subr.mxu0 0.0
    %1922 = vmatpush1.msra.mxu0 %v181
    %1923 = vmatprep.subr.mxu0 0.0
    %1924 = vmatpush1.msra.mxu0 %v182
    %1925 = vmatprep.subr.mxu0 0.0
    %1926 = vmatpush1.msra.mxu0 %v183
    %1927 = vmatprep.subr.mxu0 0.0
    %1928 = vmatpush1.msra.mxu0 0.0
    %1929 = vmatprep.subr.mxu0 0.0
    %1930 = vmatpush1.msra.mxu0 0.0
    %1931 = vmatprep.subr.mxu0 0.0
    %1932 = vmatpush1.msra.mxu0 0.0
    %1933 = vmatprep.subr.mxu0 0.0
    %1934 = vmatpush1.msra.mxu0 0.0
    %1935 = vmatprep.subr.mxu0 0.0
    %1936 = vmatpush1.msra.mxu0 0.0
    %1937 = vmatprep.subr.mxu0 0.0
    %1938 = vmatpush1.msra.mxu0 0.0
    %1939 = vmatprep.subr.mxu0 0.0
    %1940 = vmatpush1.msra.mxu0 0.0
    %1941 = vmatprep.subr.mxu0 0.0
    %1942 = vmatpush1.msra.mxu0 0.0
    %1943 = vmatprep.subr.mxu0 0.0
    %1944 = vmatpush1.msra.mxu0 0.0
    %1945 = vmatprep.subr.mxu0 0.0
    %1946 = vmatpush1.msra.mxu0 0.0
    %1947 = vmatprep.subr.mxu0 0.0
    %1948 = vmatpush1.msra.mxu0 0.0
    %1949 = vmatprep.subr.mxu0 0.0
    %1950 = vmatpush1.msra.mxu0 0.0
    %1951 = vmatprep.subr.mxu0 0.0
    %1952 = vmatpush1.msra.mxu0 0.0
    %1953 = vmatprep.subr.mxu0 0.0
    %1954 = vmatpush1.msra.mxu0 0.0
    %1955 = vmatprep.subr.mxu0 0.0
    %1956 = vmatpush1.msra.mxu0 0.0
    %1957 = vmatprep.subr.mxu0 0.0
    %1958 = vmatpush1.msra.mxu0 0.0
    %1959 = vmatprep.subr.mxu0 0.0
    %1960 = vmatpush1.msra.mxu0 0.0
    %1961 = vmatprep.subr.mxu0 0.0
    %1962 = vmatpush1.msra.mxu0 0.0
    %1963 = vmatprep.subr.mxu0 0.0
    %1964 = vmatpush1.msra.mxu0 0.0
    %1965 = vmatprep.subr.mxu0 0.0
    %1966 = vmatpush1.msra.mxu0 0.0
    %1967 = vmatprep.subr.mxu0 0.0
    %1968 = vmatpush1.msra.mxu0 0.0
    %1969 = vmatprep.subr.mxu0 0.0
    %1970 = vmatpush1.msra.mxu0 0.0
    %1971 = vmatprep.subr.mxu0 0.0
    %1972 = vmatpush1.msra.mxu0 0.0
    %1973 = vmatprep.subr.mxu0 0.0
    %1974 = vmatpush1.msra.mxu0 0.0
    %1975 = vmatprep.subr.mxu0 0.0
    %1976 = vmatpush1.msra.mxu0 0.0
    %1977 = vmatprep.subr.mxu0 0.0
    %1978 = vmatpush1.msra.mxu0 0.0
    %1979 = vmatprep.subr.mxu0 0.0
    %1980 = vmatpush1.msra.mxu0 0.0
    %1981 = vmatprep.subr.mxu0 0.0
    %1982 = vmatpush1.msra.mxu0 0.0
    %1983 = vmatprep.mubr.f32.mxu0 0.0
    %1984 = vmatmul.mubr.f32.gmra.mrb[0].mxu0 %v1917
    %v1985 = vpop.f32.mrb[0].mxu0
    %v1986 = vadd.f32 0.0, %v1985
    %v1987 = vpop.f32.mrb[0].mxu0
    %1988 = vdwg.mxu0
    %v1989 = vadd.f32 %v1914, %v1986
    %v1990 = vld [vmem:[#allocation3] sm:$0xff]
    %v1991 = vxor.u32 %v1913, 2147483648
    %v1992 = vmul.f32 %v1991, 1.442695
    %v1993 = vpow.pop %v1992
    %v1994 = vadd.f32 %v1993, 1.0
    %v1995 = vrcp.pop %v1994
    %v1996 = vmul.f32 1.0, %v1995
    %v1997 = vtanh.pop %v1913
    %1999 = vrot.lane.b32.xlu0 %v1990, 32
    %v2000 = vpop.permute.xlu0 %1999
    %v2002 = vmul.f32 %v1996, %v2000
    %2004 = vrot.lane.b32.xlu0 %v1997, 64
    %v2005 = vpop.permute.xlu0 %2004
    %v2007 = vmul.f32 %v1996, %v2005
    %2009 = vrot.lane.b32.xlu0 %v2007, 32
    %v2010 = vpop.permute.xlu0 %2009
    %v2012 = vadd.f32 %v2002, %v2010
    %v2013 = vtanh.pop %v2012
    %2015 = vrot.lane.b32.xlu0 %v2013, 64
    %v2016 = vpop.permute.xlu0 %2015
    %v2018 = vmul.f32 %v1996, %v2016
    %v2019 = vld [vmem:[%s368] sm:$0xff]
    %v2020 = vxor.u32 %v1989, 2147483648
    %v2021 = vmul.f32 %v2020, 1.442695
    %v2022 = vpow.pop %v2021
    %v2023 = vadd.f32 %v2022, 1.0
    %v2024 = vrcp.pop %v2023
    %v2025 = vmul.f32 1.0, %v2024
    %v2026 = vtanh.pop %v1989
    %2028 = vrot.lane.b32.xlu0 %v2019, 32
    %v2029 = vpop.permute.xlu0 %2028
    %v2031 = vmul.f32 %v2025, %v2029
    %2033 = vrot.lane.b32.xlu0 %v2026, 64
    %v2034 = vpop.permute.xlu0 %2033
    %v2036 = vmul.f32 %v2025, %v2034
    %2038 = vrot.lane.b32.xlu0 %v2036, 32
    %v2039 = vpop.permute.xlu0 %2038
    %v2041 = vadd.f32 %v2031, %v2039
    %v2042 = vtanh.pop %v2041
    %2044 = vrot.lane.b32.xlu0 %v2042, 64
    %v2045 = vpop.permute.xlu0 %2044
    %v2047 = vmul.f32 %v2025, %v2045
    %2049 = vrot.lane.b32.xlu0 %v2018, 32
    %v2050 = vpop.permute.xlu0 %2049
    %2052 = vst.msk [vmem:[#allocation2] sm:$0xff] %vm186, %v2050
    %2054 = vrot.lane.b32.xlu0 %v2012, 96
    %v2055 = vpop.permute.xlu0 %2054
    %2057 = vst.msk [vmem:[#allocation3] sm:$0xff] %vm186, %v2055
    %2059 = vrot.lane.b32.xlu0 %v2047, 32
    %v2060 = vpop.permute.xlu0 %2059
    %2062 = vst.msk [vmem:[%s263] sm:$0xff] %vm186, %v2060
    %2064 = vrot.lane.b32.xlu0 %v2041, 96
    %v2065 = vpop.permute.xlu0 %2064
    %2067 = vst.msk [vmem:[%s368] sm:$0xff] %vm186, %v2065
    %s2068 = scalar_lea.vmem %s4, 56
    %2069 = vst.msk [vmem:[%s2068] sm:$0xff] %vm186, %v2050
    %2070 = vst.msk [vmem:[%s164] sm:$0xff] %vm186, %v2060
    // Predicated region
    $region98: #{residual_bilstm_forward.10} parent=1 // pred_check
      %p2071 = pneg %p167
    $region99: #{residual_bilstm_forward.10} parent=1 // pred_check_branch
      %2073 = sbr.rel (%p2071) target = $region101
    $region100: #{residual_bilstm_forward.10} parent=1 // pred_region
      %v2074 = vld [vmem:[#allocation2] sm:$0xff]
      %v2075 = vld [vmem:[#allocation2 + $0x8] sm:$0xff]
      %2076 = vst.msk [vmem:[%s6] sm:$0xff] %vm186, %v2074
      %2077 = vst.msk [vmem:[%s6 + $0x8] sm:$0xff] %vm186, %v2075
      %v2078 = vld [vmem:[#allocation3] sm:$0xff]
      %v2079 = vld [vmem:[#allocation3 + $0x8] sm:$0xff]
      %2080 = vst.msk [vmem:[%s7] sm:$0xff] %vm186, %v2078
      %2081 = vst.msk [vmem:[%s7 + $0x8] sm:$0xff] %vm186, %v2079
    $region101: #{residual_bilstm_forward.10} parent=1 // pred_fallthru
      _
    %s2082 = ssub.s32 0, 0
    %s2083 = smul.u32 8, %s2082
    %p2084 = scmp.lt.s32.totalorder %s2083, 7
    %s2085 = scalar_select %p2084, %s2083, 7
    %s2086 = smul.addr %s2085, 8
    %s2087 = scalar_lea.vmem %s5, %s2086
    // Predicated region
    $region102: #{residual_bilstm_forward.10} parent=1 // pred_check
      _
    $region103: #{residual_bilstm_forward.10} parent=1 // pred_check_branch
      %2089 = sbr.rel (0) target = $region105
    $region104: #{residual_bilstm_forward.10} parent=1 // pred_region
      _
    $region105: #{residual_bilstm_forward.10} parent=1 // pred_fallthru
      _
    // Predicated region
    $region106: #{residual_bilstm_forward.10} parent=1 // pred_check
      _
    $region107: #{residual_bilstm_forward.10} parent=1 // pred_check_branch
      %2091 = sbr.rel (0) target = $region109
    $region108: #{residual_bilstm_forward.10} parent=1 // pred_region
      %s2092 = ssub.s32 0, 0
      %s2093 = smul.u32 8, %s2092
    $region109: #{residual_bilstm_forward.10} parent=1 // pred_fallthru
      _
    // Predicated region
    $region110: #{residual_bilstm_forward.10} parent=1 // pred_check
      _
    $region111: #{residual_bilstm_forward.10} parent=1 // pred_check_branch
      %2095 = sbr.rel (0) target = $region113
    $region112: #{residual_bilstm_forward.10} parent=1 // pred_region
      _
    $region113: #{residual_bilstm_forward.10} parent=1 // pred_fallthru
      _
    // Predicated region
    $region114: #{residual_bilstm_forward.10} parent=1 // pred_check
      _
    $region115: #{residual_bilstm_forward.10} parent=1 // pred_check_branch
      %2097 = sbr.rel (0) target = $region117
    $region116: #{residual_bilstm_forward.10} parent=1 // pred_region
      _
    $region117: #{residual_bilstm_forward.10} parent=1 // pred_fallthru
      _
    // Predicated region
    $region118: #{residual_bilstm_forward.10} parent=1 // pred_check
      _
    $region119: #{residual_bilstm_forward.10} parent=1 // pred_check_branch
      %2099 = sbr.rel (0) target = $region121
    $region120: #{residual_bilstm_forward.10} parent=1 // pred_region
      _
    $region121: #{residual_bilstm_forward.10} parent=1 // pred_fallthru
      _
    // Predicated region
    $region122: #{residual_bilstm_forward.10} parent=1 // pred_check
      _
    $region123: #{residual_bilstm_forward.10} parent=1 // pred_check_branch
      %2101 = sbr.rel (0) target = $region125
    $region124: #{residual_bilstm_forward.10} parent=1 // pred_region
      %s2102 = ssub.s32 0, 0
      %s2103 = smul.u32 8, %s2102
      %p2104 = scmp.lt.s32.totalorder %s2103, 7
      %s2105 = scalar_select %p2104, %s2103, 7
      %s2106 = smul.addr %s2105, 8
      %s2107 = scalar_lea.vmem %s5, %s2106
    $region125: #{residual_bilstm_forward.10} parent=1 // pred_fallthru
      _
    // Predicated region
    $region126: #{residual_bilstm_forward.10} parent=1 // pred_check
      _
    $region127: #{residual_bilstm_forward.10} parent=1 // pred_check_branch
      %2109 = sbr.rel (0) target = $region129
    $region128: #{residual_bilstm_forward.10} parent=1 // pred_region
      _
    $region129: #{residual_bilstm_forward.10} parent=1 // pred_fallthru
      _
    // Predicated region
    $region130: #{residual_bilstm_forward.10} parent=1 // pred_check
      _
    $region131: #{residual_bilstm_forward.10} parent=1 // pred_check_branch
      %2111 = sbr.rel (0) target = $region133
    $region132: #{residual_bilstm_forward.10} parent=1 // pred_region
      _
    $region133: #{residual_bilstm_forward.10} parent=1 // pred_fallthru
      _

</llo_original>
